<compile_context>
chip_gen: v6e
topology: v6e:2x2x1
jax: 0.10.0
libtpu: 0.0.40
codegen_flags: <defaults>
</compile_context>

<pallas_src>
import functools

import jax
import jax.numpy as jnp
from jax.experimental import pallas as pl
from jax.experimental.pallas import tpu as pltpu

N_EMBED = 384          # matches the module's n_embed
HIDDEN = 4 * N_EMBED   # 1536
DROPOUT_P = 0.2
# TODO(synk): training-mode stochastic dropout (pltpu.prng_seed/prng_random_bits)
#             not implemented; forward here matches module.eval() semantics.

_SUBLANE = 8  # f32 sublane granularity for row tiles


def _round_up(n, m):
    return (n + m - 1) // m * m


def ffwd_kernel(x_ref, w1_ref, b1_ref, w2_ref, b2_ref, o_ref):
    # Per-tile bf16 cast of the f32 input rides a free VPU slot under MXU time.
    x = x_ref[...].astype(jnp.bfloat16)
    # Linear 1: bf16 operands, f32 accumulation on the MXU.
    h = jnp.dot(x, w1_ref[...], preferred_element_type=jnp.float32)
    # bias + ReLU + downcast fused -> single bf16 hidden buffer feeds matmul 2.
    h = jnp.maximum(h + b1_ref[...], 0.0).astype(jnp.bfloat16)
    # Linear 2: bf16 operands, f32 accumulation.
    y = jnp.dot(h, w2_ref[...], preferred_element_type=jnp.float32)
    o_ref[...] = (y + b2_ref[...]).astype(o_ref.dtype)


@functools.partial(jax.jit, static_argnames=("tile_m",))
def feed_forward(x, w1, b1, w2, b2, *, tile_m=1024):
    """y = ReLU(x @ W1 + b1) @ W2 + b2  (eval-mode dropout == identity).

    x: (B, T, C) f32; w1: (C, 4C) bf16; b1: (1, 4C) f32; w2: (4C, C) bf16; b2: (1, C) f32.
    """
    B, T, C = x.shape
    H = w1.shape[1]
    M = B * T

    # Near-equal row tiles, capped at tile_m, rounded to the 8-row sublane.
    M_aligned = _round_up(M, _SUBLANE)
    n_tiles = max(pl.cdiv(M_aligned, tile_m), 1)
    if M_aligned >= 2 * _SUBLANE:
        n_tiles = max(n_tiles, 2)      # keep both v7x TensorCores busy
    if n_tiles > 1 and n_tiles % 2:
        n_tiles += 1                   # even tile count -> balanced across 2 TCs
    tm = _round_up(pl.cdiv(M_aligned, n_tiles), _SUBLANE)
    M_pad = tm * n_tiles               # at most a few rows above M

    x2d = x.reshape(M, C)              # stays f32; cast happens inside the kernel
    if M_pad != M:
        x2d = jnp.pad(x2d, ((0, M_pad - M), (0, 0)))

    # Ensure matmul-operand / bias dtypes (no-ops when already bf16 / f32).
    w1_bf = w1.astype(jnp.bfloat16)
    w2_bf = w2.astype(jnp.bfloat16)
    b1_f = b1.astype(jnp.float32)
    b2_f = b2.astype(jnp.float32)

    out2d = pl.pallas_call(
        ffwd_kernel,
        out_shape=jax.ShapeDtypeStruct((M_pad, C), x.dtype),
        grid_spec=pltpu.PrefetchScalarGridSpec(
            num_scalar_prefetch=0,
            grid=(n_tiles,),
            in_specs=[
                pl.BlockSpec((tm, C), lambda i: (i, 0)),   # x rows (pipelined, f32)
                pl.BlockSpec((C, H), lambda i: (0, 0)),    # W1 resident (constant index)
                pl.BlockSpec((1, H), lambda i: (0, 0)),    # b1 resident
                pl.BlockSpec((H, C), lambda i: (0, 0)),    # W2 resident
                pl.BlockSpec((1, C), lambda i: (0, 0)),    # b2 resident
            ],
            out_specs=pl.BlockSpec((tm, C), lambda i: (i, 0)),
        ),
        compiler_params=pltpu.CompilerParams(
            dimension_semantics=("parallel",),             # shard row tiles across TCs
            vmem_limit_bytes=32 * 1024 * 1024,
        ),
    )(x2d, w1_bf, b1_f, w2_bf, b2_f)

    return out2d[:M].reshape(B, T, C)


def init_params(key, n_embed=N_EMBED):
    """PyTorch-style Linear init U(-1/sqrt(fan_in), 1/sqrt(fan_in)).

    Weights are returned in bf16 (MXU operand dtype), biases in f32, so no per-call
    cast pass is needed inside the jitted forward.
    """
    k1, k2, k3, k4 = jax.random.split(key, 4)
    bound1 = 1.0 / jnp.sqrt(n_embed)
    bound2 = 1.0 / jnp.sqrt(4 * n_embed)
    w1 = jax.random.uniform(k1, (n_embed, 4 * n_embed), jnp.float32, -bound1, bound1)
    b1 = jax.random.uniform(k2, (1, 4 * n_embed), jnp.float32, -bound1, bound1)
    w2 = jax.random.uniform(k3, (4 * n_embed, n_embed), jnp.float32, -bound2, bound2)
    b2 = jax.random.uniform(k4, (1, n_embed), jnp.float32, -bound2, bound2)
    return w1.astype(jnp.bfloat16), b1, w2.astype(jnp.bfloat16), b2


if __name__ == "__main__":
    key = jax.random.PRNGKey(0)
    kx, kp = jax.random.split(key)

    B, T = 2, 8  # small batch / seq for the smoke test
    x = jax.random.normal(kx, (B, T, N_EMBED), dtype=jnp.float32)
    w1, b1, w2, b2 = init_params(kp)

    out = feed_forward(x, w1, b1, w2, b2)
    out = jax.block_until_ready(out)
    assert out.shape == (B, T, N_EMBED)

    # Reference mirroring the kernel numerics: bf16 operands, f32 accumulation.
    x2d = x.reshape(-1, N_EMBED)
    h_ref = jnp.maximum(
        jnp.dot(x2d.astype(jnp.bfloat16), w1,
                preferred_element_type=jnp.float32) + b1, 0.0)
    ref = jnp.dot(h_ref.astype(jnp.bfloat16), w2,
                  preferred_element_type=jnp.float32) + b2
    ref = ref.reshape(B, T, N_EMBED)
    assert jnp.allclose(out, ref, atol=1e-2, rtol=1e-2)

    # Sanity check against a full-f32 reference with a bf16-sized tolerance.
    ref32 = (jnp.maximum(x2d @ w1.astype(jnp.float32) + b1, 0.0)
             @ w2.astype(jnp.float32) + b2).reshape(B, T, N_EMBED)
    assert jnp.allclose(out, ref32, atol=5e-2, rtol=5e-2)

    print("KERNEL_OK")
</pallas_src>

<mosaic_0001>
module attributes {stable_mosaic.version = 11 : i64} {
  func.func @ffwd_kernel(%arg0: i32, %arg1: memref<8x384xf32, #tpu.memory_space<vmem>>, %arg2: memref<384x1536xbf16, #tpu.memory_space<vmem>>, %arg3: memref<1x1536xf32, #tpu.memory_space<vmem>>, %arg4: memref<1536x384xbf16, #tpu.memory_space<vmem>>, %arg5: memref<1x384xf32, #tpu.memory_space<vmem>>, %arg6: memref<8x384xf32, #tpu.memory_space<vmem>>) attributes {dimension_semantics = [#tpu.dimension_semantics<parallel>], iteration_bounds = array<i64: 2>, scalar_prefetch = 0 : i64, scratch_operands = 0 : i64, tpu.core_type = #tpu.core_type<tc>, window_params = [{transform_indices = @transform_0, window_bounds = array<i64: 8, 384>}, {pipeline_mode = #tpu.pipeline_mode<synchronous>, transform_indices = @transform_1, window_bounds = array<i64: 384, 1536>}, {pipeline_mode = #tpu.pipeline_mode<synchronous>, transform_indices = @transform_2, window_bounds = array<i64: 1, 1536>}, {pipeline_mode = #tpu.pipeline_mode<synchronous>, transform_indices = @transform_3, window_bounds = array<i64: 1536, 384>}, {pipeline_mode = #tpu.pipeline_mode<synchronous>, transform_indices = @transform_4, window_bounds = array<i64: 1, 384>}, {transform_indices = @transform_5, window_bounds = array<i64: 8, 384>}]} {
    %c0 = arith.constant 0 : index
    %c0_0 = arith.constant 0 : index
    %0 = vector.load %arg1[%c0, %c0_0] : memref<8x384xf32, #tpu.memory_space<vmem>>, vector<8x384xf32>
    %1 = arith.truncf %0 : vector<8x384xf32> to vector<8x384xbf16>
    %c0_1 = arith.constant 0 : index
    %c0_2 = arith.constant 0 : index
    %2 = vector.load %arg2[%c0_1, %c0_2] : memref<384x1536xbf16, #tpu.memory_space<vmem>>, vector<384x1536xbf16>
    %cst = arith.constant dense<0.000000e+00> : vector<8x1536xf32>
    %3 = tpu.matmul %1, %2, %cst {dimension_numbers = #tpu.dot_dimension_numbers<[1], [0], [0], [1], [0, 0, 1, 1], [], []>} : vector<8x384xbf16>, vector<384x1536xbf16>, vector<8x1536xf32> -> vector<8x1536xf32>
    %c0_3 = arith.constant 0 : index
    %c0_4 = arith.constant 0 : index
    %4 = vector.load %arg3[%c0_3, %c0_4] : memref<1x1536xf32, #tpu.memory_space<vmem>>, vector<1x1536xf32>
    %5 = vector.broadcast %4 : vector<1x1536xf32> to vector<8x1536xf32>
    %6 = arith.addf %3, %5 : vector<8x1536xf32>
    %cst_5 = arith.constant 0.000000e+00 : f32
    %7 = vector.broadcast %cst_5 : f32 to vector<8x1536xf32>
    %8 = arith.maximumf %6, %7 : vector<8x1536xf32>
    %9 = arith.truncf %8 : vector<8x1536xf32> to vector<8x1536xbf16>
    %c0_6 = arith.constant 0 : index
    %c0_7 = arith.constant 0 : index
    %10 = vector.load %arg4[%c0_6, %c0_7] : memref<1536x384xbf16, #tpu.memory_space<vmem>>, vector<1536x384xbf16>
    %cst_8 = arith.constant dense<0.000000e+00> : vector<8x384xf32>
    %11 = tpu.matmul %9, %10, %cst_8 {dimension_numbers = #tpu.dot_dimension_numbers<[1], [0], [0], [1], [0, 0, 1, 1], [], []>} : vector<8x1536xbf16>, vector<1536x384xbf16>, vector<8x384xf32> -> vector<8x384xf32>
    %c0_9 = arith.constant 0 : index
    %c0_10 = arith.constant 0 : index
    %12 = vector.load %arg5[%c0_9, %c0_10] : memref<1x384xf32, #tpu.memory_space<vmem>>, vector<1x384xf32>
    %13 = vector.broadcast %12 : vector<1x384xf32> to vector<8x384xf32>
    %14 = arith.addf %11, %13 : vector<8x384xf32>
    %c0_11 = arith.constant 0 : index
    %c0_12 = arith.constant 0 : index
    %15 = vector.load %arg6[%c0_11, %c0_12] : memref<8x384xf32, #tpu.memory_space<vmem>>, vector<8x384xf32>
    tpu.vector_store %arg6[%c0_11, %c0_12], %14 {strides = array<i32>} : memref<8x384xf32, #tpu.memory_space<vmem>>, vector<8x384xf32>,
    return
  }
  func.func @transform_0(%arg0: i32) -> (i32, i32) {
    %c0_i32 = arith.constant 0 : i32
    %c0_i32_0 = arith.constant 0 : i32
    return %arg0, %c0_i32 : i32, i32
  }
  func.func @transform_1(%arg0: i32) -> (i32, i32) {
    %c0_i32 = arith.constant 0 : i32
    %c0_i32_0 = arith.constant 0 : i32
    %c0_i32_1 = arith.constant 0 : i32
    return %c0_i32, %c0_i32_0 : i32, i32
  }
  func.func @transform_2(%arg0: i32) -> (i32, i32) {
    %c0_i32 = arith.constant 0 : i32
    %c0_i32_0 = arith.constant 0 : i32
    %c0_i32_1 = arith.constant 0 : i32
    return %c0_i32, %c0_i32_0 : i32, i32
  }
  func.func @transform_3(%arg0: i32) -> (i32, i32) {
    %c0_i32 = arith.constant 0 : i32
    %c0_i32_0 = arith.constant 0 : i32
    %c0_i32_1 = arith.constant 0 : i32
    return %c0_i32, %c0_i32_0 : i32, i32
  }
  func.func @transform_4(%arg0: i32) -> (i32, i32) {
    %c0_i32 = arith.constant 0 : i32
    %c0_i32_0 = arith.constant 0 : i32
    %c0_i32_1 = arith.constant 0 : i32
    return %c0_i32, %c0_i32_0 : i32, i32
  }
  func.func @transform_5(%arg0: i32) -> (i32, i32) {
    %c0_i32 = arith.constant 0 : i32
    %c0_i32_0 = arith.constant 0 : i32
    return %arg0, %c0_i32 : i32, i32
  }
}

</mosaic_0001>

<llo_original>
// kernel: feed_forward.1
$region0: #{feed_forward.1}
  #allocation0 [shape = 'u32[]', space=smem, size = 0x4, offset = 0x4, fixed_abs, tag = 'smem constant byte address 0x4 - core index']
  #allocation1 [shape = 'u32[144,128]{1,0:T(1,128)}', space=vmem, size = 0x12000, scoped, tag = 'internal scratch']
  %s0 = inlined_call_operand.hbm [shape: f32[16,384], index: 0, kind: input, shape index: {}]
  %s1 = inlined_call_operand.hbm [shape: bf16[384,1536], index: 1, kind: input, shape index: {}]
  %s2 = inlined_call_operand.hbm [shape: f32[1,1536], index: 2, kind: input, shape index: {}]
  %s3 = inlined_call_operand.hbm [shape: bf16[1536,384], index: 3, kind: input, shape index: {}]
  %s4 = inlined_call_operand.hbm [shape: f32[1,384], index: 4, kind: input, shape index: {}]
  %s5 = inlined_call_operand.hbm [shape: f32[16,384], index: 5, kind: output, shape index: {}]
  %s6 = sld [smem:[#allocation0]]
  $region73: #{feed_forward.1} parent=0
    _
  %s8 = ssub.s32 1, %s6
  %s9 = scalar_select 0, %s8, %s6
  $region1: #{feed_forward.1} parent=0
    #allocation2 [shape = 'u8[24576]{0}', space=vmem, size = 0x6000, scoped, tag = 'input window, operand 0']
    #allocation3 [shape = 's32[2]{0}', space=sflag, size = 0x8, scoped, tag = 'scoped memory for feed_forward.1']
    #allocation4 [shape = 's32[2]{0}', space=sflag, size = 0x8, scoped, tag = 'scoped memory for feed_forward.1']
    #allocation5 [shape = 'u8[1179648]{0}', space=vmem, size = 0x120000, scoped, tag = 'input window, operand 1, single buffered']
    #allocation6 [shape = 's32[1]{0}', space=sflag, size = 0x4, scoped, tag = 'scoped memory for feed_forward.1']
    #allocation7 [shape = 'u8[6144]{0}', space=vmem, size = 0x1800, scoped, tag = 'input window, operand 2, single buffered']
    #allocation8 [shape = 'u8[1179648]{0}', space=vmem, size = 0x120000, scoped, tag = 'input window, operand 3, single buffered']
    #allocation9 [shape = 's32[1]{0}', space=sflag, size = 0x4, scoped, tag = 'scoped memory for feed_forward.1']
    #allocation10 [shape = 'u8[1536]{0}', space=vmem, size = 0x800, scoped, tag = 'input window, operand 4, single buffered']
    #allocation11 [shape = 'u8[24576]{0}', space=vmem, size = 0x6000, scoped, tag = 'output window, operand 0']
    %10 = vsyncpa [#allocation3], 0
    %s11 = scalar_lea.sflag [#allocation3], 1
    %12 = vsyncpa %s11, 0
    %13 = vsyncpa [#allocation6], 0
    %14 = vsyncpa [#allocation9], 0
    %15 = vsyncpa [#allocation4], 0
    %s16 = scalar_lea.sflag [#allocation4], 1
    %17 = vsyncpa %s16, 0
    loop: start=0, step=1, limit=4
    $region2: #{feed_forward.1} parent=1 // loop_pre_header
      _
    $region3: #{feed_forward.1} parent=1 // loop_header
      %s19 = sphi 0, %s23
      %p20 = scmp.ge.s32.totalorder %s19, 4
      %s29 = sphi 0, %s31
      %s32 = sphi 0, %s29
      %s33 = sphi 0, %s32
      %s49 = sphi 0, %s33
      %s53 = sphi 0, %s53
      %s55 = sphi 0, %s53
      %s56 = sphi 0, %s55
      %s70 = sphi 0, %s56
      %s74 = sphi 0, %s74
      %s76 = sphi 0, %s74
      %s77 = sphi 0, %s76
      %s91 = sphi 0, %s77
      %s95 = sphi 0, %s95
      %s97 = sphi 0, %s95
      %s98 = sphi 0, %s97
      %s112 = sphi 0, %s98
      %s116 = sphi 0, %s116
      %s118 = sphi 0, %s116
      %s119 = sphi 0, %s118
      %s133 = sphi 0, %s119
      %s139 = sphi 0, %s141
      %s142 = sphi 0, %s139
      %s143 = sphi 0, %s142
      %s159 = sphi 0, %s143
    $region4: #{feed_forward.1} parent=1 // loop_header_branch
      %22 = sbr.rel (%p20) target = $region8
    $region5: #{feed_forward.1} parent=1 // loop_body
      %s24 = ssub.s32 %s19, 1
      %s25 = ssub.s32 %s19, 2
      %s26 = sadd.s32 %s19, 1
      %s27 = ssub.s32 %s19, %s26
      %p28 = scmp.eq.s32.totalorder %s27, 0
      %s30 = sadd.s32 %s29, 1
      %s31 = scalar_select %p28, %s29, %s30
      %p34 = pneg %p28
      %p35 = scmp.eq.s32.totalorder %s19, 1
      %p36 = por %p34, %p35
      %p37 = scmp.ne.s32.totalorder %s29, %s32
      %p38 = scmp.eq.s32.totalorder %s19, 0
      %p39 = por %p37, %p38
      %p40 = scmp.ne.s32.totalorder %s29, %s32
      %p41 = scmp.eq.s32.totalorder %s24, 1
      %p42 = por %p40, %p41
      %p43 = scmp.ne.s32.totalorder %s32, %s33
      %p44 = scmp.eq.s32.totalorder %s24, 0
      %p45 = por %p43, %p44
      %p46 = scmp.ne.s32.totalorder %s32, %s33
      %p47 = scmp.eq.s32.totalorder %s25, 1
      %p48 = por %p46, %p47
      %p50 = scmp.ne.s32.totalorder %s33, %s49
      %p51 = scmp.eq.s32.totalorder %s25, 0
      %p52 = por %p50, %p51
      %s54 = sadd.s32 %s53, 1
      %p57 = scmp.eq.s32.totalorder %s19, 1
      %p58 = scmp.ne.s32.totalorder %s53, %s55
      %p59 = scmp.eq.s32.totalorder %s19, 0
      %p60 = por %p58, %p59
      %p61 = scmp.ne.s32.totalorder %s53, %s55
      %p62 = scmp.eq.s32.totalorder %s24, 1
      %p63 = por %p61, %p62
      %p64 = scmp.ne.s32.totalorder %s55, %s56
      %p65 = scmp.eq.s32.totalorder %s24, 0
      %p66 = por %p64, %p65
      %p67 = scmp.ne.s32.totalorder %s55, %s56
      %p68 = scmp.eq.s32.totalorder %s25, 1
      %p69 = por %p67, %p68
      %p71 = scmp.ne.s32.totalorder %s56, %s70
      %p72 = scmp.eq.s32.totalorder %s25, 0
      %p73 = por %p71, %p72
      %s75 = sadd.s32 %s74, 1
      %p78 = scmp.eq.s32.totalorder %s19, 1
      %p79 = scmp.ne.s32.totalorder %s74, %s76
      %p80 = scmp.eq.s32.totalorder %s19, 0
      %p81 = por %p79, %p80
      %p82 = scmp.ne.s32.totalorder %s74, %s76
      %p83 = scmp.eq.s32.totalorder %s24, 1
      %p84 = por %p82, %p83
      %p85 = scmp.ne.s32.totalorder %s76, %s77
      %p86 = scmp.eq.s32.totalorder %s24, 0
      %p87 = por %p85, %p86
      %p88 = scmp.ne.s32.totalorder %s76, %s77
      %p89 = scmp.eq.s32.totalorder %s25, 1
      %p90 = por %p88, %p89
      %p92 = scmp.ne.s32.totalorder %s77, %s91
      %p93 = scmp.eq.s32.totalorder %s25, 0
      %p94 = por %p92, %p93
      %s96 = sadd.s32 %s95, 1
      %p99 = scmp.eq.s32.totalorder %s19, 1
      %p100 = scmp.ne.s32.totalorder %s95, %s97
      %p101 = scmp.eq.s32.totalorder %s19, 0
      %p102 = por %p100, %p101
      %p103 = scmp.ne.s32.totalorder %s95, %s97
      %p104 = scmp.eq.s32.totalorder %s24, 1
      %p105 = por %p103, %p104
      %p106 = scmp.ne.s32.totalorder %s97, %s98
      %p107 = scmp.eq.s32.totalorder %s24, 0
      %p108 = por %p106, %p107
      %p109 = scmp.ne.s32.totalorder %s97, %s98
      %p110 = scmp.eq.s32.totalorder %s25, 1
      %p111 = por %p109, %p110
      %p113 = scmp.ne.s32.totalorder %s98, %s112
      %p114 = scmp.eq.s32.totalorder %s25, 0
      %p115 = por %p113, %p114
      %s117 = sadd.s32 %s116, 1
      %p120 = scmp.eq.s32.totalorder %s19, 1
      %p121 = scmp.ne.s32.totalorder %s116, %s118
      %p122 = scmp.eq.s32.totalorder %s19, 0
      %p123 = por %p121, %p122
      %p124 = scmp.ne.s32.totalorder %s116, %s118
      %p125 = scmp.eq.s32.totalorder %s24, 1
      %p126 = por %p124, %p125
      %p127 = scmp.ne.s32.totalorder %s118, %s119
      %p128 = scmp.eq.s32.totalorder %s24, 0
      %p129 = por %p127, %p128
      %p130 = scmp.ne.s32.totalorder %s118, %s119
      %p131 = scmp.eq.s32.totalorder %s25, 1
      %p132 = por %p130, %p131
      %p134 = scmp.ne.s32.totalorder %s119, %s133
      %p135 = scmp.eq.s32.totalorder %s25, 0
      %p136 = por %p134, %p135
      %s137 = ssub.s32 %s19, %s26
      %p138 = scmp.eq.s32.totalorder %s137, 0
      %s140 = sadd.s32 %s139, 1
      %s141 = scalar_select %p138, %s139, %s140
      %p144 = pneg %p138
      %p145 = scmp.eq.s32.totalorder %s19, 1
      %p146 = por %p144, %p145
      %p147 = scmp.ne.s32.totalorder %s139, %s142
      %p148 = scmp.eq.s32.totalorder %s19, 0
      %p149 = por %p147, %p148
      %p150 = scmp.ne.s32.totalorder %s139, %s142
      %p151 = scmp.eq.s32.totalorder %s24, 1
      %p152 = por %p150, %p151
      %p153 = scmp.ne.s32.totalorder %s142, %s143
      %p154 = scmp.eq.s32.totalorder %s24, 0
      %p155 = por %p153, %p154
      %p156 = scmp.ne.s32.totalorder %s142, %s143
      %p157 = scmp.eq.s32.totalorder %s25, 1
      %p158 = por %p156, %p157
      %p160 = scmp.ne.s32.totalorder %s143, %s159
      %p161 = scmp.eq.s32.totalorder %s25, 0
      %p162 = por %p160, %p161
      %p163 = scmp.le.s32.totalorder 1, %s19
      %p164 = scmp.lt.s32.totalorder %s19, 3
      %p165 = pnand %p163, %p164
      %p166 = pneg %p165
      // Predicated region
      $region9: #{feed_forward.1} parent=5 // pred_check
        _
      $region10: #{feed_forward.1} parent=5 // pred_check_branch
        %168 = sbr.rel (%p165) target = $region12
      $region11: #{feed_forward.1} parent=5 // pred_region
        %s169 = ssub.s32 %s19, 1
        // Predicated region
        $region13: #{feed_forward.1} parent=11 // pred_check
          %p170 = pneg %p66
        $region14: #{feed_forward.1} parent=11 // pred_check_branch
          %172 = sbr.rel (%p170) target = $region16
        $region15: #{feed_forward.1} parent=11 // pred_region
          %s174 = ssub.s32 36864, 36864
          %175 = vsyncadd [#allocation6], %s174
          %s176 = sshll.u32 [#allocation5], 4
          %s177 = int_to_ptr.vmem [resolvable:$true] %s176
          %182 = dma.hbm_to_vmem [thread:$0]  %s1, 36864, %s177, [#allocation6], 768, 768, 48
        $region16: #{feed_forward.1} parent=11 // pred_fallthru
          _
        // Predicated region
        $region17: #{feed_forward.1} parent=11 // pred_check
          %p183 = pneg %p87
        $region18: #{feed_forward.1} parent=11 // pred_check_branch
          %185 = sbr.rel (%p183) target = $region20
        $region19: #{feed_forward.1} parent=11 // pred_region
          %s187 = ssub.s32 192, 192
          %188 = vsyncadd [#allocation6], %s187
          %s190 = sshll.u32 [#allocation7], 4
          %s191 = int_to_ptr.vmem [resolvable:$true] %s190
          %193 = dma.hbm_to_vmem [thread:$0]  %s2, 192, %s191, [#allocation6]
        $region20: #{feed_forward.1} parent=11 // pred_fallthru
          _
        // Predicated region
        $region21: #{feed_forward.1} parent=11 // pred_check
          %p194 = pneg %p108
        $region22: #{feed_forward.1} parent=11 // pred_check_branch
          %196 = sbr.rel (%p194) target = $region24
        $region23: #{feed_forward.1} parent=11 // pred_region
          %s198 = ssub.s32 36864, 36864
          %199 = vsyncadd [#allocation9], %s198
          %s200 = sshll.u32 [#allocation8], 4
          %s201 = int_to_ptr.vmem [resolvable:$true] %s200
          %206 = dma.hbm_to_vmem [thread:$0]  %s3, 36864, %s201, [#allocation9], 192, 192, 12
        $region24: #{feed_forward.1} parent=11 // pred_fallthru
          _
        // Predicated region
        $region25: #{feed_forward.1} parent=11 // pred_check
          %p207 = pneg %p129
        $region26: #{feed_forward.1} parent=11 // pred_check_branch
          %209 = sbr.rel (%p207) target = $region28
        $region27: #{feed_forward.1} parent=11 // pred_region
          %s211 = ssub.s32 48, 48
          %212 = vsyncadd [#allocation9], %s211
          %s214 = sshll.u32 [#allocation10], 4
          %s215 = int_to_ptr.vmem [resolvable:$true] %s214
          %217 = dma.hbm_to_vmem [thread:$0]  %s4, 48, %s215, [#allocation9]
        $region28: #{feed_forward.1} parent=11 // pred_fallthru
          _
      $region12: #{feed_forward.1} parent=5 // pred_fallthru
        _
      %p218 = scmp.lt.s32.totalorder %s19, 2
      // Predicated region
      $region29: #{feed_forward.1} parent=5 // pred_check
        %p219 = pneg %p218
      $region30: #{feed_forward.1} parent=5 // pred_check_branch
        %221 = sbr.rel (%p219) target = $region32
      $region31: #{feed_forward.1} parent=5 // pred_region
        // Predicated region
        $region33: #{feed_forward.1} parent=31 // pred_check
          %p222 = pneg %p39
        $region34: #{feed_forward.1} parent=31 // pred_check_branch
          %224 = sbr.rel (%p222) target = $region36
        $region35: #{feed_forward.1} parent=31 // pred_region
          %s225 = sand.u32 %s29, 1
          %s226 = scalar_lea.sflag [#allocation3], %s225
          %s227 = sand.u32 %s29, 1
          %s228 = smul.addr %s227, 24
          %s229 = scalar_lea.vmem [#allocation2], %s228
          %s231 = ssub.s32 384, 384
          %232 = vsyncadd %s226, %s231
          %s233 = smul.addr %s19, 3
          %s234 = smul.addr %s233, 128
          %s235 = scalar_lea.hbm %s0, %s234
          %s237 = sshll.u32 %s229, 4
          %s238 = int_to_ptr.vmem [resolvable:$true] %s237
          %240 = dma.hbm_to_vmem [thread:$0]  %s235, 384, %s238, %s226
        $region36: #{feed_forward.1} parent=31 // pred_fallthru
          _
      $region32: #{feed_forward.1} parent=5 // pred_fallthru
        _
      %p241 = scmp.le.s32.totalorder 1, %s19
      %p242 = scmp.lt.s32.totalorder %s19, 3
      %p243 = pnand %p241, %p242
      %p244 = pneg %p243
      // Predicated region
      $region37: #{feed_forward.1} parent=5 // pred_check
        _
      $region38: #{feed_forward.1} parent=5 // pred_check_branch
        %246 = sbr.rel (%p243) target = $region40
      $region39: #{feed_forward.1} parent=5 // pred_region
        %s247 = ssub.s32 %s19, 1
        %s248 = sand.u32 %s32, 1
        %s249 = scalar_lea.sflag [#allocation3], %s248
        %s250 = sand.u32 %s32, 1
        %s251 = smul.addr %s250, 24
        %s252 = scalar_lea.vmem [#allocation2], %s251
        // Predicated region
        $region41: #{feed_forward.1} parent=39 // pred_check
          %p253 = pneg %p45
        $region42: #{feed_forward.1} parent=39 // pred_check_branch
          %255 = sbr.rel (%p253) target = $region44
        $region43: #{feed_forward.1} parent=39 // pred_region
          %256 = dma.done %s249, 384
        $region44: #{feed_forward.1} parent=39 // pred_fallthru
          _
        // Predicated region
        $region45: #{feed_forward.1} parent=39 // pred_check
          %p257 = pneg %p66
        $region46: #{feed_forward.1} parent=39 // pred_check_branch
          %259 = sbr.rel (%p257) target = $region48
        $region47: #{feed_forward.1} parent=39 // pred_region
          %260 = dma.done [#allocation6], 36864
        $region48: #{feed_forward.1} parent=39 // pred_fallthru
          _
        // Predicated region
        $region49: #{feed_forward.1} parent=39 // pred_check
          %p261 = pneg %p87
        $region50: #{feed_forward.1} parent=39 // pred_check_branch
          %263 = sbr.rel (%p261) target = $region52
        $region51: #{feed_forward.1} parent=39 // pred_region
          %264 = dma.done [#allocation6], 192
        $region52: #{feed_forward.1} parent=39 // pred_fallthru
          _
        // Predicated region
        $region53: #{feed_forward.1} parent=39 // pred_check
          %p265 = pneg %p108
        $region54: #{feed_forward.1} parent=39 // pred_check_branch
          %267 = sbr.rel (%p265) target = $region56
        $region55: #{feed_forward.1} parent=39 // pred_region
          %268 = dma.done [#allocation9], 36864
        $region56: #{feed_forward.1} parent=39 // pred_fallthru
          _
        // Predicated region
        $region57: #{feed_forward.1} parent=39 // pred_check
          %p269 = pneg %p129
        $region58: #{feed_forward.1} parent=39 // pred_check_branch
          %271 = sbr.rel (%p269) target = $region60
        $region59: #{feed_forward.1} parent=39 // pred_region
          %272 = dma.done [#allocation9], 48
        $region60: #{feed_forward.1} parent=39 // pred_fallthru
          _
        %s273 = sand.u32 %s32, 1
        %s274 = scalar_lea.sflag [#allocation3], %s273
        %s275 = sand.u32 %s32, 1
        %s276 = smul.addr %s275, 24
        %s277 = scalar_lea.vmem [#allocation2], %s276
        %p278 = pneg %p45
        %p279 = pneg %p42
        %p280 = pneg %p66
        %p281 = pneg %p63
        %p282 = pneg %p87
        %p283 = pneg %p84
        %p284 = pneg %p108
        %p285 = pneg %p105
        %p286 = pneg %p129
        %p287 = pneg %p126
        %p288 = pneg %p155
        %p289 = pneg %p152
        %s290 = sand.u32 %s142, 1
        %s291 = scalar_lea.sflag [#allocation4], %s290
        %s292 = sand.u32 %s142, 1
        %s293 = smul.addr %s292, 24
        %s294 = scalar_lea.vmem [#allocation11], %s293
        %v296 = vld [vmem:[%s252] sm:$0xff]
        %v297 = vld [vmem:[%s252 + $0x8] sm:$0xff]
        %v298 = vld [vmem:[%s252 + $0x10] sm:$0xff]
        %v299 = vpack.c.bf16 %v296, %v296
        %v300 = vpack.c.bf16 %v297, %v297
        %v301 = vpack.c.bf16 %v298, %v298
        %v302 = vld [vmem:[#allocation5] sm:$0xff]
        %v303 = vld [vmem:[#allocation5 + $0x8] sm:$0xff]
        %v304 = vld [vmem:[#allocation5 + $0x10] sm:$0xff]
        %v305 = vld [vmem:[#allocation5 + $0x18] sm:$0xff]
        %v306 = vld [vmem:[#allocation5 + $0x20] sm:$0xff]
        %v307 = vld [vmem:[#allocation5 + $0x28] sm:$0xff]
        %v308 = vld [vmem:[#allocation5 + $0x30] sm:$0xff]
        %v309 = vld [vmem:[#allocation5 + $0x38] sm:$0xff]
        %v310 = vld [vmem:[#allocation5 + $0x40] sm:$0xff]
        %v311 = vld [vmem:[#allocation5 + $0x48] sm:$0xff]
        %v312 = vld [vmem:[#allocation5 + $0x50] sm:$0xff]
        %v313 = vld [vmem:[#allocation5 + $0x58] sm:$0xff]
        %v314 = vld [vmem:[#allocation5 + $0x60] sm:$0xff]
        %v315 = vld [vmem:[#allocation5 + $0x68] sm:$0xff]
        %v316 = vld [vmem:[#allocation5 + $0x70] sm:$0xff]
        %v317 = vld [vmem:[#allocation5 + $0x78] sm:$0xff]
        %v318 = vld [vmem:[#allocation5 + $0x80] sm:$0xff]
        %v319 = vld [vmem:[#allocation5 + $0x88] sm:$0xff]
        %v320 = vld [vmem:[#allocation5 + $0x90] sm:$0xff]
        %v321 = vld [vmem:[#allocation5 + $0x98] sm:$0xff]
        %v322 = vld [vmem:[#allocation5 + $0xa0] sm:$0xff]
        %v323 = vld [vmem:[#allocation5 + $0xa8] sm:$0xff]
        %v324 = vld [vmem:[#allocation5 + $0xb0] sm:$0xff]
        %v325 = vld [vmem:[#allocation5 + $0xb8] sm:$0xff]
        %v326 = vld [vmem:[#allocation5 + $0xc0] sm:$0xff]
        %v327 = vld [vmem:[#allocation5 + $0xc8] sm:$0xff]
        %v328 = vld [vmem:[#allocation5 + $0xd0] sm:$0xff]
        %v329 = vld [vmem:[#allocation5 + $0xd8] sm:$0xff]
        %v330 = vld [vmem:[#allocation5 + $0xe0] sm:$0xff]
        %v331 = vld [vmem:[#allocation5 + $0xe8] sm:$0xff]
        %v332 = vld [vmem:[#allocation5 + $0xf0] sm:$0xff]
        %v333 = vld [vmem:[#allocation5 + $0xf8] sm:$0xff]
        %v334 = vld [vmem:[#allocation5 + $0x100] sm:$0xff]
        %v335 = vld [vmem:[#allocation5 + $0x108] sm:$0xff]
        %v336 = vld [vmem:[#allocation5 + $0x110] sm:$0xff]
        %v337 = vld [vmem:[#allocation5 + $0x118] sm:$0xff]
        %v338 = vld [vmem:[#allocation5 + $0x120] sm:$0xff]
        %v339 = vld [vmem:[#allocation5 + $0x128] sm:$0xff]
        %v340 = vld [vmem:[#allocation5 + $0x130] sm:$0xff]
        %v341 = vld [vmem:[#allocation5 + $0x138] sm:$0xff]
        %v342 = vld [vmem:[#allocation5 + $0x140] sm:$0xff]
        %v343 = vld [vmem:[#allocation5 + $0x148] sm:$0xff]
        %v344 = vld [vmem:[#allocation5 + $0x150] sm:$0xff]
        %v345 = vld [vmem:[#allocation5 + $0x158] sm:$0xff]
        %v346 = vld [vmem:[#allocation5 + $0x160] sm:$0xff]
        %v347 = vld [vmem:[#allocation5 + $0x168] sm:$0xff]
        %v348 = vld [vmem:[#allocation5 + $0x170] sm:$0xff]
        %v349 = vld [vmem:[#allocation5 + $0x178] sm:$0xff]
        %v350 = vld [vmem:[#allocation5 + $0x180] sm:$0xff]
        %v351 = vld [vmem:[#allocation5 + $0x188] sm:$0xff]
        %v352 = vld [vmem:[#allocation5 + $0x190] sm:$0xff]
        %v353 = vld [vmem:[#allocation5 + $0x198] sm:$0xff]
        %v354 = vld [vmem:[#allocation5 + $0x1a0] sm:$0xff]
        %v355 = vld [vmem:[#allocation5 + $0x1a8] sm:$0xff]
        %v356 = vld [vmem:[#allocation5 + $0x1b0] sm:$0xff]
        %v357 = vld [vmem:[#allocation5 + $0x1b8] sm:$0xff]
        %v358 = vld [vmem:[#allocation5 + $0x1c0] sm:$0xff]
        %v359 = vld [vmem:[#allocation5 + $0x1c8] sm:$0xff]
        %v360 = vld [vmem:[#allocation5 + $0x1d0] sm:$0xff]
        %v361 = vld [vmem:[#allocation5 + $0x1d8] sm:$0xff]
        %v362 = vld [vmem:[#allocation5 + $0x1e0] sm:$0xff]
        %v363 = vld [vmem:[#allocation5 + $0x1e8] sm:$0xff]
        %v364 = vld [vmem:[#allocation5 + $0x1f0] sm:$0xff]
        %v365 = vld [vmem:[#allocation5 + $0x1f8] sm:$0xff]
        %v366 = vld [vmem:[#allocation5 + $0x200] sm:$0xff]
        %v367 = vld [vmem:[#allocation5 + $0x208] sm:$0xff]
        %v368 = vld [vmem:[#allocation5 + $0x210] sm:$0xff]
        %v369 = vld [vmem:[#allocation5 + $0x218] sm:$0xff]
        %v370 = vld [vmem:[#allocation5 + $0x220] sm:$0xff]
        %v371 = vld [vmem:[#allocation5 + $0x228] sm:$0xff]
        %v372 = vld [vmem:[#allocation5 + $0x230] sm:$0xff]
        %v373 = vld [vmem:[#allocation5 + $0x238] sm:$0xff]
        %v374 = vld [vmem:[#allocation5 + $0x240] sm:$0xff]
        %v375 = vld [vmem:[#allocation5 + $0x248] sm:$0xff]
        %v376 = vld [vmem:[#allocation5 + $0x250] sm:$0xff]
        %v377 = vld [vmem:[#allocation5 + $0x258] sm:$0xff]
        %v378 = vld [vmem:[#allocation5 + $0x260] sm:$0xff]
        %v379 = vld [vmem:[#allocation5 + $0x268] sm:$0xff]
        %v380 = vld [vmem:[#allocation5 + $0x270] sm:$0xff]
        %v381 = vld [vmem:[#allocation5 + $0x278] sm:$0xff]
        %v382 = vld [vmem:[#allocation5 + $0x280] sm:$0xff]
        %v383 = vld [vmem:[#allocation5 + $0x288] sm:$0xff]
        %v384 = vld [vmem:[#allocation5 + $0x290] sm:$0xff]
        %v385 = vld [vmem:[#allocation5 + $0x298] sm:$0xff]
        %v386 = vld [vmem:[#allocation5 + $0x2a0] sm:$0xff]
        %v387 = vld [vmem:[#allocation5 + $0x2a8] sm:$0xff]
        %v388 = vld [vmem:[#allocation5 + $0x2b0] sm:$0xff]
        %v389 = vld [vmem:[#allocation5 + $0x2b8] sm:$0xff]
        %v390 = vld [vmem:[#allocation5 + $0x2c0] sm:$0xff]
        %v391 = vld [vmem:[#allocation5 + $0x2c8] sm:$0xff]
        %v392 = vld [vmem:[#allocation5 + $0x2d0] sm:$0xff]
        %v393 = vld [vmem:[#allocation5 + $0x2d8] sm:$0xff]
        %v394 = vld [vmem:[#allocation5 + $0x2e0] sm:$0xff]
        %v395 = vld [vmem:[#allocation5 + $0x2e8] sm:$0xff]
        %v396 = vld [vmem:[#allocation5 + $0x2f0] sm:$0xff]
        %v397 = vld [vmem:[#allocation5 + $0x2f8] sm:$0xff]
        %v398 = vld [vmem:[#allocation5 + $0x300] sm:$0xff]
        %v399 = vld [vmem:[#allocation5 + $0x308] sm:$0xff]
        %v400 = vld [vmem:[#allocation5 + $0x310] sm:$0xff]
        %v401 = vld [vmem:[#allocation5 + $0x318] sm:$0xff]
        %v402 = vld [vmem:[#allocation5 + $0x320] sm:$0xff]
        %v403 = vld [vmem:[#allocation5 + $0x328] sm:$0xff]
        %v404 = vld [vmem:[#allocation5 + $0x330] sm:$0xff]
        %v405 = vld [vmem:[#allocation5 + $0x338] sm:$0xff]
        %v406 = vld [vmem:[#allocation5 + $0x340] sm:$0xff]
        %v407 = vld [vmem:[#allocation5 + $0x348] sm:$0xff]
        %v408 = vld [vmem:[#allocation5 + $0x350] sm:$0xff]
        %v409 = vld [vmem:[#allocation5 + $0x358] sm:$0xff]
        %v410 = vld [vmem:[#allocation5 + $0x360] sm:$0xff]
        %v411 = vld [vmem:[#allocation5 + $0x368] sm:$0xff]
        %v412 = vld [vmem:[#allocation5 + $0x370] sm:$0xff]
        %v413 = vld [vmem:[#allocation5 + $0x378] sm:$0xff]
        %v414 = vld [vmem:[#allocation5 + $0x380] sm:$0xff]
        %v415 = vld [vmem:[#allocation5 + $0x388] sm:$0xff]
        %v416 = vld [vmem:[#allocation5 + $0x390] sm:$0xff]
        %v417 = vld [vmem:[#allocation5 + $0x398] sm:$0xff]
        %v418 = vld [vmem:[#allocation5 + $0x3a0] sm:$0xff]
        %v419 = vld [vmem:[#allocation5 + $0x3a8] sm:$0xff]
        %v420 = vld [vmem:[#allocation5 + $0x3b0] sm:$0xff]
        %v421 = vld [vmem:[#allocation5 + $0x3b8] sm:$0xff]
        %v422 = vld [vmem:[#allocation5 + $0x3c0] sm:$0xff]
        %v423 = vld [vmem:[#allocation5 + $0x3c8] sm:$0xff]
        %v424 = vld [vmem:[#allocation5 + $0x3d0] sm:$0xff]
        %v425 = vld [vmem:[#allocation5 + $0x3d8] sm:$0xff]
        %v426 = vld [vmem:[#allocation5 + $0x3e0] sm:$0xff]
        %v427 = vld [vmem:[#allocation5 + $0x3e8] sm:$0xff]
        %v428 = vld [vmem:[#allocation5 + $0x3f0] sm:$0xff]
        %v429 = vld [vmem:[#allocation5 + $0x3f8] sm:$0xff]
        %v430 = vld [vmem:[#allocation5 + $0x400] sm:$0xff]
        %v431 = vld [vmem:[#allocation5 + $0x408] sm:$0xff]
        %v432 = vld [vmem:[#allocation5 + $0x410] sm:$0xff]
        %v433 = vld [vmem:[#allocation5 + $0x418] sm:$0xff]
        %v434 = vld [vmem:[#allocation5 + $0x420] sm:$0xff]
        %v435 = vld [vmem:[#allocation5 + $0x428] sm:$0xff]
        %v436 = vld [vmem:[#allocation5 + $0x430] sm:$0xff]
        %v437 = vld [vmem:[#allocation5 + $0x438] sm:$0xff]
        %v438 = vld [vmem:[#allocation5 + $0x440] sm:$0xff]
        %v439 = vld [vmem:[#allocation5 + $0x448] sm:$0xff]
        %v440 = vld [vmem:[#allocation5 + $0x450] sm:$0xff]
        %v441 = vld [vmem:[#allocation5 + $0x458] sm:$0xff]
        %v442 = vld [vmem:[#allocation5 + $0x460] sm:$0xff]
        %v443 = vld [vmem:[#allocation5 + $0x468] sm:$0xff]
        %v444 = vld [vmem:[#allocation5 + $0x470] sm:$0xff]
        %v445 = vld [vmem:[#allocation5 + $0x478] sm:$0xff]
        %v446 = vld [vmem:[#allocation5 + $0x480] sm:$0xff]
        %v447 = vld [vmem:[#allocation5 + $0x488] sm:$0xff]
        %v448 = vld [vmem:[#allocation5 + $0x490] sm:$0xff]
        %v449 = vld [vmem:[#allocation5 + $0x498] sm:$0xff]
        %v450 = vld [vmem:[#allocation5 + $0x4a0] sm:$0xff]
        %v451 = vld [vmem:[#allocation5 + $0x4a8] sm:$0xff]
        %v452 = vld [vmem:[#allocation5 + $0x4b0] sm:$0xff]
        %v453 = vld [vmem:[#allocation5 + $0x4b8] sm:$0xff]
        %v454 = vld [vmem:[#allocation5 + $0x4c0] sm:$0xff]
        %v455 = vld [vmem:[#allocation5 + $0x4c8] sm:$0xff]
        %v456 = vld [vmem:[#allocation5 + $0x4d0] sm:$0xff]
        %v457 = vld [vmem:[#allocation5 + $0x4d8] sm:$0xff]
        %v458 = vld [vmem:[#allocation5 + $0x4e0] sm:$0xff]
        %v459 = vld [vmem:[#allocation5 + $0x4e8] sm:$0xff]
        %v460 = vld [vmem:[#allocation5 + $0x4f0] sm:$0xff]
        %v461 = vld [vmem:[#allocation5 + $0x4f8] sm:$0xff]
        %v462 = vld [vmem:[#allocation5 + $0x500] sm:$0xff]
        %v463 = vld [vmem:[#allocation5 + $0x508] sm:$0xff]
        %v464 = vld [vmem:[#allocation5 + $0x510] sm:$0xff]
        %v465 = vld [vmem:[#allocation5 + $0x518] sm:$0xff]
        %v466 = vld [vmem:[#allocation5 + $0x520] sm:$0xff]
        %v467 = vld [vmem:[#allocation5 + $0x528] sm:$0xff]
        %v468 = vld [vmem:[#allocation5 + $0x530] sm:$0xff]
        %v469 = vld [vmem:[#allocation5 + $0x538] sm:$0xff]
        %v470 = vld [vmem:[#allocation5 + $0x540] sm:$0xff]
        %v471 = vld [vmem:[#allocation5 + $0x548] sm:$0xff]
        %v472 = vld [vmem:[#allocation5 + $0x550] sm:$0xff]
        %v473 = vld [vmem:[#allocation5 + $0x558] sm:$0xff]
        %v474 = vld [vmem:[#allocation5 + $0x560] sm:$0xff]
        %v475 = vld [vmem:[#allocation5 + $0x568] sm:$0xff]
        %v476 = vld [vmem:[#allocation5 + $0x570] sm:$0xff]
        %v477 = vld [vmem:[#allocation5 + $0x578] sm:$0xff]
        %v478 = vld [vmem:[#allocation5 + $0x580] sm:$0xff]
        %v479 = vld [vmem:[#allocation5 + $0x588] sm:$0xff]
        %v480 = vld [vmem:[#allocation5 + $0x590] sm:$0xff]
        %v481 = vld [vmem:[#allocation5 + $0x598] sm:$0xff]
        %v482 = vld [vmem:[#allocation5 + $0x5a0] sm:$0xff]
        %v483 = vld [vmem:[#allocation5 + $0x5a8] sm:$0xff]
        %v484 = vld [vmem:[#allocation5 + $0x5b0] sm:$0xff]
        %v485 = vld [vmem:[#allocation5 + $0x5b8] sm:$0xff]
        %v486 = vld [vmem:[#allocation5 + $0x5c0] sm:$0xff]
        %v487 = vld [vmem:[#allocation5 + $0x5c8] sm:$0xff]
        %v488 = vld [vmem:[#allocation5 + $0x5d0] sm:$0xff]
        %v489 = vld [vmem:[#allocation5 + $0x5d8] sm:$0xff]
        %v490 = vld [vmem:[#allocation5 + $0x5e0] sm:$0xff]
        %v491 = vld [vmem:[#allocation5 + $0x5e8] sm:$0xff]
        %v492 = vld [vmem:[#allocation5 + $0x5f0] sm:$0xff]
        %v493 = vld [vmem:[#allocation5 + $0x5f8] sm:$0xff]
        %v494 = vld [vmem:[#allocation5 + $0x600] sm:$0xff]
        %v495 = vld [vmem:[#allocation5 + $0x608] sm:$0xff]
        %v496 = vld [vmem:[#allocation5 + $0x610] sm:$0xff]
        %v497 = vld [vmem:[#allocation5 + $0x618] sm:$0xff]
        %v498 = vld [vmem:[#allocation5 + $0x620] sm:$0xff]
        %v499 = vld [vmem:[#allocation5 + $0x628] sm:$0xff]
        %v500 = vld [vmem:[#allocation5 + $0x630] sm:$0xff]
        %v501 = vld [vmem:[#allocation5 + $0x638] sm:$0xff]
        %v502 = vld [vmem:[#allocation5 + $0x640] sm:$0xff]
        %v503 = vld [vmem:[#allocation5 + $0x648] sm:$0xff]
        %v504 = vld [vmem:[#allocation5 + $0x650] sm:$0xff]
        %v505 = vld [vmem:[#allocation5 + $0x658] sm:$0xff]
        %v506 = vld [vmem:[#allocation5 + $0x660] sm:$0xff]
        %v507 = vld [vmem:[#allocation5 + $0x668] sm:$0xff]
        %v508 = vld [vmem:[#allocation5 + $0x670] sm:$0xff]
        %v509 = vld [vmem:[#allocation5 + $0x678] sm:$0xff]
        %v510 = vld [vmem:[#allocation5 + $0x680] sm:$0xff]
        %v511 = vld [vmem:[#allocation5 + $0x688] sm:$0xff]
        %v512 = vld [vmem:[#allocation5 + $0x690] sm:$0xff]
        %v513 = vld [vmem:[#allocation5 + $0x698] sm:$0xff]
        %v514 = vld [vmem:[#allocation5 + $0x6a0] sm:$0xff]
        %v515 = vld [vmem:[#allocation5 + $0x6a8] sm:$0xff]
        %v516 = vld [vmem:[#allocation5 + $0x6b0] sm:$0xff]
        %v517 = vld [vmem:[#allocation5 + $0x6b8] sm:$0xff]
        %v518 = vld [vmem:[#allocation5 + $0x6c0] sm:$0xff]
        %v519 = vld [vmem:[#allocation5 + $0x6c8] sm:$0xff]
        %v520 = vld [vmem:[#allocation5 + $0x6d0] sm:$0xff]
        %v521 = vld [vmem:[#allocation5 + $0x6d8] sm:$0xff]
        %v522 = vld [vmem:[#allocation5 + $0x6e0] sm:$0xff]
        %v523 = vld [vmem:[#allocation5 + $0x6e8] sm:$0xff]
        %v524 = vld [vmem:[#allocation5 + $0x6f0] sm:$0xff]
        %v525 = vld [vmem:[#allocation5 + $0x6f8] sm:$0xff]
        %v526 = vld [vmem:[#allocation5 + $0x700] sm:$0xff]
        %v527 = vld [vmem:[#allocation5 + $0x708] sm:$0xff]
        %v528 = vld [vmem:[#allocation5 + $0x710] sm:$0xff]
        %v529 = vld [vmem:[#allocation5 + $0x718] sm:$0xff]
        %v530 = vld [vmem:[#allocation5 + $0x720] sm:$0xff]
        %v531 = vld [vmem:[#allocation5 + $0x728] sm:$0xff]
        %v532 = vld [vmem:[#allocation5 + $0x730] sm:$0xff]
        %v533 = vld [vmem:[#allocation5 + $0x738] sm:$0xff]
        %v534 = vld [vmem:[#allocation5 + $0x740] sm:$0xff]
        %v535 = vld [vmem:[#allocation5 + $0x748] sm:$0xff]
        %v536 = vld [vmem:[#allocation5 + $0x750] sm:$0xff]
        %v537 = vld [vmem:[#allocation5 + $0x758] sm:$0xff]
        %v538 = vld [vmem:[#allocation5 + $0x760] sm:$0xff]
        %v539 = vld [vmem:[#allocation5 + $0x768] sm:$0xff]
        %v540 = vld [vmem:[#allocation5 + $0x770] sm:$0xff]
        %v541 = vld [vmem:[#allocation5 + $0x778] sm:$0xff]
        %v542 = vld [vmem:[#allocation5 + $0x780] sm:$0xff]
        %v543 = vld [vmem:[#allocation5 + $0x788] sm:$0xff]
        %v544 = vld [vmem:[#allocation5 + $0x790] sm:$0xff]
        %v545 = vld [vmem:[#allocation5 + $0x798] sm:$0xff]
        %v546 = vld [vmem:[#allocation5 + $0x7a0] sm:$0xff]
        %v547 = vld [vmem:[#allocation5 + $0x7a8] sm:$0xff]
        %v548 = vld [vmem:[#allocation5 + $0x7b0] sm:$0xff]
        %v549 = vld [vmem:[#allocation5 + $0x7b8] sm:$0xff]
        %v550 = vld [vmem:[#allocation5 + $0x7c0] sm:$0xff]
        %v551 = vld [vmem:[#allocation5 + $0x7c8] sm:$0xff]
        %v552 = vld [vmem:[#allocation5 + $0x7d0] sm:$0xff]
        %v553 = vld [vmem:[#allocation5 + $0x7d8] sm:$0xff]
        %v554 = vld [vmem:[#allocation5 + $0x7e0] sm:$0xff]
        %v555 = vld [vmem:[#allocation5 + $0x7e8] sm:$0xff]
        %v556 = vld [vmem:[#allocation5 + $0x7f0] sm:$0xff]
        %v557 = vld [vmem:[#allocation5 + $0x7f8] sm:$0xff]
        %v558 = vld [vmem:[#allocation5 + $0x800] sm:$0xff]
        %v559 = vld [vmem:[#allocation5 + $0x808] sm:$0xff]
        %v560 = vld [vmem:[#allocation5 + $0x810] sm:$0xff]
        %v561 = vld [vmem:[#allocation5 + $0x818] sm:$0xff]
        %v562 = vld [vmem:[#allocation5 + $0x820] sm:$0xff]
        %v563 = vld [vmem:[#allocation5 + $0x828] sm:$0xff]
        %v564 = vld [vmem:[#allocation5 + $0x830] sm:$0xff]
        %v565 = vld [vmem:[#allocation5 + $0x838] sm:$0xff]
        %v566 = vld [vmem:[#allocation5 + $0x840] sm:$0xff]
        %v567 = vld [vmem:[#allocation5 + $0x848] sm:$0xff]
        %v568 = vld [vmem:[#allocation5 + $0x850] sm:$0xff]
        %v569 = vld [vmem:[#allocation5 + $0x858] sm:$0xff]
        %v570 = vld [vmem:[#allocation5 + $0x860] sm:$0xff]
        %v571 = vld [vmem:[#allocation5 + $0x868] sm:$0xff]
        %v572 = vld [vmem:[#allocation5 + $0x870] sm:$0xff]
        %v573 = vld [vmem:[#allocation5 + $0x878] sm:$0xff]
        %v574 = vld [vmem:[#allocation5 + $0x880] sm:$0xff]
        %v575 = vld [vmem:[#allocation5 + $0x888] sm:$0xff]
        %v576 = vld [vmem:[#allocation5 + $0x890] sm:$0xff]
        %v577 = vld [vmem:[#allocation5 + $0x898] sm:$0xff]
        %v578 = vld [vmem:[#allocation5 + $0x8a0] sm:$0xff]
        %v579 = vld [vmem:[#allocation5 + $0x8a8] sm:$0xff]
        %v580 = vld [vmem:[#allocation5 + $0x8b0] sm:$0xff]
        %v581 = vld [vmem:[#allocation5 + $0x8b8] sm:$0xff]
        %v582 = vld [vmem:[#allocation5 + $0x8c0] sm:$0xff]
        %v583 = vld [vmem:[#allocation5 + $0x8c8] sm:$0xff]
        %v584 = vld [vmem:[#allocation5 + $0x8d0] sm:$0xff]
        %v585 = vld [vmem:[#allocation5 + $0x8d8] sm:$0xff]
        %v586 = vld [vmem:[#allocation5 + $0x8e0] sm:$0xff]
        %v587 = vld [vmem:[#allocation5 + $0x8e8] sm:$0xff]
        %v588 = vld [vmem:[#allocation5 + $0x8f0] sm:$0xff]
        %v589 = vld [vmem:[#allocation5 + $0x8f8] sm:$0xff]
        %v590 = vld [vmem:[#allocation7] sm:$0xff]
        %v591 = vld [vmem:[#allocation7 + $0x8] sm:$0xf]
        %v594 = vlaneseq
        %v595 = vshrl.u32 %v594, 7
        %v596 = vsub.s32 0, %v595
        %v597 = vrot.slane %v590, %v596
        %v598 = vlaneseq
        %v599 = vshrl.u32 %v598, 7
        %v600 = vsub.s32 1, %v599
        %v601 = vrot.slane %v590, %v600
        %v602 = vlaneseq
        %v603 = vshrl.u32 %v602, 7
        %v604 = vsub.s32 2, %v603
        %v605 = vrot.slane %v590, %v604
        %v606 = vlaneseq
        %v607 = vshrl.u32 %v606, 7
        %v608 = vsub.s32 3, %v607
        %v609 = vrot.slane %v590, %v608
        %v610 = vlaneseq
        %v611 = vshrl.u32 %v610, 7
        %v612 = vsub.s32 4, %v611
        %v613 = vrot.slane %v590, %v612
        %v614 = vlaneseq
        %v615 = vshrl.u32 %v614, 7
        %v616 = vsub.s32 5, %v615
        %v617 = vrot.slane %v590, %v616
        %v618 = vlaneseq
        %v619 = vshrl.u32 %v618, 7
        %v620 = vsub.s32 6, %v619
        %v621 = vrot.slane %v590, %v620
        %v622 = vlaneseq
        %v623 = vshrl.u32 %v622, 7
        %v624 = vsub.s32 7, %v623
        %v625 = vrot.slane %v590, %v624
        %v626 = vlaneseq
        %v627 = vshrl.u32 %v626, 7
        %v628 = vsub.s32 0, %v627
        %v629 = vrot.slane %v591, %v628
        %v630 = vlaneseq
        %v631 = vshrl.u32 %v630, 7
        %v632 = vsub.s32 1, %v631
        %v633 = vrot.slane %v591, %v632
        %v634 = vlaneseq
        %v635 = vshrl.u32 %v634, 7
        %v636 = vsub.s32 2, %v635
        %v637 = vrot.slane %v591, %v636
        %v638 = vlaneseq
        %v639 = vshrl.u32 %v638, 7
        %v640 = vsub.s32 3, %v639
        %v641 = vrot.slane %v591, %v640
        %v942 = vunpack.c.l.b16 %v302
        %v943 = vunpack.c.h.b16 %v302
        %v944 = vunpack.c.l.b16 %v303
        %v945 = vunpack.c.h.b16 %v303
        %v946 = vunpack.c.l.b16 %v304
        %v947 = vunpack.c.h.b16 %v304
        %v948 = vunpack.c.l.b16 %v305
        %v949 = vunpack.c.h.b16 %v305
        %v950 = vunpack.c.l.b16 %v306
        %v951 = vunpack.c.h.b16 %v306
        %v952 = vunpack.c.l.b16 %v307
        %v953 = vunpack.c.h.b16 %v307
        %v954 = vunpack.c.l.b16 %v308
        %v955 = vunpack.c.h.b16 %v308
        %v956 = vunpack.c.l.b16 %v309
        %v957 = vunpack.c.h.b16 %v309
        %v958 = vunpack.c.l.b16 %v310
        %v959 = vunpack.c.h.b16 %v310
        %v960 = vunpack.c.l.b16 %v311
        %v961 = vunpack.c.h.b16 %v311
        %v962 = vunpack.c.l.b16 %v312
        %v963 = vunpack.c.h.b16 %v312
        %v964 = vunpack.c.l.b16 %v313
        %v965 = vunpack.c.h.b16 %v313
        %v966 = vunpack.c.l.b16 %v314
        %v967 = vunpack.c.h.b16 %v314
        %v968 = vunpack.c.l.b16 %v315
        %v969 = vunpack.c.h.b16 %v315
        %v970 = vunpack.c.l.b16 %v316
        %v971 = vunpack.c.h.b16 %v316
        %v972 = vunpack.c.l.b16 %v317
        %v973 = vunpack.c.h.b16 %v317
        %v974 = vunpack.c.l.b16 %v318
        %v975 = vunpack.c.h.b16 %v318
        %v976 = vunpack.c.l.b16 %v319
        %v977 = vunpack.c.h.b16 %v319
        %v978 = vunpack.c.l.b16 %v320
        %v979 = vunpack.c.h.b16 %v320
        %v980 = vunpack.c.l.b16 %v321
        %v981 = vunpack.c.h.b16 %v321
        %v982 = vunpack.c.l.b16 %v322
        %v983 = vunpack.c.h.b16 %v322
        %v984 = vunpack.c.l.b16 %v323
        %v985 = vunpack.c.h.b16 %v323
        %v986 = vunpack.c.l.b16 %v324
        %v987 = vunpack.c.h.b16 %v324
        %v988 = vunpack.c.l.b16 %v325
        %v989 = vunpack.c.h.b16 %v325
        %v990 = vunpack.c.l.b16 %v326
        %v991 = vunpack.c.h.b16 %v326
        %v992 = vunpack.c.l.b16 %v327
        %v993 = vunpack.c.h.b16 %v327
        %v994 = vunpack.c.l.b16 %v328
        %v995 = vunpack.c.h.b16 %v328
        %v996 = vunpack.c.l.b16 %v329
        %v997 = vunpack.c.h.b16 %v329
        %v998 = vunpack.c.l.b16 %v330
        %v999 = vunpack.c.h.b16 %v330
        %v1000 = vunpack.c.l.b16 %v331
        %v1001 = vunpack.c.h.b16 %v331
        %v1002 = vunpack.c.l.b16 %v332
        %v1003 = vunpack.c.h.b16 %v332
        %v1004 = vunpack.c.l.b16 %v333
        %v1005 = vunpack.c.h.b16 %v333
        %v1006 = vunpack.c.l.b16 %v334
        %v1007 = vunpack.c.h.b16 %v334
        %v1008 = vunpack.c.l.b16 %v335
        %v1009 = vunpack.c.h.b16 %v335
        %v1010 = vunpack.c.l.b16 %v336
        %v1011 = vunpack.c.h.b16 %v336
        %v1012 = vunpack.c.l.b16 %v337
        %v1013 = vunpack.c.h.b16 %v337
        %v1014 = vunpack.c.l.b16 %v338
        %v1015 = vunpack.c.h.b16 %v338
        %v1016 = vunpack.c.l.b16 %v339
        %v1017 = vunpack.c.h.b16 %v339
        %v1018 = vunpack.c.l.b16 %v340
        %v1019 = vunpack.c.h.b16 %v340
        %v1020 = vunpack.c.l.b16 %v341
        %v1021 = vunpack.c.h.b16 %v341
        %v1022 = vunpack.c.l.b16 %v342
        %v1023 = vunpack.c.h.b16 %v342
        %v1024 = vunpack.c.l.b16 %v343
        %v1025 = vunpack.c.h.b16 %v343
        %v1026 = vunpack.c.l.b16 %v344
        %v1027 = vunpack.c.h.b16 %v344
        %v1028 = vunpack.c.l.b16 %v345
        %v1029 = vunpack.c.h.b16 %v345
        %v1030 = vunpack.c.l.b16 %v346
        %v1031 = vunpack.c.h.b16 %v346
        %v1032 = vunpack.c.l.b16 %v347
        %v1033 = vunpack.c.h.b16 %v347
        %v1034 = vunpack.c.l.b16 %v348
        %v1035 = vunpack.c.h.b16 %v348
        %v1036 = vunpack.c.l.b16 %v349
        %v1037 = vunpack.c.h.b16 %v349
        %v1038 = vunpack.c.l.b16 %v350
        %v1039 = vunpack.c.h.b16 %v350
        %v1040 = vunpack.c.l.b16 %v351
        %v1041 = vunpack.c.h.b16 %v351
        %v1042 = vunpack.c.l.b16 %v352
        %v1043 = vunpack.c.h.b16 %v352
        %v1044 = vunpack.c.l.b16 %v353
        %v1045 = vunpack.c.h.b16 %v353
        %v1046 = vunpack.c.l.b16 %v354
        %v1047 = vunpack.c.h.b16 %v354
        %v1048 = vunpack.c.l.b16 %v355
        %v1049 = vunpack.c.h.b16 %v355
        %v1050 = vunpack.c.l.b16 %v356
        %v1051 = vunpack.c.h.b16 %v356
        %v1052 = vunpack.c.l.b16 %v357
        %v1053 = vunpack.c.h.b16 %v357
        %v1054 = vunpack.c.l.b16 %v358
        %v1055 = vunpack.c.h.b16 %v358
        %v1056 = vunpack.c.l.b16 %v359
        %v1057 = vunpack.c.h.b16 %v359
        %v1058 = vunpack.c.l.b16 %v360
        %v1059 = vunpack.c.h.b16 %v360
        %v1060 = vunpack.c.l.b16 %v361
        %v1061 = vunpack.c.h.b16 %v361
        %v1062 = vunpack.c.l.b16 %v362
        %v1063 = vunpack.c.h.b16 %v362
        %v1064 = vunpack.c.l.b16 %v363
        %v1065 = vunpack.c.h.b16 %v363
        %v1066 = vunpack.c.l.b16 %v364
        %v1067 = vunpack.c.h.b16 %v364
        %v1068 = vunpack.c.l.b16 %v365
        %v1069 = vunpack.c.h.b16 %v365
        %v1070 = vunpack.c.l.b16 %v366
        %v1071 = vunpack.c.h.b16 %v366
        %v1072 = vunpack.c.l.b16 %v367
        %v1073 = vunpack.c.h.b16 %v367
        %v1074 = vunpack.c.l.b16 %v368
        %v1075 = vunpack.c.h.b16 %v368
        %v1076 = vunpack.c.l.b16 %v369
        %v1077 = vunpack.c.h.b16 %v369
        %v1078 = vunpack.c.l.b16 %v370
        %v1079 = vunpack.c.h.b16 %v370
        %v1080 = vunpack.c.l.b16 %v371
        %v1081 = vunpack.c.h.b16 %v371
        %v1082 = vunpack.c.l.b16 %v372
        %v1083 = vunpack.c.h.b16 %v372
        %v1084 = vunpack.c.l.b16 %v373
        %v1085 = vunpack.c.h.b16 %v373
        %v1086 = vunpack.c.l.b16 %v374
        %v1087 = vunpack.c.h.b16 %v374
        %v1088 = vunpack.c.l.b16 %v375
        %v1089 = vunpack.c.h.b16 %v375
        %v1090 = vunpack.c.l.b16 %v376
        %v1091 = vunpack.c.h.b16 %v376
        %v1092 = vunpack.c.l.b16 %v377
        %v1093 = vunpack.c.h.b16 %v377
        %v1094 = vunpack.c.l.b16 %v378
        %v1095 = vunpack.c.h.b16 %v378
        %v1096 = vunpack.c.l.b16 %v379
        %v1097 = vunpack.c.h.b16 %v379
        %v1098 = vunpack.c.l.b16 %v380
        %v1099 = vunpack.c.h.b16 %v380
        %v1100 = vunpack.c.l.b16 %v381
        %v1101 = vunpack.c.h.b16 %v381
        %v1102 = vunpack.c.l.b16 %v382
        %v1103 = vunpack.c.h.b16 %v382
        %v1104 = vunpack.c.l.b16 %v383
        %v1105 = vunpack.c.h.b16 %v383
        %v1106 = vunpack.c.l.b16 %v384
        %v1107 = vunpack.c.h.b16 %v384
        %v1108 = vunpack.c.l.b16 %v385
        %v1109 = vunpack.c.h.b16 %v385
        %v1110 = vunpack.c.l.b16 %v386
        %v1111 = vunpack.c.h.b16 %v386
        %v1112 = vunpack.c.l.b16 %v387
        %v1113 = vunpack.c.h.b16 %v387
        %v1114 = vunpack.c.l.b16 %v388
        %v1115 = vunpack.c.h.b16 %v388
        %v1116 = vunpack.c.l.b16 %v389
        %v1117 = vunpack.c.h.b16 %v389
        %v1118 = vunpack.c.l.b16 %v390
        %v1119 = vunpack.c.h.b16 %v390
        %v1120 = vunpack.c.l.b16 %v391
        %v1121 = vunpack.c.h.b16 %v391
        %v1122 = vunpack.c.l.b16 %v392
        %v1123 = vunpack.c.h.b16 %v392
        %v1124 = vunpack.c.l.b16 %v393
        %v1125 = vunpack.c.h.b16 %v393
        %v1126 = vunpack.c.l.b16 %v394
        %v1127 = vunpack.c.h.b16 %v394
        %v1128 = vunpack.c.l.b16 %v395
        %v1129 = vunpack.c.h.b16 %v395
        %v1130 = vunpack.c.l.b16 %v396
        %v1131 = vunpack.c.h.b16 %v396
        %v1132 = vunpack.c.l.b16 %v397
        %v1133 = vunpack.c.h.b16 %v397
        %v1134 = vunpack.c.l.b16 %v398
        %v1135 = vunpack.c.h.b16 %v398
        %v1136 = vunpack.c.l.b16 %v399
        %v1137 = vunpack.c.h.b16 %v399
        %v1138 = vunpack.c.l.b16 %v400
        %v1139 = vunpack.c.h.b16 %v400
        %v1140 = vunpack.c.l.b16 %v401
        %v1141 = vunpack.c.h.b16 %v401
        %v1142 = vunpack.c.l.b16 %v402
        %v1143 = vunpack.c.h.b16 %v402
        %v1144 = vunpack.c.l.b16 %v403
        %v1145 = vunpack.c.h.b16 %v403
        %v1146 = vunpack.c.l.b16 %v404
        %v1147 = vunpack.c.h.b16 %v404
        %v1148 = vunpack.c.l.b16 %v405
        %v1149 = vunpack.c.h.b16 %v405
        %v1150 = vunpack.c.l.b16 %v406
        %v1151 = vunpack.c.h.b16 %v406
        %v1152 = vunpack.c.l.b16 %v407
        %v1153 = vunpack.c.h.b16 %v407
        %v1154 = vunpack.c.l.b16 %v408
        %v1155 = vunpack.c.h.b16 %v408
        %v1156 = vunpack.c.l.b16 %v409
        %v1157 = vunpack.c.h.b16 %v409
        %v1158 = vunpack.c.l.b16 %v410
        %v1159 = vunpack.c.h.b16 %v410
        %v1160 = vunpack.c.l.b16 %v411
        %v1161 = vunpack.c.h.b16 %v411
        %v1162 = vunpack.c.l.b16 %v412
        %v1163 = vunpack.c.h.b16 %v412
        %v1164 = vunpack.c.l.b16 %v413
        %v1165 = vunpack.c.h.b16 %v413
        %v1166 = vunpack.c.l.b16 %v414
        %v1167 = vunpack.c.h.b16 %v414
        %v1168 = vunpack.c.l.b16 %v415
        %v1169 = vunpack.c.h.b16 %v415
        %v1170 = vunpack.c.l.b16 %v416
        %v1171 = vunpack.c.h.b16 %v416
        %v1172 = vunpack.c.l.b16 %v417
        %v1173 = vunpack.c.h.b16 %v417
        %v1174 = vunpack.c.l.b16 %v418
        %v1175 = vunpack.c.h.b16 %v418
        %v1176 = vunpack.c.l.b16 %v419
        %v1177 = vunpack.c.h.b16 %v419
        %v1178 = vunpack.c.l.b16 %v420
        %v1179 = vunpack.c.h.b16 %v420
        %v1180 = vunpack.c.l.b16 %v421
        %v1181 = vunpack.c.h.b16 %v421
        %v1182 = vunpack.c.l.b16 %v422
        %v1183 = vunpack.c.h.b16 %v422
        %v1184 = vunpack.c.l.b16 %v423
        %v1185 = vunpack.c.h.b16 %v423
        %v1186 = vunpack.c.l.b16 %v424
        %v1187 = vunpack.c.h.b16 %v424
        %v1188 = vunpack.c.l.b16 %v425
        %v1189 = vunpack.c.h.b16 %v425
        %v1190 = vunpack.c.l.b16 %v426
        %v1191 = vunpack.c.h.b16 %v426
        %v1192 = vunpack.c.l.b16 %v427
        %v1193 = vunpack.c.h.b16 %v427
        %v1194 = vunpack.c.l.b16 %v428
        %v1195 = vunpack.c.h.b16 %v428
        %v1196 = vunpack.c.l.b16 %v429
        %v1197 = vunpack.c.h.b16 %v429
        %v1198 = vunpack.c.l.b16 %v430
        %v1199 = vunpack.c.h.b16 %v430
        %v1200 = vunpack.c.l.b16 %v431
        %v1201 = vunpack.c.h.b16 %v431
        %v1202 = vunpack.c.l.b16 %v432
        %v1203 = vunpack.c.h.b16 %v432
        %v1204 = vunpack.c.l.b16 %v433
        %v1205 = vunpack.c.h.b16 %v433
        %v1206 = vunpack.c.l.b16 %v434
        %v1207 = vunpack.c.h.b16 %v434
        %v1208 = vunpack.c.l.b16 %v435
        %v1209 = vunpack.c.h.b16 %v435
        %v1210 = vunpack.c.l.b16 %v436
        %v1211 = vunpack.c.h.b16 %v436
        %v1212 = vunpack.c.l.b16 %v437
        %v1213 = vunpack.c.h.b16 %v437
        %v1214 = vunpack.c.l.b16 %v438
        %v1215 = vunpack.c.h.b16 %v438
        %v1216 = vunpack.c.l.b16 %v439
        %v1217 = vunpack.c.h.b16 %v439
        %v1218 = vunpack.c.l.b16 %v440
        %v1219 = vunpack.c.h.b16 %v440
        %v1220 = vunpack.c.l.b16 %v441
        %v1221 = vunpack.c.h.b16 %v441
        %v1222 = vunpack.c.l.b16 %v442
        %v1223 = vunpack.c.h.b16 %v442
        %v1224 = vunpack.c.l.b16 %v443
        %v1225 = vunpack.c.h.b16 %v443
        %v1226 = vunpack.c.l.b16 %v444
        %v1227 = vunpack.c.h.b16 %v444
        %v1228 = vunpack.c.l.b16 %v445
        %v1229 = vunpack.c.h.b16 %v445
        %v1230 = vunpack.c.l.b16 %v446
        %v1231 = vunpack.c.h.b16 %v446
        %v1232 = vunpack.c.l.b16 %v447
        %v1233 = vunpack.c.h.b16 %v447
        %v1234 = vunpack.c.l.b16 %v448
        %v1235 = vunpack.c.h.b16 %v448
        %v1236 = vunpack.c.l.b16 %v449
        %v1237 = vunpack.c.h.b16 %v449
        %v1238 = vunpack.c.l.b16 %v450
        %v1239 = vunpack.c.h.b16 %v450
        %v1240 = vunpack.c.l.b16 %v451
        %v1241 = vunpack.c.h.b16 %v451
        %v1242 = vunpack.c.l.b16 %v452
        %v1243 = vunpack.c.h.b16 %v452
        %v1244 = vunpack.c.l.b16 %v453
        %v1245 = vunpack.c.h.b16 %v453
        %v1246 = vunpack.c.l.b16 %v454
        %v1247 = vunpack.c.h.b16 %v454
        %v1248 = vunpack.c.l.b16 %v455
        %v1249 = vunpack.c.h.b16 %v455
        %v1250 = vunpack.c.l.b16 %v456
        %v1251 = vunpack.c.h.b16 %v456
        %v1252 = vunpack.c.l.b16 %v457
        %v1253 = vunpack.c.h.b16 %v457
        %v1254 = vunpack.c.l.b16 %v458
        %v1255 = vunpack.c.h.b16 %v458
        %v1256 = vunpack.c.l.b16 %v459
        %v1257 = vunpack.c.h.b16 %v459
        %v1258 = vunpack.c.l.b16 %v460
        %v1259 = vunpack.c.h.b16 %v460
        %v1260 = vunpack.c.l.b16 %v461
        %v1261 = vunpack.c.h.b16 %v461
        %v1262 = vunpack.c.l.b16 %v462
        %v1263 = vunpack.c.h.b16 %v462
        %v1264 = vunpack.c.l.b16 %v463
        %v1265 = vunpack.c.h.b16 %v463
        %v1266 = vunpack.c.l.b16 %v464
        %v1267 = vunpack.c.h.b16 %v464
        %v1268 = vunpack.c.l.b16 %v465
        %v1269 = vunpack.c.h.b16 %v465
        %v1270 = vunpack.c.l.b16 %v466
        %v1271 = vunpack.c.h.b16 %v466
        %v1272 = vunpack.c.l.b16 %v467
        %v1273 = vunpack.c.h.b16 %v467
        %v1274 = vunpack.c.l.b16 %v468
        %v1275 = vunpack.c.h.b16 %v468
        %v1276 = vunpack.c.l.b16 %v469
        %v1277 = vunpack.c.h.b16 %v469
        %v1278 = vunpack.c.l.b16 %v470
        %v1279 = vunpack.c.h.b16 %v470
        %v1280 = vunpack.c.l.b16 %v471
        %v1281 = vunpack.c.h.b16 %v471
        %v1282 = vunpack.c.l.b16 %v472
        %v1283 = vunpack.c.h.b16 %v472
        %v1284 = vunpack.c.l.b16 %v473
        %v1285 = vunpack.c.h.b16 %v473
        %v1286 = vunpack.c.l.b16 %v474
        %v1287 = vunpack.c.h.b16 %v474
        %v1288 = vunpack.c.l.b16 %v475
        %v1289 = vunpack.c.h.b16 %v475
        %v1290 = vunpack.c.l.b16 %v476
        %v1291 = vunpack.c.h.b16 %v476
        %v1292 = vunpack.c.l.b16 %v477
        %v1293 = vunpack.c.h.b16 %v477
        %v1294 = vunpack.c.l.b16 %v478
        %v1295 = vunpack.c.h.b16 %v478
        %v1296 = vunpack.c.l.b16 %v479
        %v1297 = vunpack.c.h.b16 %v479
        %v1298 = vunpack.c.l.b16 %v480
        %v1299 = vunpack.c.h.b16 %v480
        %v1300 = vunpack.c.l.b16 %v481
        %v1301 = vunpack.c.h.b16 %v481
        %v1302 = vunpack.c.l.b16 %v482
        %v1303 = vunpack.c.h.b16 %v482
        %v1304 = vunpack.c.l.b16 %v483
        %v1305 = vunpack.c.h.b16 %v483
        %v1306 = vunpack.c.l.b16 %v484
        %v1307 = vunpack.c.h.b16 %v484
        %v1308 = vunpack.c.l.b16 %v485
        %v1309 = vunpack.c.h.b16 %v485
        %v1310 = vunpack.c.l.b16 %v486
        %v1311 = vunpack.c.h.b16 %v486
        %v1312 = vunpack.c.l.b16 %v487
        %v1313 = vunpack.c.h.b16 %v487
        %v1314 = vunpack.c.l.b16 %v488
        %v1315 = vunpack.c.h.b16 %v488
        %v1316 = vunpack.c.l.b16 %v489
        %v1317 = vunpack.c.h.b16 %v489
        %v1318 = vunpack.c.l.b16 %v490
        %v1319 = vunpack.c.h.b16 %v490
        %v1320 = vunpack.c.l.b16 %v491
        %v1321 = vunpack.c.h.b16 %v491
        %v1322 = vunpack.c.l.b16 %v492
        %v1323 = vunpack.c.h.b16 %v492
        %v1324 = vunpack.c.l.b16 %v493
        %v1325 = vunpack.c.h.b16 %v493
        %v1326 = vunpack.c.l.b16 %v494
        %v1327 = vunpack.c.h.b16 %v494
        %v1328 = vunpack.c.l.b16 %v495
        %v1329 = vunpack.c.h.b16 %v495
        %v1330 = vunpack.c.l.b16 %v496
        %v1331 = vunpack.c.h.b16 %v496
        %v1332 = vunpack.c.l.b16 %v497
        %v1333 = vunpack.c.h.b16 %v497
        %v1334 = vunpack.c.l.b16 %v498
        %v1335 = vunpack.c.h.b16 %v498
        %v1336 = vunpack.c.l.b16 %v499
        %v1337 = vunpack.c.h.b16 %v499
        %v1338 = vunpack.c.l.b16 %v500
        %v1339 = vunpack.c.h.b16 %v500
        %v1340 = vunpack.c.l.b16 %v501
        %v1341 = vunpack.c.h.b16 %v501
        %v1342 = vunpack.c.l.b16 %v502
        %v1343 = vunpack.c.h.b16 %v502
        %v1344 = vunpack.c.l.b16 %v503
        %v1345 = vunpack.c.h.b16 %v503
        %v1346 = vunpack.c.l.b16 %v504
        %v1347 = vunpack.c.h.b16 %v504
        %v1348 = vunpack.c.l.b16 %v505
        %v1349 = vunpack.c.h.b16 %v505
        %v1350 = vunpack.c.l.b16 %v506
        %v1351 = vunpack.c.h.b16 %v506
        %v1352 = vunpack.c.l.b16 %v507
        %v1353 = vunpack.c.h.b16 %v507
        %v1354 = vunpack.c.l.b16 %v508
        %v1355 = vunpack.c.h.b16 %v508
        %v1356 = vunpack.c.l.b16 %v509
        %v1357 = vunpack.c.h.b16 %v509
        %v1358 = vunpack.c.l.b16 %v510
        %v1359 = vunpack.c.h.b16 %v510
        %v1360 = vunpack.c.l.b16 %v511
        %v1361 = vunpack.c.h.b16 %v511
        %v1362 = vunpack.c.l.b16 %v512
        %v1363 = vunpack.c.h.b16 %v512
        %v1364 = vunpack.c.l.b16 %v513
        %v1365 = vunpack.c.h.b16 %v513
        %v1366 = vunpack.c.l.b16 %v514
        %v1367 = vunpack.c.h.b16 %v514
        %v1368 = vunpack.c.l.b16 %v515
        %v1369 = vunpack.c.h.b16 %v515
        %v1370 = vunpack.c.l.b16 %v516
        %v1371 = vunpack.c.h.b16 %v516
        %v1372 = vunpack.c.l.b16 %v517
        %v1373 = vunpack.c.h.b16 %v517
        %v1374 = vunpack.c.l.b16 %v518
        %v1375 = vunpack.c.h.b16 %v518
        %v1376 = vunpack.c.l.b16 %v519
        %v1377 = vunpack.c.h.b16 %v519
        %v1378 = vunpack.c.l.b16 %v520
        %v1379 = vunpack.c.h.b16 %v520
        %v1380 = vunpack.c.l.b16 %v521
        %v1381 = vunpack.c.h.b16 %v521
        %v1382 = vunpack.c.l.b16 %v522
        %v1383 = vunpack.c.h.b16 %v522
        %v1384 = vunpack.c.l.b16 %v523
        %v1385 = vunpack.c.h.b16 %v523
        %v1386 = vunpack.c.l.b16 %v524
        %v1387 = vunpack.c.h.b16 %v524
        %v1388 = vunpack.c.l.b16 %v525
        %v1389 = vunpack.c.h.b16 %v525
        %v1390 = vunpack.c.l.b16 %v526
        %v1391 = vunpack.c.h.b16 %v526
        %v1392 = vunpack.c.l.b16 %v527
        %v1393 = vunpack.c.h.b16 %v527
        %v1394 = vunpack.c.l.b16 %v528
        %v1395 = vunpack.c.h.b16 %v528
        %v1396 = vunpack.c.l.b16 %v529
        %v1397 = vunpack.c.h.b16 %v529
        %v1398 = vunpack.c.l.b16 %v530
        %v1399 = vunpack.c.h.b16 %v530
        %v1400 = vunpack.c.l.b16 %v531
        %v1401 = vunpack.c.h.b16 %v531
        %v1402 = vunpack.c.l.b16 %v532
        %v1403 = vunpack.c.h.b16 %v532
        %v1404 = vunpack.c.l.b16 %v533
        %v1405 = vunpack.c.h.b16 %v533
        %v1406 = vunpack.c.l.b16 %v534
        %v1407 = vunpack.c.h.b16 %v534
        %v1408 = vunpack.c.l.b16 %v535
        %v1409 = vunpack.c.h.b16 %v535
        %v1410 = vunpack.c.l.b16 %v536
        %v1411 = vunpack.c.h.b16 %v536
        %v1412 = vunpack.c.l.b16 %v537
        %v1413 = vunpack.c.h.b16 %v537
        %v1414 = vunpack.c.l.b16 %v538
        %v1415 = vunpack.c.h.b16 %v538
        %v1416 = vunpack.c.l.b16 %v539
        %v1417 = vunpack.c.h.b16 %v539
        %v1418 = vunpack.c.l.b16 %v540
        %v1419 = vunpack.c.h.b16 %v540
        %v1420 = vunpack.c.l.b16 %v541
        %v1421 = vunpack.c.h.b16 %v541
        %v1422 = vunpack.c.l.b16 %v542
        %v1423 = vunpack.c.h.b16 %v542
        %v1424 = vunpack.c.l.b16 %v543
        %v1425 = vunpack.c.h.b16 %v543
        %v1426 = vunpack.c.l.b16 %v544
        %v1427 = vunpack.c.h.b16 %v544
        %v1428 = vunpack.c.l.b16 %v545
        %v1429 = vunpack.c.h.b16 %v545
        %v1430 = vunpack.c.l.b16 %v546
        %v1431 = vunpack.c.h.b16 %v546
        %v1432 = vunpack.c.l.b16 %v547
        %v1433 = vunpack.c.h.b16 %v547
        %v1434 = vunpack.c.l.b16 %v548
        %v1435 = vunpack.c.h.b16 %v548
        %v1436 = vunpack.c.l.b16 %v549
        %v1437 = vunpack.c.h.b16 %v549
        %v1438 = vunpack.c.l.b16 %v550
        %v1439 = vunpack.c.h.b16 %v550
        %v1440 = vunpack.c.l.b16 %v551
        %v1441 = vunpack.c.h.b16 %v551
        %v1442 = vunpack.c.l.b16 %v552
        %v1443 = vunpack.c.h.b16 %v552
        %v1444 = vunpack.c.l.b16 %v553
        %v1445 = vunpack.c.h.b16 %v553
        %v1446 = vunpack.c.l.b16 %v554
        %v1447 = vunpack.c.h.b16 %v554
        %v1448 = vunpack.c.l.b16 %v555
        %v1449 = vunpack.c.h.b16 %v555
        %v1450 = vunpack.c.l.b16 %v556
        %v1451 = vunpack.c.h.b16 %v556
        %v1452 = vunpack.c.l.b16 %v557
        %v1453 = vunpack.c.h.b16 %v557
        %v1454 = vunpack.c.l.b16 %v558
        %v1455 = vunpack.c.h.b16 %v558
        %v1456 = vunpack.c.l.b16 %v559
        %v1457 = vunpack.c.h.b16 %v559
        %v1458 = vunpack.c.l.b16 %v560
        %v1459 = vunpack.c.h.b16 %v560
        %v1460 = vunpack.c.l.b16 %v561
        %v1461 = vunpack.c.h.b16 %v561
        %v1462 = vunpack.c.l.b16 %v562
        %v1463 = vunpack.c.h.b16 %v562
        %v1464 = vunpack.c.l.b16 %v563
        %v1465 = vunpack.c.h.b16 %v563
        %v1466 = vunpack.c.l.b16 %v564
        %v1467 = vunpack.c.h.b16 %v564
        %v1468 = vunpack.c.l.b16 %v565
        %v1469 = vunpack.c.h.b16 %v565
        %v1470 = vunpack.c.l.b16 %v566
        %v1471 = vunpack.c.h.b16 %v566
        %v1472 = vunpack.c.l.b16 %v567
        %v1473 = vunpack.c.h.b16 %v567
        %v1474 = vunpack.c.l.b16 %v568
        %v1475 = vunpack.c.h.b16 %v568
        %v1476 = vunpack.c.l.b16 %v569
        %v1477 = vunpack.c.h.b16 %v569
        %v1478 = vunpack.c.l.b16 %v570
        %v1479 = vunpack.c.h.b16 %v570
        %v1480 = vunpack.c.l.b16 %v571
        %v1481 = vunpack.c.h.b16 %v571
        %v1482 = vunpack.c.l.b16 %v572
        %v1483 = vunpack.c.h.b16 %v572
        %v1484 = vunpack.c.l.b16 %v573
        %v1485 = vunpack.c.h.b16 %v573
        %v1486 = vunpack.c.l.b16 %v574
        %v1487 = vunpack.c.h.b16 %v574
        %v1488 = vunpack.c.l.b16 %v575
        %v1489 = vunpack.c.h.b16 %v575
        %v1490 = vunpack.c.l.b16 %v576
        %v1491 = vunpack.c.h.b16 %v576
        %v1492 = vunpack.c.l.b16 %v577
        %v1493 = vunpack.c.h.b16 %v577
        %v1494 = vunpack.c.l.b16 %v578
        %v1495 = vunpack.c.h.b16 %v578
        %v1496 = vunpack.c.l.b16 %v579
        %v1497 = vunpack.c.h.b16 %v579
        %v1498 = vunpack.c.l.b16 %v580
        %v1499 = vunpack.c.h.b16 %v580
        %v1500 = vunpack.c.l.b16 %v581
        %v1501 = vunpack.c.h.b16 %v581
        %v1502 = vunpack.c.l.b16 %v582
        %v1503 = vunpack.c.h.b16 %v582
        %v1504 = vunpack.c.l.b16 %v583
        %v1505 = vunpack.c.h.b16 %v583
        %v1506 = vunpack.c.l.b16 %v584
        %v1507 = vunpack.c.h.b16 %v584
        %v1508 = vunpack.c.l.b16 %v585
        %v1509 = vunpack.c.h.b16 %v585
        %v1510 = vunpack.c.l.b16 %v586
        %v1511 = vunpack.c.h.b16 %v586
        %v1512 = vunpack.c.l.b16 %v587
        %v1513 = vunpack.c.h.b16 %v587
        %v1514 = vunpack.c.l.b16 %v588
        %v1515 = vunpack.c.h.b16 %v588
        %v1516 = vunpack.c.l.b16 %v589
        %v1517 = vunpack.c.h.b16 %v589
        %v1518 = vpack.c.b16 %v954, %v942
        %v1519 = vpack.c.b16 %v955, %v943
        %v1520 = vpack.c.b16 %v956, %v944
        %v1521 = vpack.c.b16 %v957, %v945
        %v1522 = vpack.c.b16 %v958, %v946
        %v1523 = vpack.c.b16 %v959, %v947
        %v1524 = vpack.c.b16 %v960, %v948
        %v1525 = vpack.c.b16 %v961, %v949
        %v1526 = vpack.c.b16 %v962, %v950
        %v1527 = vpack.c.b16 %v963, %v951
        %v1528 = vpack.c.b16 %v964, %v952
        %v1529 = vpack.c.b16 %v965, %v953
        %v1530 = vpack.c.b16 %v978, %v966
        %v1531 = vpack.c.b16 %v979, %v967
        %v1532 = vpack.c.b16 %v980, %v968
        %v1533 = vpack.c.b16 %v981, %v969
        %v1534 = vpack.c.b16 %v982, %v970
        %v1535 = vpack.c.b16 %v983, %v971
        %v1536 = vpack.c.b16 %v984, %v972
        %v1537 = vpack.c.b16 %v985, %v973
        %v1538 = vpack.c.b16 %v986, %v974
        %v1539 = vpack.c.b16 %v987, %v975
        %v1540 = vpack.c.b16 %v988, %v976
        %v1541 = vpack.c.b16 %v989, %v977
        %v1542 = vpack.c.b16 %v1002, %v990
        %v1543 = vpack.c.b16 %v1003, %v991
        %v1544 = vpack.c.b16 %v1004, %v992
        %v1545 = vpack.c.b16 %v1005, %v993
        %v1546 = vpack.c.b16 %v1006, %v994
        %v1547 = vpack.c.b16 %v1007, %v995
        %v1548 = vpack.c.b16 %v1008, %v996
        %v1549 = vpack.c.b16 %v1009, %v997
        %v1550 = vpack.c.b16 %v1010, %v998
        %v1551 = vpack.c.b16 %v1011, %v999
        %v1552 = vpack.c.b16 %v1012, %v1000
        %v1553 = vpack.c.b16 %v1013, %v1001
        %v1554 = vpack.c.b16 %v1026, %v1014
        %v1555 = vpack.c.b16 %v1027, %v1015
        %v1556 = vpack.c.b16 %v1028, %v1016
        %v1557 = vpack.c.b16 %v1029, %v1017
        %v1558 = vpack.c.b16 %v1030, %v1018
        %v1559 = vpack.c.b16 %v1031, %v1019
        %v1560 = vpack.c.b16 %v1032, %v1020
        %v1561 = vpack.c.b16 %v1033, %v1021
        %v1562 = vpack.c.b16 %v1034, %v1022
        %v1563 = vpack.c.b16 %v1035, %v1023
        %v1564 = vpack.c.b16 %v1036, %v1024
        %v1565 = vpack.c.b16 %v1037, %v1025
        %v1566 = vpack.c.b16 %v1050, %v1038
        %v1567 = vpack.c.b16 %v1051, %v1039
        %v1568 = vpack.c.b16 %v1052, %v1040
        %v1569 = vpack.c.b16 %v1053, %v1041
        %v1570 = vpack.c.b16 %v1054, %v1042
        %v1571 = vpack.c.b16 %v1055, %v1043
        %v1572 = vpack.c.b16 %v1056, %v1044
        %v1573 = vpack.c.b16 %v1057, %v1045
        %v1574 = vpack.c.b16 %v1058, %v1046
        %v1575 = vpack.c.b16 %v1059, %v1047
        %v1576 = vpack.c.b16 %v1060, %v1048
        %v1577 = vpack.c.b16 %v1061, %v1049
        %v1578 = vpack.c.b16 %v1074, %v1062
        %v1579 = vpack.c.b16 %v1075, %v1063
        %v1580 = vpack.c.b16 %v1076, %v1064
        %v1581 = vpack.c.b16 %v1077, %v1065
        %v1582 = vpack.c.b16 %v1078, %v1066
        %v1583 = vpack.c.b16 %v1079, %v1067
        %v1584 = vpack.c.b16 %v1080, %v1068
        %v1585 = vpack.c.b16 %v1081, %v1069
        %v1586 = vpack.c.b16 %v1082, %v1070
        %v1587 = vpack.c.b16 %v1083, %v1071
        %v1588 = vpack.c.b16 %v1084, %v1072
        %v1589 = vpack.c.b16 %v1085, %v1073
        %v1590 = vpack.c.b16 %v1098, %v1086
        %v1591 = vpack.c.b16 %v1099, %v1087
        %v1592 = vpack.c.b16 %v1100, %v1088
        %v1593 = vpack.c.b16 %v1101, %v1089
        %v1594 = vpack.c.b16 %v1102, %v1090
        %v1595 = vpack.c.b16 %v1103, %v1091
        %v1596 = vpack.c.b16 %v1104, %v1092
        %v1597 = vpack.c.b16 %v1105, %v1093
        %v1598 = vpack.c.b16 %v1106, %v1094
        %v1599 = vpack.c.b16 %v1107, %v1095
        %v1600 = vpack.c.b16 %v1108, %v1096
        %v1601 = vpack.c.b16 %v1109, %v1097
        %v1602 = vpack.c.b16 %v1122, %v1110
        %v1603 = vpack.c.b16 %v1123, %v1111
        %v1604 = vpack.c.b16 %v1124, %v1112
        %v1605 = vpack.c.b16 %v1125, %v1113
        %v1606 = vpack.c.b16 %v1126, %v1114
        %v1607 = vpack.c.b16 %v1127, %v1115
        %v1608 = vpack.c.b16 %v1128, %v1116
        %v1609 = vpack.c.b16 %v1129, %v1117
        %v1610 = vpack.c.b16 %v1130, %v1118
        %v1611 = vpack.c.b16 %v1131, %v1119
        %v1612 = vpack.c.b16 %v1132, %v1120
        %v1613 = vpack.c.b16 %v1133, %v1121
        %v1614 = vpack.c.b16 %v1146, %v1134
        %v1615 = vpack.c.b16 %v1147, %v1135
        %v1616 = vpack.c.b16 %v1148, %v1136
        %v1617 = vpack.c.b16 %v1149, %v1137
        %v1618 = vpack.c.b16 %v1150, %v1138
        %v1619 = vpack.c.b16 %v1151, %v1139
        %v1620 = vpack.c.b16 %v1152, %v1140
        %v1621 = vpack.c.b16 %v1153, %v1141
        %v1622 = vpack.c.b16 %v1154, %v1142
        %v1623 = vpack.c.b16 %v1155, %v1143
        %v1624 = vpack.c.b16 %v1156, %v1144
        %v1625 = vpack.c.b16 %v1157, %v1145
        %v1626 = vpack.c.b16 %v1170, %v1158
        %v1627 = vpack.c.b16 %v1171, %v1159
        %v1628 = vpack.c.b16 %v1172, %v1160
        %v1629 = vpack.c.b16 %v1173, %v1161
        %v1630 = vpack.c.b16 %v1174, %v1162
        %v1631 = vpack.c.b16 %v1175, %v1163
        %v1632 = vpack.c.b16 %v1176, %v1164
        %v1633 = vpack.c.b16 %v1177, %v1165
        %v1634 = vpack.c.b16 %v1178, %v1166
        %v1635 = vpack.c.b16 %v1179, %v1167
        %v1636 = vpack.c.b16 %v1180, %v1168
        %v1637 = vpack.c.b16 %v1181, %v1169
        %v1638 = vpack.c.b16 %v1194, %v1182
        %v1639 = vpack.c.b16 %v1195, %v1183
        %v1640 = vpack.c.b16 %v1196, %v1184
        %v1641 = vpack.c.b16 %v1197, %v1185
        %v1642 = vpack.c.b16 %v1198, %v1186
        %v1643 = vpack.c.b16 %v1199, %v1187
        %v1644 = vpack.c.b16 %v1200, %v1188
        %v1645 = vpack.c.b16 %v1201, %v1189
        %v1646 = vpack.c.b16 %v1202, %v1190
        %v1647 = vpack.c.b16 %v1203, %v1191
        %v1648 = vpack.c.b16 %v1204, %v1192
        %v1649 = vpack.c.b16 %v1205, %v1193
        %v1650 = vpack.c.b16 %v1218, %v1206
        %v1651 = vpack.c.b16 %v1219, %v1207
        %v1652 = vpack.c.b16 %v1220, %v1208
        %v1653 = vpack.c.b16 %v1221, %v1209
        %v1654 = vpack.c.b16 %v1222, %v1210
        %v1655 = vpack.c.b16 %v1223, %v1211
        %v1656 = vpack.c.b16 %v1224, %v1212
        %v1657 = vpack.c.b16 %v1225, %v1213
        %v1658 = vpack.c.b16 %v1226, %v1214
        %v1659 = vpack.c.b16 %v1227, %v1215
        %v1660 = vpack.c.b16 %v1228, %v1216
        %v1661 = vpack.c.b16 %v1229, %v1217
        %v1662 = vpack.c.b16 %v1242, %v1230
        %v1663 = vpack.c.b16 %v1243, %v1231
        %v1664 = vpack.c.b16 %v1244, %v1232
        %v1665 = vpack.c.b16 %v1245, %v1233
        %v1666 = vpack.c.b16 %v1246, %v1234
        %v1667 = vpack.c.b16 %v1247, %v1235
        %v1668 = vpack.c.b16 %v1248, %v1236
        %v1669 = vpack.c.b16 %v1249, %v1237
        %v1670 = vpack.c.b16 %v1250, %v1238
        %v1671 = vpack.c.b16 %v1251, %v1239
        %v1672 = vpack.c.b16 %v1252, %v1240
        %v1673 = vpack.c.b16 %v1253, %v1241
        %v1674 = vpack.c.b16 %v1266, %v1254
        %v1675 = vpack.c.b16 %v1267, %v1255
        %v1676 = vpack.c.b16 %v1268, %v1256
        %v1677 = vpack.c.b16 %v1269, %v1257
        %v1678 = vpack.c.b16 %v1270, %v1258
        %v1679 = vpack.c.b16 %v1271, %v1259
        %v1680 = vpack.c.b16 %v1272, %v1260
        %v1681 = vpack.c.b16 %v1273, %v1261
        %v1682 = vpack.c.b16 %v1274, %v1262
        %v1683 = vpack.c.b16 %v1275, %v1263
        %v1684 = vpack.c.b16 %v1276, %v1264
        %v1685 = vpack.c.b16 %v1277, %v1265
        %v1686 = vpack.c.b16 %v1290, %v1278
        %v1687 = vpack.c.b16 %v1291, %v1279
        %v1688 = vpack.c.b16 %v1292, %v1280
        %v1689 = vpack.c.b16 %v1293, %v1281
        %v1690 = vpack.c.b16 %v1294, %v1282
        %v1691 = vpack.c.b16 %v1295, %v1283
        %v1692 = vpack.c.b16 %v1296, %v1284
        %v1693 = vpack.c.b16 %v1297, %v1285
        %v1694 = vpack.c.b16 %v1298, %v1286
        %v1695 = vpack.c.b16 %v1299, %v1287
        %v1696 = vpack.c.b16 %v1300, %v1288
        %v1697 = vpack.c.b16 %v1301, %v1289
        %v1698 = vpack.c.b16 %v1314, %v1302
        %v1699 = vpack.c.b16 %v1315, %v1303
        %v1700 = vpack.c.b16 %v1316, %v1304
        %v1701 = vpack.c.b16 %v1317, %v1305
        %v1702 = vpack.c.b16 %v1318, %v1306
        %v1703 = vpack.c.b16 %v1319, %v1307
        %v1704 = vpack.c.b16 %v1320, %v1308
        %v1705 = vpack.c.b16 %v1321, %v1309
        %v1706 = vpack.c.b16 %v1322, %v1310
        %v1707 = vpack.c.b16 %v1323, %v1311
        %v1708 = vpack.c.b16 %v1324, %v1312
        %v1709 = vpack.c.b16 %v1325, %v1313
        %v1710 = vpack.c.b16 %v1338, %v1326
        %v1711 = vpack.c.b16 %v1339, %v1327
        %v1712 = vpack.c.b16 %v1340, %v1328
        %v1713 = vpack.c.b16 %v1341, %v1329
        %v1714 = vpack.c.b16 %v1342, %v1330
        %v1715 = vpack.c.b16 %v1343, %v1331
        %v1716 = vpack.c.b16 %v1344, %v1332
        %v1717 = vpack.c.b16 %v1345, %v1333
        %v1718 = vpack.c.b16 %v1346, %v1334
        %v1719 = vpack.c.b16 %v1347, %v1335
        %v1720 = vpack.c.b16 %v1348, %v1336
        %v1721 = vpack.c.b16 %v1349, %v1337
        %v1722 = vpack.c.b16 %v1362, %v1350
        %v1723 = vpack.c.b16 %v1363, %v1351
        %v1724 = vpack.c.b16 %v1364, %v1352
        %v1725 = vpack.c.b16 %v1365, %v1353
        %v1726 = vpack.c.b16 %v1366, %v1354
        %v1727 = vpack.c.b16 %v1367, %v1355
        %v1728 = vpack.c.b16 %v1368, %v1356
        %v1729 = vpack.c.b16 %v1369, %v1357
        %v1730 = vpack.c.b16 %v1370, %v1358
        %v1731 = vpack.c.b16 %v1371, %v1359
        %v1732 = vpack.c.b16 %v1372, %v1360
        %v1733 = vpack.c.b16 %v1373, %v1361
        %v1734 = vpack.c.b16 %v1386, %v1374
        %v1735 = vpack.c.b16 %v1387, %v1375
        %v1736 = vpack.c.b16 %v1388, %v1376
        %v1737 = vpack.c.b16 %v1389, %v1377
        %v1738 = vpack.c.b16 %v1390, %v1378
        %v1739 = vpack.c.b16 %v1391, %v1379
        %v1740 = vpack.c.b16 %v1392, %v1380
        %v1741 = vpack.c.b16 %v1393, %v1381
        %v1742 = vpack.c.b16 %v1394, %v1382
        %v1743 = vpack.c.b16 %v1395, %v1383
        %v1744 = vpack.c.b16 %v1396, %v1384
        %v1745 = vpack.c.b16 %v1397, %v1385
        %v1746 = vpack.c.b16 %v1410, %v1398
        %v1747 = vpack.c.b16 %v1411, %v1399
        %v1748 = vpack.c.b16 %v1412, %v1400
        %v1749 = vpack.c.b16 %v1413, %v1401
        %v1750 = vpack.c.b16 %v1414, %v1402
        %v1751 = vpack.c.b16 %v1415, %v1403
        %v1752 = vpack.c.b16 %v1416, %v1404
        %v1753 = vpack.c.b16 %v1417, %v1405
        %v1754 = vpack.c.b16 %v1418, %v1406
        %v1755 = vpack.c.b16 %v1419, %v1407
        %v1756 = vpack.c.b16 %v1420, %v1408
        %v1757 = vpack.c.b16 %v1421, %v1409
        %v1758 = vpack.c.b16 %v1434, %v1422
        %v1759 = vpack.c.b16 %v1435, %v1423
        %v1760 = vpack.c.b16 %v1436, %v1424
        %v1761 = vpack.c.b16 %v1437, %v1425
        %v1762 = vpack.c.b16 %v1438, %v1426
        %v1763 = vpack.c.b16 %v1439, %v1427
        %v1764 = vpack.c.b16 %v1440, %v1428
        %v1765 = vpack.c.b16 %v1441, %v1429
        %v1766 = vpack.c.b16 %v1442, %v1430
        %v1767 = vpack.c.b16 %v1443, %v1431
        %v1768 = vpack.c.b16 %v1444, %v1432
        %v1769 = vpack.c.b16 %v1445, %v1433
        %v1770 = vpack.c.b16 %v1458, %v1446
        %v1771 = vpack.c.b16 %v1459, %v1447
        %v1772 = vpack.c.b16 %v1460, %v1448
        %v1773 = vpack.c.b16 %v1461, %v1449
        %v1774 = vpack.c.b16 %v1462, %v1450
        %v1775 = vpack.c.b16 %v1463, %v1451
        %v1776 = vpack.c.b16 %v1464, %v1452
        %v1777 = vpack.c.b16 %v1465, %v1453
        %v1778 = vpack.c.b16 %v1466, %v1454
        %v1779 = vpack.c.b16 %v1467, %v1455
        %v1780 = vpack.c.b16 %v1468, %v1456
        %v1781 = vpack.c.b16 %v1469, %v1457
        %v1782 = vpack.c.b16 %v1482, %v1470
        %v1783 = vpack.c.b16 %v1483, %v1471
        %v1784 = vpack.c.b16 %v1484, %v1472
        %v1785 = vpack.c.b16 %v1485, %v1473
        %v1786 = vpack.c.b16 %v1486, %v1474
        %v1787 = vpack.c.b16 %v1487, %v1475
        %v1788 = vpack.c.b16 %v1488, %v1476
        %v1789 = vpack.c.b16 %v1489, %v1477
        %v1790 = vpack.c.b16 %v1490, %v1478
        %v1791 = vpack.c.b16 %v1491, %v1479
        %v1792 = vpack.c.b16 %v1492, %v1480
        %v1793 = vpack.c.b16 %v1493, %v1481
        %v1794 = vpack.c.b16 %v1506, %v1494
        %v1795 = vpack.c.b16 %v1507, %v1495
        %v1796 = vpack.c.b16 %v1508, %v1496
        %v1797 = vpack.c.b16 %v1509, %v1497
        %v1798 = vpack.c.b16 %v1510, %v1498
        %v1799 = vpack.c.b16 %v1511, %v1499
        %v1800 = vpack.c.b16 %v1512, %v1500
        %v1801 = vpack.c.b16 %v1513, %v1501
        %v1802 = vpack.c.b16 %v1514, %v1502
        %v1803 = vpack.c.b16 %v1515, %v1503
        %v1804 = vpack.c.b16 %v1516, %v1504
        %v1805 = vpack.c.b16 %v1517, %v1505
        %2094 = vmatprep.subr.bf16.mxu0 %v1603
        %2095 = vmatpush1.bf16.msra.mxu0 %v1602
        %2096 = vmatprep.subr.bf16.mxu0 %v1591
        %2097 = vmatpush1.bf16.msra.mxu0 %v1590
        %2098 = vmatprep.subr.bf16.mxu0 %v1579
        %2099 = vmatpush1.bf16.msra.mxu0 %v1578
        %2100 = vmatprep.subr.bf16.mxu0 %v1567
        %2101 = vmatpush1.bf16.msra.mxu0 %v1566
        %2102 = vmatprep.subr.bf16.mxu0 %v1555
        %2103 = vmatpush1.bf16.msra.mxu0 %v1554
        %2104 = vmatprep.subr.bf16.mxu0 %v1543
        %2105 = vmatpush1.bf16.msra.mxu0 %v1542
        %2106 = vmatprep.subr.bf16.mxu0 %v1531
        %2107 = vmatpush1.bf16.msra.mxu0 %v1530
        %2108 = vmatprep.subr.bf16.mxu0 %v1519
        %2109 = vmatpush1.bf16.msra.mxu0 %v1518
        %2110 = vmatprep.subr.bf16.mxu0 %v1699
        %2111 = vmatpush2.bf16.msra.mxu0 %v1698
        %2112 = vmatprep.subr.bf16.mxu0 %v1687
        %2113 = vmatpush2.bf16.msra.mxu0 %v1686
        %2114 = vmatprep.subr.bf16.mxu0 %v1675
        %2115 = vmatpush2.bf16.msra.mxu0 %v1674
        %2116 = vmatprep.subr.bf16.mxu0 %v1663
        %2117 = vmatpush2.bf16.msra.mxu0 %v1662
        %2118 = vmatprep.subr.bf16.mxu0 %v1651
        %2119 = vmatpush2.bf16.msra.mxu0 %v1650
        %2120 = vmatprep.subr.bf16.mxu0 %v1639
        %2121 = vmatpush2.bf16.msra.mxu0 %v1638
        %2122 = vmatprep.subr.bf16.mxu0 %v1627
        %2123 = vmatpush2.bf16.msra.mxu0 %v1626
        %2124 = vmatprep.subr.bf16.mxu0 %v1615
        %2125 = vmatpush2.bf16.msra.mxu0 %v1614
        %2126 = vmatprep.mubr.bf16.mxu0 %v300
        %2127 = vmatmul.mubr.bf16.gmra.mxu0 %v299
        %v2128 = vpop.f32.mrf.mxu0
        %v2129 = vadd.f32 %v597, %v2128
        %v2130 = vpop.f32.mrf.mxu0
        %v2131 = vadd.f32 %v601, %v2130
        %v2132 = vpop.f32.mrf.mxu0
        %v2133 = vpop.f32.mrf.mxu0
        %2134 = vdwg.mxu0
        %2135 = vmatprep.subr.bf16.mxu0 %v1795
        %2136 = vmatpush1.bf16.msra.mxu0 %v1794
        %2137 = vmatprep.subr.bf16.mxu0 %v1783
        %2138 = vmatpush1.bf16.msra.mxu0 %v1782
        %2139 = vmatprep.subr.bf16.mxu0 %v1771
        %2140 = vmatpush1.bf16.msra.mxu0 %v1770
        %2141 = vmatprep.subr.bf16.mxu0 %v1759
        %2142 = vmatpush1.bf16.msra.mxu0 %v1758
        %2143 = vmatprep.subr.bf16.mxu0 %v1747
        %2144 = vmatpush1.bf16.msra.mxu0 %v1746
        %2145 = vmatprep.subr.bf16.mxu0 %v1735
        %2146 = vmatpush1.bf16.msra.mxu0 %v1734
        %2147 = vmatprep.subr.bf16.mxu0 %v1723
        %2148 = vmatpush1.bf16.msra.mxu0 %v1722
        %2149 = vmatprep.subr.bf16.mxu0 %v1711
        %2150 = vmatpush1.bf16.msra.mxu0 %v1710
        %2151 = vmatprep.subr.bf16.mxu0 0
        %2152 = vmatpush2.bf16.msra.mxu0 0
        %2153 = vmatprep.subr.bf16.mxu0 0
        %2154 = vmatpush2.bf16.msra.mxu0 0
        %2155 = vmatprep.subr.bf16.mxu0 0
        %2156 = vmatpush2.bf16.msra.mxu0 0
        %2157 = vmatprep.subr.bf16.mxu0 0
        %2158 = vmatpush2.bf16.msra.mxu0 0
        %2159 = vmatprep.subr.bf16.mxu0 0
        %2160 = vmatpush2.bf16.msra.mxu0 0
        %2161 = vmatprep.subr.bf16.mxu0 0
        %2162 = vmatpush2.bf16.msra.mxu0 0
        %2163 = vmatprep.subr.bf16.mxu0 0
        %2164 = vmatpush2.bf16.msra.mxu0 0
        %2165 = vmatprep.subr.bf16.mxu0 0
        %2166 = vmatpush2.bf16.msra.mxu0 0
        %2167 = vmatprep.mubr.bf16.mxu0 0
        %2168 = vmatmul.mubr.bf16.gmra.mxu0 %v301
        %v2169 = vpop.f32.mrf.mxu0
        %v2170 = vadd.f32 %v2129, %v2169
        %v2171 = vpop.f32.mrf.mxu0
        %v2172 = vadd.f32 %v2131, %v2171
        %v2173 = vpop.f32.mrf.mxu0
        %v2174 = vpop.f32.mrf.mxu0
        %2175 = vdwg.mxu0
        %2176 = vmatprep.subr.bf16.mxu0 %v1605
        %2177 = vmatpush1.bf16.msra.mxu0 %v1604
        %2178 = vmatprep.subr.bf16.mxu0 %v1593
        %2179 = vmatpush1.bf16.msra.mxu0 %v1592
        %2180 = vmatprep.subr.bf16.mxu0 %v1581
        %2181 = vmatpush1.bf16.msra.mxu0 %v1580
        %2182 = vmatprep.subr.bf16.mxu0 %v1569
        %2183 = vmatpush1.bf16.msra.mxu0 %v1568
        %2184 = vmatprep.subr.bf16.mxu0 %v1557
        %2185 = vmatpush1.bf16.msra.mxu0 %v1556
        %2186 = vmatprep.subr.bf16.mxu0 %v1545
        %2187 = vmatpush1.bf16.msra.mxu0 %v1544
        %2188 = vmatprep.subr.bf16.mxu0 %v1533
        %2189 = vmatpush1.bf16.msra.mxu0 %v1532
        %2190 = vmatprep.subr.bf16.mxu0 %v1521
        %2191 = vmatpush1.bf16.msra.mxu0 %v1520
        %2192 = vmatprep.subr.bf16.mxu0 %v1701
        %2193 = vmatpush2.bf16.msra.mxu0 %v1700
        %2194 = vmatprep.subr.bf16.mxu0 %v1689
        %2195 = vmatpush2.bf16.msra.mxu0 %v1688
        %2196 = vmatprep.subr.bf16.mxu0 %v1677
        %2197 = vmatpush2.bf16.msra.mxu0 %v1676
        %2198 = vmatprep.subr.bf16.mxu0 %v1665
        %2199 = vmatpush2.bf16.msra.mxu0 %v1664
        %2200 = vmatprep.subr.bf16.mxu0 %v1653
        %2201 = vmatpush2.bf16.msra.mxu0 %v1652
        %2202 = vmatprep.subr.bf16.mxu0 %v1641
        %2203 = vmatpush2.bf16.msra.mxu0 %v1640
        %2204 = vmatprep.subr.bf16.mxu0 %v1629
        %2205 = vmatpush2.bf16.msra.mxu0 %v1628
        %2206 = vmatprep.subr.bf16.mxu0 %v1617
        %2207 = vmatpush2.bf16.msra.mxu0 %v1616
        %2208 = vmatprep.mubr.bf16.mxu0 %v300
        %2209 = vmatmul.mubr.bf16.gmra.mxu0 %v299
        %v2210 = vpop.f32.mrf.mxu0
        %v2211 = vadd.f32 %v605, %v2210
        %v2212 = vpop.f32.mrf.mxu0
        %v2213 = vadd.f32 %v609, %v2212
        %v2214 = vpop.f32.mrf.mxu0
        %v2215 = vpop.f32.mrf.mxu0
        %2216 = vdwg.mxu0
        %2217 = vmatprep.subr.bf16.mxu0 %v1797
        %2218 = vmatpush1.bf16.msra.mxu0 %v1796
        %2219 = vmatprep.subr.bf16.mxu0 %v1785
        %2220 = vmatpush1.bf16.msra.mxu0 %v1784
        %2221 = vmatprep.subr.bf16.mxu0 %v1773
        %2222 = vmatpush1.bf16.msra.mxu0 %v1772
        %2223 = vmatprep.subr.bf16.mxu0 %v1761
        %2224 = vmatpush1.bf16.msra.mxu0 %v1760
        %2225 = vmatprep.subr.bf16.mxu0 %v1749
        %2226 = vmatpush1.bf16.msra.mxu0 %v1748
        %2227 = vmatprep.subr.bf16.mxu0 %v1737
        %2228 = vmatpush1.bf16.msra.mxu0 %v1736
        %2229 = vmatprep.subr.bf16.mxu0 %v1725
        %2230 = vmatpush1.bf16.msra.mxu0 %v1724
        %2231 = vmatprep.subr.bf16.mxu0 %v1713
        %2232 = vmatpush1.bf16.msra.mxu0 %v1712
        %2233 = vmatprep.subr.bf16.mxu0 0
        %2234 = vmatpush2.bf16.msra.mxu0 0
        %2235 = vmatprep.subr.bf16.mxu0 0
        %2236 = vmatpush2.bf16.msra.mxu0 0
        %2237 = vmatprep.subr.bf16.mxu0 0
        %2238 = vmatpush2.bf16.msra.mxu0 0
        %2239 = vmatprep.subr.bf16.mxu0 0
        %2240 = vmatpush2.bf16.msra.mxu0 0
        %2241 = vmatprep.subr.bf16.mxu0 0
        %2242 = vmatpush2.bf16.msra.mxu0 0
        %2243 = vmatprep.subr.bf16.mxu0 0
        %2244 = vmatpush2.bf16.msra.mxu0 0
        %2245 = vmatprep.subr.bf16.mxu0 0
        %2246 = vmatpush2.bf16.msra.mxu0 0
        %2247 = vmatprep.subr.bf16.mxu0 0
        %2248 = vmatpush2.bf16.msra.mxu0 0
        %2249 = vmatprep.mubr.bf16.mxu0 0
        %2250 = vmatmul.mubr.bf16.gmra.mxu0 %v301
        %v2251 = vpop.f32.mrf.mxu0
        %v2252 = vadd.f32 %v2211, %v2251
        %v2253 = vpop.f32.mrf.mxu0
        %v2254 = vadd.f32 %v2213, %v2253
        %v2255 = vpop.f32.mrf.mxu0
        %v2256 = vpop.f32.mrf.mxu0
        %2257 = vdwg.mxu0
        %2258 = vmatprep.subr.bf16.mxu0 %v1607
        %2259 = vmatpush1.bf16.msra.mxu0 %v1606
        %2260 = vmatprep.subr.bf16.mxu0 %v1595
        %2261 = vmatpush1.bf16.msra.mxu0 %v1594
        %2262 = vmatprep.subr.bf16.mxu0 %v1583
        %2263 = vmatpush1.bf16.msra.mxu0 %v1582
        %2264 = vmatprep.subr.bf16.mxu0 %v1571
        %2265 = vmatpush1.bf16.msra.mxu0 %v1570
        %2266 = vmatprep.subr.bf16.mxu0 %v1559
        %2267 = vmatpush1.bf16.msra.mxu0 %v1558
        %2268 = vmatprep.subr.bf16.mxu0 %v1547
        %2269 = vmatpush1.bf16.msra.mxu0 %v1546
        %2270 = vmatprep.subr.bf16.mxu0 %v1535
        %2271 = vmatpush1.bf16.msra.mxu0 %v1534
        %2272 = vmatprep.subr.bf16.mxu0 %v1523
        %2273 = vmatpush1.bf16.msra.mxu0 %v1522
        %2274 = vmatprep.subr.bf16.mxu0 %v1703
        %2275 = vmatpush2.bf16.msra.mxu0 %v1702
        %2276 = vmatprep.subr.bf16.mxu0 %v1691
        %2277 = vmatpush2.bf16.msra.mxu0 %v1690
        %2278 = vmatprep.subr.bf16.mxu0 %v1679
        %2279 = vmatpush2.bf16.msra.mxu0 %v1678
        %2280 = vmatprep.subr.bf16.mxu0 %v1667
        %2281 = vmatpush2.bf16.msra.mxu0 %v1666
        %2282 = vmatprep.subr.bf16.mxu0 %v1655
        %2283 = vmatpush2.bf16.msra.mxu0 %v1654
        %2284 = vmatprep.subr.bf16.mxu0 %v1643
        %2285 = vmatpush2.bf16.msra.mxu0 %v1642
        %2286 = vmatprep.subr.bf16.mxu0 %v1631
        %2287 = vmatpush2.bf16.msra.mxu0 %v1630
        %2288 = vmatprep.subr.bf16.mxu0 %v1619
        %2289 = vmatpush2.bf16.msra.mxu0 %v1618
        %2290 = vmatprep.mubr.bf16.mxu0 %v300
        %2291 = vmatmul.mubr.bf16.gmra.mxu0 %v299
        %v2292 = vpop.f32.mrf.mxu0
        %v2293 = vadd.f32 %v613, %v2292
        %v2294 = vpop.f32.mrf.mxu0
        %v2295 = vadd.f32 %v617, %v2294
        %v2296 = vpop.f32.mrf.mxu0
        %v2297 = vpop.f32.mrf.mxu0
        %2298 = vdwg.mxu0
        %2299 = vmatprep.subr.bf16.mxu0 %v1799
        %2300 = vmatpush1.bf16.msra.mxu0 %v1798
        %2301 = vmatprep.subr.bf16.mxu0 %v1787
        %2302 = vmatpush1.bf16.msra.mxu0 %v1786
        %2303 = vmatprep.subr.bf16.mxu0 %v1775
        %2304 = vmatpush1.bf16.msra.mxu0 %v1774
        %2305 = vmatprep.subr.bf16.mxu0 %v1763
        %2306 = vmatpush1.bf16.msra.mxu0 %v1762
        %2307 = vmatprep.subr.bf16.mxu0 %v1751
        %2308 = vmatpush1.bf16.msra.mxu0 %v1750
        %2309 = vmatprep.subr.bf16.mxu0 %v1739
        %2310 = vmatpush1.bf16.msra.mxu0 %v1738
        %2311 = vmatprep.subr.bf16.mxu0 %v1727
        %2312 = vmatpush1.bf16.msra.mxu0 %v1726
        %2313 = vmatprep.subr.bf16.mxu0 %v1715
        %2314 = vmatpush1.bf16.msra.mxu0 %v1714
        %2315 = vmatprep.subr.bf16.mxu0 0
        %2316 = vmatpush2.bf16.msra.mxu0 0
        %2317 = vmatprep.subr.bf16.mxu0 0
        %2318 = vmatpush2.bf16.msra.mxu0 0
        %2319 = vmatprep.subr.bf16.mxu0 0
        %2320 = vmatpush2.bf16.msra.mxu0 0
        %2321 = vmatprep.subr.bf16.mxu0 0
        %2322 = vmatpush2.bf16.msra.mxu0 0
        %2323 = vmatprep.subr.bf16.mxu0 0
        %2324 = vmatpush2.bf16.msra.mxu0 0
        %2325 = vmatprep.subr.bf16.mxu0 0
        %2326 = vmatpush2.bf16.msra.mxu0 0
        %2327 = vmatprep.subr.bf16.mxu0 0
        %2328 = vmatpush2.bf16.msra.mxu0 0
        %2329 = vmatprep.subr.bf16.mxu0 0
        %2330 = vmatpush2.bf16.msra.mxu0 0
        %2331 = vmatprep.mubr.bf16.mxu0 0
        %2332 = vmatmul.mubr.bf16.gmra.mxu0 %v301
        %v2333 = vpop.f32.mrf.mxu0
        %v2334 = vadd.f32 %v2293, %v2333
        %v2335 = vpop.f32.mrf.mxu0
        %v2336 = vadd.f32 %v2295, %v2335
        %v2337 = vpop.f32.mrf.mxu0
        %v2338 = vpop.f32.mrf.mxu0
        %2339 = vdwg.mxu0
        %2340 = vmatprep.subr.bf16.mxu0 %v1609
        %2341 = vmatpush1.bf16.msra.mxu0 %v1608
        %2342 = vmatprep.subr.bf16.mxu0 %v1597
        %2343 = vmatpush1.bf16.msra.mxu0 %v1596
        %2344 = vmatprep.subr.bf16.mxu0 %v1585
        %2345 = vmatpush1.bf16.msra.mxu0 %v1584
        %2346 = vmatprep.subr.bf16.mxu0 %v1573
        %2347 = vmatpush1.bf16.msra.mxu0 %v1572
        %2348 = vmatprep.subr.bf16.mxu0 %v1561
        %2349 = vmatpush1.bf16.msra.mxu0 %v1560
        %2350 = vmatprep.subr.bf16.mxu0 %v1549
        %2351 = vmatpush1.bf16.msra.mxu0 %v1548
        %2352 = vmatprep.subr.bf16.mxu0 %v1537
        %2353 = vmatpush1.bf16.msra.mxu0 %v1536
        %2354 = vmatprep.subr.bf16.mxu0 %v1525
        %2355 = vmatpush1.bf16.msra.mxu0 %v1524
        %2356 = vmatprep.subr.bf16.mxu0 %v1705
        %2357 = vmatpush2.bf16.msra.mxu0 %v1704
        %2358 = vmatprep.subr.bf16.mxu0 %v1693
        %2359 = vmatpush2.bf16.msra.mxu0 %v1692
        %2360 = vmatprep.subr.bf16.mxu0 %v1681
        %2361 = vmatpush2.bf16.msra.mxu0 %v1680
        %2362 = vmatprep.subr.bf16.mxu0 %v1669
        %2363 = vmatpush2.bf16.msra.mxu0 %v1668
        %2364 = vmatprep.subr.bf16.mxu0 %v1657
        %2365 = vmatpush2.bf16.msra.mxu0 %v1656
        %2366 = vmatprep.subr.bf16.mxu0 %v1645
        %2367 = vmatpush2.bf16.msra.mxu0 %v1644
        %2368 = vmatprep.subr.bf16.mxu0 %v1633
        %2369 = vmatpush2.bf16.msra.mxu0 %v1632
        %2370 = vmatprep.subr.bf16.mxu0 %v1621
        %2371 = vmatpush2.bf16.msra.mxu0 %v1620
        %2372 = vmatprep.mubr.bf16.mxu0 %v300
        %2373 = vmatmul.mubr.bf16.gmra.mxu0 %v299
        %v2374 = vpop.f32.mrf.mxu0
        %v2375 = vadd.f32 %v621, %v2374
        %v2376 = vpop.f32.mrf.mxu0
        %v2377 = vadd.f32 %v625, %v2376
        %v2378 = vpop.f32.mrf.mxu0
        %v2379 = vpop.f32.mrf.mxu0
        %2380 = vdwg.mxu0
        %2381 = vmatprep.subr.bf16.mxu0 %v1801
        %2382 = vmatpush1.bf16.msra.mxu0 %v1800
        %2383 = vmatprep.subr.bf16.mxu0 %v1789
        %2384 = vmatpush1.bf16.msra.mxu0 %v1788
        %2385 = vmatprep.subr.bf16.mxu0 %v1777
        %2386 = vmatpush1.bf16.msra.mxu0 %v1776
        %2387 = vmatprep.subr.bf16.mxu0 %v1765
        %2388 = vmatpush1.bf16.msra.mxu0 %v1764
        %2389 = vmatprep.subr.bf16.mxu0 %v1753
        %2390 = vmatpush1.bf16.msra.mxu0 %v1752
        %2391 = vmatprep.subr.bf16.mxu0 %v1741
        %2392 = vmatpush1.bf16.msra.mxu0 %v1740
        %2393 = vmatprep.subr.bf16.mxu0 %v1729
        %2394 = vmatpush1.bf16.msra.mxu0 %v1728
        %2395 = vmatprep.subr.bf16.mxu0 %v1717
        %2396 = vmatpush1.bf16.msra.mxu0 %v1716
        %2397 = vmatprep.subr.bf16.mxu0 0
        %2398 = vmatpush2.bf16.msra.mxu0 0
        %2399 = vmatprep.subr.bf16.mxu0 0
        %2400 = vmatpush2.bf16.msra.mxu0 0
        %2401 = vmatprep.subr.bf16.mxu0 0
        %2402 = vmatpush2.bf16.msra.mxu0 0
        %2403 = vmatprep.subr.bf16.mxu0 0
        %2404 = vmatpush2.bf16.msra.mxu0 0
        %2405 = vmatprep.subr.bf16.mxu0 0
        %2406 = vmatpush2.bf16.msra.mxu0 0
        %2407 = vmatprep.subr.bf16.mxu0 0
        %2408 = vmatpush2.bf16.msra.mxu0 0
        %2409 = vmatprep.subr.bf16.mxu0 0
        %2410 = vmatpush2.bf16.msra.mxu0 0
        %2411 = vmatprep.subr.bf16.mxu0 0
        %2412 = vmatpush2.bf16.msra.mxu0 0
        %2413 = vmatprep.mubr.bf16.mxu0 0
        %2414 = vmatmul.mubr.bf16.gmra.mxu0 %v301
        %v2415 = vpop.f32.mrf.mxu0
        %v2416 = vadd.f32 %v2375, %v2415
        %v2417 = vpop.f32.mrf.mxu0
        %v2418 = vadd.f32 %v2377, %v2417
        %v2419 = vpop.f32.mrf.mxu0
        %v2420 = vpop.f32.mrf.mxu0
        %2421 = vdwg.mxu0
        %2422 = vmatprep.subr.bf16.mxu0 %v1611
        %2423 = vmatpush1.bf16.msra.mxu0 %v1610
        %2424 = vmatprep.subr.bf16.mxu0 %v1599
        %2425 = vmatpush1.bf16.msra.mxu0 %v1598
        %2426 = vmatprep.subr.bf16.mxu0 %v1587
        %2427 = vmatpush1.bf16.msra.mxu0 %v1586
        %2428 = vmatprep.subr.bf16.mxu0 %v1575
        %2429 = vmatpush1.bf16.msra.mxu0 %v1574
        %2430 = vmatprep.subr.bf16.mxu0 %v1563
        %2431 = vmatpush1.bf16.msra.mxu0 %v1562
        %2432 = vmatprep.subr.bf16.mxu0 %v1551
        %2433 = vmatpush1.bf16.msra.mxu0 %v1550
        %2434 = vmatprep.subr.bf16.mxu0 %v1539
        %2435 = vmatpush1.bf16.msra.mxu0 %v1538
        %2436 = vmatprep.subr.bf16.mxu0 %v1527
        %2437 = vmatpush1.bf16.msra.mxu0 %v1526
        %2438 = vmatprep.subr.bf16.mxu0 %v1707
        %2439 = vmatpush2.bf16.msra.mxu0 %v1706
        %2440 = vmatprep.subr.bf16.mxu0 %v1695
        %2441 = vmatpush2.bf16.msra.mxu0 %v1694
        %2442 = vmatprep.subr.bf16.mxu0 %v1683
        %2443 = vmatpush2.bf16.msra.mxu0 %v1682
        %2444 = vmatprep.subr.bf16.mxu0 %v1671
        %2445 = vmatpush2.bf16.msra.mxu0 %v1670
        %2446 = vmatprep.subr.bf16.mxu0 %v1659
        %2447 = vmatpush2.bf16.msra.mxu0 %v1658
        %2448 = vmatprep.subr.bf16.mxu0 %v1647
        %2449 = vmatpush2.bf16.msra.mxu0 %v1646
        %2450 = vmatprep.subr.bf16.mxu0 %v1635
        %2451 = vmatpush2.bf16.msra.mxu0 %v1634
        %2452 = vmatprep.subr.bf16.mxu0 %v1623
        %2453 = vmatpush2.bf16.msra.mxu0 %v1622
        %2454 = vmatprep.mubr.bf16.mxu0 %v300
        %2455 = vmatmul.mubr.bf16.gmra.mxu0 %v299
        %v2456 = vpop.f32.mrf.mxu0
        %v2457 = vadd.f32 %v629, %v2456
        %v2458 = vpop.f32.mrf.mxu0
        %v2459 = vadd.f32 %v633, %v2458
        %v2460 = vpop.f32.mrf.mxu0
        %v2461 = vpop.f32.mrf.mxu0
        %2462 = vdwg.mxu0
        %2463 = vmatprep.subr.bf16.mxu0 %v1803
        %2464 = vmatpush1.bf16.msra.mxu0 %v1802
        %2465 = vmatprep.subr.bf16.mxu0 %v1791
        %2466 = vmatpush1.bf16.msra.mxu0 %v1790
        %2467 = vmatprep.subr.bf16.mxu0 %v1779
        %2468 = vmatpush1.bf16.msra.mxu0 %v1778
        %2469 = vmatprep.subr.bf16.mxu0 %v1767
        %2470 = vmatpush1.bf16.msra.mxu0 %v1766
        %2471 = vmatprep.subr.bf16.mxu0 %v1755
        %2472 = vmatpush1.bf16.msra.mxu0 %v1754
        %2473 = vmatprep.subr.bf16.mxu0 %v1743
        %2474 = vmatpush1.bf16.msra.mxu0 %v1742
        %2475 = vmatprep.subr.bf16.mxu0 %v1731
        %2476 = vmatpush1.bf16.msra.mxu0 %v1730
        %2477 = vmatprep.subr.bf16.mxu0 %v1719
        %2478 = vmatpush1.bf16.msra.mxu0 %v1718
        %2479 = vmatprep.subr.bf16.mxu0 0
        %2480 = vmatpush2.bf16.msra.mxu0 0
        %2481 = vmatprep.subr.bf16.mxu0 0
        %2482 = vmatpush2.bf16.msra.mxu0 0
        %2483 = vmatprep.subr.bf16.mxu0 0
        %2484 = vmatpush2.bf16.msra.mxu0 0
        %2485 = vmatprep.subr.bf16.mxu0 0
        %2486 = vmatpush2.bf16.msra.mxu0 0
        %2487 = vmatprep.subr.bf16.mxu0 0
        %2488 = vmatpush2.bf16.msra.mxu0 0
        %2489 = vmatprep.subr.bf16.mxu0 0
        %2490 = vmatpush2.bf16.msra.mxu0 0
        %2491 = vmatprep.subr.bf16.mxu0 0
        %2492 = vmatpush2.bf16.msra.mxu0 0
        %2493 = vmatprep.subr.bf16.mxu0 0
        %2494 = vmatpush2.bf16.msra.mxu0 0
        %2495 = vmatprep.mubr.bf16.mxu0 0
        %2496 = vmatmul.mubr.bf16.gmra.mxu0 %v301
        %v2497 = vpop.f32.mrf.mxu0
        %v2498 = vadd.f32 %v2457, %v2497
        %v2499 = vpop.f32.mrf.mxu0
        %v2500 = vadd.f32 %v2459, %v2499
        %v2501 = vpop.f32.mrf.mxu0
        %v2502 = vpop.f32.mrf.mxu0
        %2503 = vdwg.mxu0
        %2504 = vmatprep.subr.bf16.mxu0 %v1613
        %2505 = vmatpush1.bf16.msra.mxu0 %v1612
        %2506 = vmatprep.subr.bf16.mxu0 %v1601
        %2507 = vmatpush1.bf16.msra.mxu0 %v1600
        %2508 = vmatprep.subr.bf16.mxu0 %v1589
        %2509 = vmatpush1.bf16.msra.mxu0 %v1588
        %2510 = vmatprep.subr.bf16.mxu0 %v1577
        %2511 = vmatpush1.bf16.msra.mxu0 %v1576
        %2512 = vmatprep.subr.bf16.mxu0 %v1565
        %2513 = vmatpush1.bf16.msra.mxu0 %v1564
        %2514 = vmatprep.subr.bf16.mxu0 %v1553
        %2515 = vmatpush1.bf16.msra.mxu0 %v1552
        %2516 = vmatprep.subr.bf16.mxu0 %v1541
        %2517 = vmatpush1.bf16.msra.mxu0 %v1540
        %2518 = vmatprep.subr.bf16.mxu0 %v1529
        %2519 = vmatpush1.bf16.msra.mxu0 %v1528
        %2520 = vmatprep.subr.bf16.mxu0 %v1709
        %2521 = vmatpush2.bf16.msra.mxu0 %v1708
        %2522 = vmatprep.subr.bf16.mxu0 %v1697
        %2523 = vmatpush2.bf16.msra.mxu0 %v1696
        %2524 = vmatprep.subr.bf16.mxu0 %v1685
        %2525 = vmatpush2.bf16.msra.mxu0 %v1684
        %2526 = vmatprep.subr.bf16.mxu0 %v1673
        %2527 = vmatpush2.bf16.msra.mxu0 %v1672
        %2528 = vmatprep.subr.bf16.mxu0 %v1661
        %2529 = vmatpush2.bf16.msra.mxu0 %v1660
        %2530 = vmatprep.subr.bf16.mxu0 %v1649
        %2531 = vmatpush2.bf16.msra.mxu0 %v1648
        %2532 = vmatprep.subr.bf16.mxu0 %v1637
        %2533 = vmatpush2.bf16.msra.mxu0 %v1636
        %2534 = vmatprep.subr.bf16.mxu0 %v1625
        %2535 = vmatpush2.bf16.msra.mxu0 %v1624
        %2536 = vmatprep.mubr.bf16.mxu0 %v300
        %2537 = vmatmul.mubr.bf16.gmra.mxu0 %v299
        %v2538 = vpop.f32.mrf.mxu0
        %v2539 = vadd.f32 %v637, %v2538
        %v2540 = vpop.f32.mrf.mxu0
        %v2541 = vadd.f32 %v641, %v2540
        %v2542 = vpop.f32.mrf.mxu0
        %v2543 = vpop.f32.mrf.mxu0
        %2544 = vdwg.mxu0
        %2545 = vmatprep.subr.bf16.mxu0 %v1805
        %2546 = vmatpush1.bf16.msra.mxu0 %v1804
        %2547 = vmatprep.subr.bf16.mxu0 %v1793
        %2548 = vmatpush1.bf16.msra.mxu0 %v1792
        %2549 = vmatprep.subr.bf16.mxu0 %v1781
        %2550 = vmatpush1.bf16.msra.mxu0 %v1780
        %2551 = vmatprep.subr.bf16.mxu0 %v1769
        %2552 = vmatpush1.bf16.msra.mxu0 %v1768
        %2553 = vmatprep.subr.bf16.mxu0 %v1757
        %2554 = vmatpush1.bf16.msra.mxu0 %v1756
        %2555 = vmatprep.subr.bf16.mxu0 %v1745
        %2556 = vmatpush1.bf16.msra.mxu0 %v1744
        %2557 = vmatprep.subr.bf16.mxu0 %v1733
        %2558 = vmatpush1.bf16.msra.mxu0 %v1732
        %2559 = vmatprep.subr.bf16.mxu0 %v1721
        %2560 = vmatpush1.bf16.msra.mxu0 %v1720
        %2561 = vmatprep.subr.bf16.mxu0 0
        %2562 = vmatpush2.bf16.msra.mxu0 0
        %2563 = vmatprep.subr.bf16.mxu0 0
        %2564 = vmatpush2.bf16.msra.mxu0 0
        %2565 = vmatprep.subr.bf16.mxu0 0
        %2566 = vmatpush2.bf16.msra.mxu0 0
        %2567 = vmatprep.subr.bf16.mxu0 0
        %2568 = vmatpush2.bf16.msra.mxu0 0
        %2569 = vmatprep.subr.bf16.mxu0 0
        %2570 = vmatpush2.bf16.msra.mxu0 0
        %2571 = vmatprep.subr.bf16.mxu0 0
        %2572 = vmatpush2.bf16.msra.mxu0 0
        %2573 = vmatprep.subr.bf16.mxu0 0
        %2574 = vmatpush2.bf16.msra.mxu0 0
        %2575 = vmatprep.subr.bf16.mxu0 0
        %2576 = vmatpush2.bf16.msra.mxu0 0
        %2577 = vmatprep.mubr.bf16.mxu0 0
        %2578 = vmatmul.mubr.bf16.gmra.mxu0 %v301
        %v2579 = vpop.f32.mrf.mxu0
        %v2580 = vadd.f32 %v2539, %v2579
        %v2581 = vpop.f32.mrf.mxu0
        %v2582 = vadd.f32 %v2541, %v2581
        %v2583 = vpop.f32.mrf.mxu0
        %v2584 = vpop.f32.mrf.mxu0
        %2585 = vdwg.mxu0
        %v2586 = vmax.f32 %v2170, 0.0
        %v2587 = vmax.f32 %v2172, 0.0
        %v2588 = vmax.f32 %v2252, 0.0
        %v2589 = vmax.f32 %v2254, 0.0
        %v2590 = vmax.f32 %v2334, 0.0
        %v2591 = vmax.f32 %v2336, 0.0
        %v2592 = vmax.f32 %v2416, 0.0
        %v2593 = vmax.f32 %v2418, 0.0
        %v2594 = vmax.f32 %v2498, 0.0
        %v2595 = vmax.f32 %v2500, 0.0
        %v2596 = vmax.f32 %v2580, 0.0
        %v2597 = vmax.f32 %v2582, 0.0
        %v2598 = vpack.c.bf16 %v2586, %v2586
        %v2599 = vpack.c.bf16 %v2587, %v2587
        %v2600 = vpack.c.bf16 %v2588, %v2588
        %v2601 = vpack.c.bf16 %v2589, %v2589
        %v2602 = vpack.c.bf16 %v2590, %v2590
        %v2603 = vpack.c.bf16 %v2591, %v2591
        %v2604 = vpack.c.bf16 %v2592, %v2592
        %v2605 = vpack.c.bf16 %v2593, %v2593
        %v2606 = vpack.c.bf16 %v2594, %v2594
        %v2607 = vpack.c.bf16 %v2595, %v2595
        %v2608 = vpack.c.bf16 %v2596, %v2596
        %v2609 = vpack.c.bf16 %v2597, %v2597
        %v2610 = vld [vmem:[#allocation8] sm:$0xff]
        %v2611 = vld [vmem:[#allocation8 + $0x8] sm:$0xf]
        %v2612 = vld [vmem:[#allocation8 + $0xc] sm:$0xff]
        %v2613 = vld [vmem:[#allocation8 + $0x14] sm:$0xf]
        %v2614 = vld [vmem:[#allocation8 + $0x18] sm:$0xff]
        %v2615 = vld [vmem:[#allocation8 + $0x20] sm:$0xf]
        %v2616 = vld [vmem:[#allocation8 + $0x24] sm:$0xff]
        %v2617 = vld [vmem:[#allocation8 + $0x2c] sm:$0xf]
        %v2618 = vld [vmem:[#allocation8 + $0x30] sm:$0xff]
        %v2619 = vld [vmem:[#allocation8 + $0x38] sm:$0xf]
        %v2620 = vld [vmem:[#allocation8 + $0x3c] sm:$0xff]
        %v2621 = vld [vmem:[#allocation8 + $0x44] sm:$0xf]
        %v2622 = vld [vmem:[#allocation8 + $0x48] sm:$0xff]
        %v2623 = vld [vmem:[#allocation8 + $0x50] sm:$0xf]
        %v2624 = vld [vmem:[#allocation8 + $0x54] sm:$0xff]
        %v2625 = vld [vmem:[#allocation8 + $0x5c] sm:$0xf]
        %v2626 = vld [vmem:[#allocation8 + $0x60] sm:$0xff]
        %v2627 = vld [vmem:[#allocation8 + $0x68] sm:$0xf]
        %v2628 = vld [vmem:[#allocation8 + $0x6c] sm:$0xff]
        %v2629 = vld [vmem:[#allocation8 + $0x74] sm:$0xf]
        %v2630 = vld [vmem:[#allocation8 + $0x78] sm:$0xff]
        %v2631 = vld [vmem:[#allocation8 + $0x80] sm:$0xf]
        %v2632 = vld [vmem:[#allocation8 + $0x84] sm:$0xff]
        %v2633 = vld [vmem:[#allocation8 + $0x8c] sm:$0xf]
        %v2634 = vld [vmem:[#allocation8 + $0x90] sm:$0xff]
        %v2635 = vld [vmem:[#allocation8 + $0x98] sm:$0xf]
        %v2636 = vld [vmem:[#allocation8 + $0x9c] sm:$0xff]
        %v2637 = vld [vmem:[#allocation8 + $0xa4] sm:$0xf]
        %v2638 = vld [vmem:[#allocation8 + $0xa8] sm:$0xff]
        %v2639 = vld [vmem:[#allocation8 + $0xb0] sm:$0xf]
        %v2640 = vld [vmem:[#allocation8 + $0xb4] sm:$0xff]
        %v2641 = vld [vmem:[#allocation8 + $0xbc] sm:$0xf]
        %v2642 = vld [vmem:[#allocation8 + $0xc0] sm:$0xff]
        %v2643 = vld [vmem:[#allocation8 + $0xc8] sm:$0xf]
        %v2644 = vld [vmem:[#allocation8 + $0xcc] sm:$0xff]
        %v2645 = vld [vmem:[#allocation8 + $0xd4] sm:$0xf]
        %v2646 = vld [vmem:[#allocation8 + $0xd8] sm:$0xff]
        %v2647 = vld [vmem:[#allocation8 + $0xe0] sm:$0xf]
        %v2648 = vld [vmem:[#allocation8 + $0xe4] sm:$0xff]
        %v2649 = vld [vmem:[#allocation8 + $0xec] sm:$0xf]
        %v2650 = vld [vmem:[#allocation8 + $0xf0] sm:$0xff]
        %v2651 = vld [vmem:[#allocation8 + $0xf8] sm:$0xf]
        %v2652 = vld [vmem:[#allocation8 + $0xfc] sm:$0xff]
        %v2653 = vld [vmem:[#allocation8 + $0x104] sm:$0xf]
        %v2654 = vld [vmem:[#allocation8 + $0x108] sm:$0xff]
        %v2655 = vld [vmem:[#allocation8 + $0x110] sm:$0xf]
        %v2656 = vld [vmem:[#allocation8 + $0x114] sm:$0xff]
        %v2657 = vld [vmem:[#allocation8 + $0x11c] sm:$0xf]
        %v2658 = vld [vmem:[#allocation8 + $0x120] sm:$0xff]
        %v2659 = vld [vmem:[#allocation8 + $0x128] sm:$0xf]
        %v2660 = vld [vmem:[#allocation8 + $0x12c] sm:$0xff]
        %v2661 = vld [vmem:[#allocation8 + $0x134] sm:$0xf]
        %v2662 = vld [vmem:[#allocation8 + $0x138] sm:$0xff]
        %v2663 = vld [vmem:[#allocation8 + $0x140] sm:$0xf]
        %v2664 = vld [vmem:[#allocation8 + $0x144] sm:$0xff]
        %v2665 = vld [vmem:[#allocation8 + $0x14c] sm:$0xf]
        %v2666 = vld [vmem:[#allocation8 + $0x150] sm:$0xff]
        %v2667 = vld [vmem:[#allocation8 + $0x158] sm:$0xf]
        %v2668 = vld [vmem:[#allocation8 + $0x15c] sm:$0xff]
        %v2669 = vld [vmem:[#allocation8 + $0x164] sm:$0xf]
        %v2670 = vld [vmem:[#allocation8 + $0x168] sm:$0xff]
        %v2671 = vld [vmem:[#allocation8 + $0x170] sm:$0xf]
        %v2672 = vld [vmem:[#allocation8 + $0x174] sm:$0xff]
        %v2673 = vld [vmem:[#allocation8 + $0x17c] sm:$0xf]
        %v2674 = vld [vmem:[#allocation8 + $0x180] sm:$0xff]
        %v2675 = vld [vmem:[#allocation8 + $0x188] sm:$0xf]
        %v2676 = vld [vmem:[#allocation8 + $0x18c] sm:$0xff]
        %v2677 = vld [vmem:[#allocation8 + $0x194] sm:$0xf]
        %v2678 = vld [vmem:[#allocation8 + $0x198] sm:$0xff]
        %v2679 = vld [vmem:[#allocation8 + $0x1a0] sm:$0xf]
        %v2680 = vld [vmem:[#allocation8 + $0x1a4] sm:$0xff]
        %v2681 = vld [vmem:[#allocation8 + $0x1ac] sm:$0xf]
        %v2682 = vld [vmem:[#allocation8 + $0x1b0] sm:$0xff]
        %v2683 = vld [vmem:[#allocation8 + $0x1b8] sm:$0xf]
        %v2684 = vld [vmem:[#allocation8 + $0x1bc] sm:$0xff]
        %v2685 = vld [vmem:[#allocation8 + $0x1c4] sm:$0xf]
        %v2686 = vld [vmem:[#allocation8 + $0x1c8] sm:$0xff]
        %v2687 = vld [vmem:[#allocation8 + $0x1d0] sm:$0xf]
        %v2688 = vld [vmem:[#allocation8 + $0x1d4] sm:$0xff]
        %v2689 = vld [vmem:[#allocation8 + $0x1dc] sm:$0xf]
        %v2690 = vld [vmem:[#allocation8 + $0x1e0] sm:$0xff]
        %v2691 = vld [vmem:[#allocation8 + $0x1e8] sm:$0xf]
        %v2692 = vld [vmem:[#allocation8 + $0x1ec] sm:$0xff]
        %v2693 = vld [vmem:[#allocation8 + $0x1f4] sm:$0xf]
        %v2694 = vld [vmem:[#allocation8 + $0x1f8] sm:$0xff]
        %v2695 = vld [vmem:[#allocation8 + $0x200] sm:$0xf]
        %v2696 = vld [vmem:[#allocation8 + $0x204] sm:$0xff]
        %v2697 = vld [vmem:[#allocation8 + $0x20c] sm:$0xf]
        %v2698 = vld [vmem:[#allocation8 + $0x210] sm:$0xff]
        %v2699 = vld [vmem:[#allocation8 + $0x218] sm:$0xf]
        %v2700 = vld [vmem:[#allocation8 + $0x21c] sm:$0xff]
        %v2701 = vld [vmem:[#allocation8 + $0x224] sm:$0xf]
        %v2702 = vld [vmem:[#allocation8 + $0x228] sm:$0xff]
        %v2703 = vld [vmem:[#allocation8 + $0x230] sm:$0xf]
        %v2704 = vld [vmem:[#allocation8 + $0x234] sm:$0xff]
        %v2705 = vld [vmem:[#allocation8 + $0x23c] sm:$0xf]
        %v2706 = vld [vmem:[#allocation8 + $0x240] sm:$0xff]
        %v2707 = vld [vmem:[#allocation8 + $0x248] sm:$0xf]
        %v2708 = vld [vmem:[#allocation8 + $0x24c] sm:$0xff]
        %v2709 = vld [vmem:[#allocation8 + $0x254] sm:$0xf]
        %v2710 = vld [vmem:[#allocation8 + $0x258] sm:$0xff]
        %v2711 = vld [vmem:[#allocation8 + $0x260] sm:$0xf]
        %v2712 = vld [vmem:[#allocation8 + $0x264] sm:$0xff]
        %v2713 = vld [vmem:[#allocation8 + $0x26c] sm:$0xf]
        %v2714 = vld [vmem:[#allocation8 + $0x270] sm:$0xff]
        %v2715 = vld [vmem:[#allocation8 + $0x278] sm:$0xf]
        %v2716 = vld [vmem:[#allocation8 + $0x27c] sm:$0xff]
        %v2717 = vld [vmem:[#allocation8 + $0x284] sm:$0xf]
        %v2718 = vld [vmem:[#allocation8 + $0x288] sm:$0xff]
        %v2719 = vld [vmem:[#allocation8 + $0x290] sm:$0xf]
        %v2720 = vld [vmem:[#allocation8 + $0x294] sm:$0xff]
        %v2721 = vld [vmem:[#allocation8 + $0x29c] sm:$0xf]
        %v2722 = vld [vmem:[#allocation8 + $0x2a0] sm:$0xff]
        %v2723 = vld [vmem:[#allocation8 + $0x2a8] sm:$0xf]
        %v2724 = vld [vmem:[#allocation8 + $0x2ac] sm:$0xff]
        %v2725 = vld [vmem:[#allocation8 + $0x2b4] sm:$0xf]
        %v2726 = vld [vmem:[#allocation8 + $0x2b8] sm:$0xff]
        %v2727 = vld [vmem:[#allocation8 + $0x2c0] sm:$0xf]
        %v2728 = vld [vmem:[#allocation8 + $0x2c4] sm:$0xff]
        %v2729 = vld [vmem:[#allocation8 + $0x2cc] sm:$0xf]
        %v2730 = vld [vmem:[#allocation8 + $0x2d0] sm:$0xff]
        %v2731 = vld [vmem:[#allocation8 + $0x2d8] sm:$0xf]
        %v2732 = vld [vmem:[#allocation8 + $0x2dc] sm:$0xff]
        %v2733 = vld [vmem:[#allocation8 + $0x2e4] sm:$0xf]
        %v2734 = vld [vmem:[#allocation8 + $0x2e8] sm:$0xff]
        %v2735 = vld [vmem:[#allocation8 + $0x2f0] sm:$0xf]
        %v2736 = vld [vmem:[#allocation8 + $0x2f4] sm:$0xff]
        %v2737 = vld [vmem:[#allocation8 + $0x2fc] sm:$0xf]
        %v2738 = vld [vmem:[#allocation8 + $0x300] sm:$0xff]
        %v2739 = vld [vmem:[#allocation8 + $0x308] sm:$0xf]
        %v2740 = vld [vmem:[#allocation8 + $0x30c] sm:$0xff]
        %v2741 = vld [vmem:[#allocation8 + $0x314] sm:$0xf]
        %v2742 = vld [vmem:[#allocation8 + $0x318] sm:$0xff]
        %v2743 = vld [vmem:[#allocation8 + $0x320] sm:$0xf]
        %v2744 = vld [vmem:[#allocation8 + $0x324] sm:$0xff]
        %v2745 = vld [vmem:[#allocation8 + $0x32c] sm:$0xf]
        %v2746 = vld [vmem:[#allocation8 + $0x330] sm:$0xff]
        %v2747 = vld [vmem:[#allocation8 + $0x338] sm:$0xf]
        %v2748 = vld [vmem:[#allocation8 + $0x33c] sm:$0xff]
        %v2749 = vld [vmem:[#allocation8 + $0x344] sm:$0xf]
        %v2750 = vld [vmem:[#allocation8 + $0x348] sm:$0xff]
        %v2751 = vld [vmem:[#allocation8 + $0x350] sm:$0xf]
        %v2752 = vld [vmem:[#allocation8 + $0x354] sm:$0xff]
        %v2753 = vld [vmem:[#allocation8 + $0x35c] sm:$0xf]
        %v2754 = vld [vmem:[#allocation8 + $0x360] sm:$0xff]
        %v2755 = vld [vmem:[#allocation8 + $0x368] sm:$0xf]
        %v2756 = vld [vmem:[#allocation8 + $0x36c] sm:$0xff]
        %v2757 = vld [vmem:[#allocation8 + $0x374] sm:$0xf]
        %v2758 = vld [vmem:[#allocation8 + $0x378] sm:$0xff]
        %v2759 = vld [vmem:[#allocation8 + $0x380] sm:$0xf]
        %v2760 = vld [vmem:[#allocation8 + $0x384] sm:$0xff]
        %v2761 = vld [vmem:[#allocation8 + $0x38c] sm:$0xf]
        %v2762 = vld [vmem:[#allocation8 + $0x390] sm:$0xff]
        %v2763 = vld [vmem:[#allocation8 + $0x398] sm:$0xf]
        %v2764 = vld [vmem:[#allocation8 + $0x39c] sm:$0xff]
        %v2765 = vld [vmem:[#allocation8 + $0x3a4] sm:$0xf]
        %v2766 = vld [vmem:[#allocation8 + $0x3a8] sm:$0xff]
        %v2767 = vld [vmem:[#allocation8 + $0x3b0] sm:$0xf]
        %v2768 = vld [vmem:[#allocation8 + $0x3b4] sm:$0xff]
        %v2769 = vld [vmem:[#allocation8 + $0x3bc] sm:$0xf]
        %v2770 = vld [vmem:[#allocation8 + $0x3c0] sm:$0xff]
        %v2771 = vld [vmem:[#allocation8 + $0x3c8] sm:$0xf]
        %v2772 = vld [vmem:[#allocation8 + $0x3cc] sm:$0xff]
        %v2773 = vld [vmem:[#allocation8 + $0x3d4] sm:$0xf]
        %v2774 = vld [vmem:[#allocation8 + $0x3d8] sm:$0xff]
        %v2775 = vld [vmem:[#allocation8 + $0x3e0] sm:$0xf]
        %v2776 = vld [vmem:[#allocation8 + $0x3e4] sm:$0xff]
        %v2777 = vld [vmem:[#allocation8 + $0x3ec] sm:$0xf]
        %v2778 = vld [vmem:[#allocation8 + $0x3f0] sm:$0xff]
        %v2779 = vld [vmem:[#allocation8 + $0x3f8] sm:$0xf]
        %v2780 = vld [vmem:[#allocation8 + $0x3fc] sm:$0xff]
        %v2781 = vld [vmem:[#allocation8 + $0x404] sm:$0xf]
        %v2782 = vld [vmem:[#allocation8 + $0x408] sm:$0xff]
        %v2783 = vld [vmem:[#allocation8 + $0x410] sm:$0xf]
        %v2784 = vld [vmem:[#allocation8 + $0x414] sm:$0xff]
        %v2785 = vld [vmem:[#allocation8 + $0x41c] sm:$0xf]
        %v2786 = vld [vmem:[#allocation8 + $0x420] sm:$0xff]
        %v2787 = vld [vmem:[#allocation8 + $0x428] sm:$0xf]
        %v2788 = vld [vmem:[#allocation8 + $0x42c] sm:$0xff]
        %v2789 = vld [vmem:[#allocation8 + $0x434] sm:$0xf]
        %v2790 = vld [vmem:[#allocation8 + $0x438] sm:$0xff]
        %v2791 = vld [vmem:[#allocation8 + $0x440] sm:$0xf]
        %v2792 = vld [vmem:[#allocation8 + $0x444] sm:$0xff]
        %v2793 = vld [vmem:[#allocation8 + $0x44c] sm:$0xf]
        %v2794 = vld [vmem:[#allocation8 + $0x450] sm:$0xff]
        %v2795 = vld [vmem:[#allocation8 + $0x458] sm:$0xf]
        %v2796 = vld [vmem:[#allocation8 + $0x45c] sm:$0xff]
        %v2797 = vld [vmem:[#allocation8 + $0x464] sm:$0xf]
        %v2798 = vld [vmem:[#allocation8 + $0x468] sm:$0xff]
        %v2799 = vld [vmem:[#allocation8 + $0x470] sm:$0xf]
        %v2800 = vld [vmem:[#allocation8 + $0x474] sm:$0xff]
        %v2801 = vld [vmem:[#allocation8 + $0x47c] sm:$0xf]
        %v2802 = vld [vmem:[#allocation8 + $0x480] sm:$0xff]
        %v2803 = vld [vmem:[#allocation8 + $0x488] sm:$0xf]
        %v2804 = vld [vmem:[#allocation8 + $0x48c] sm:$0xff]
        %v2805 = vld [vmem:[#allocation8 + $0x494] sm:$0xf]
        %v2806 = vld [vmem:[#allocation8 + $0x498] sm:$0xff]
        %v2807 = vld [vmem:[#allocation8 + $0x4a0] sm:$0xf]
        %v2808 = vld [vmem:[#allocation8 + $0x4a4] sm:$0xff]
        %v2809 = vld [vmem:[#allocation8 + $0x4ac] sm:$0xf]
        %v2810 = vld [vmem:[#allocation8 + $0x4b0] sm:$0xff]
        %v2811 = vld [vmem:[#allocation8 + $0x4b8] sm:$0xf]
        %v2812 = vld [vmem:[#allocation8 + $0x4bc] sm:$0xff]
        %v2813 = vld [vmem:[#allocation8 + $0x4c4] sm:$0xf]
        %v2814 = vld [vmem:[#allocation8 + $0x4c8] sm:$0xff]
        %v2815 = vld [vmem:[#allocation8 + $0x4d0] sm:$0xf]
        %v2816 = vld [vmem:[#allocation8 + $0x4d4] sm:$0xff]
        %v2817 = vld [vmem:[#allocation8 + $0x4dc] sm:$0xf]
        %v2818 = vld [vmem:[#allocation8 + $0x4e0] sm:$0xff]
        %v2819 = vld [vmem:[#allocation8 + $0x4e8] sm:$0xf]
        %v2820 = vld [vmem:[#allocation8 + $0x4ec] sm:$0xff]
        %v2821 = vld [vmem:[#allocation8 + $0x4f4] sm:$0xf]
        %v2822 = vld [vmem:[#allocation8 + $0x4f8] sm:$0xff]
        %v2823 = vld [vmem:[#allocation8 + $0x500] sm:$0xf]
        %v2824 = vld [vmem:[#allocation8 + $0x504] sm:$0xff]
        %v2825 = vld [vmem:[#allocation8 + $0x50c] sm:$0xf]
        %v2826 = vld [vmem:[#allocation8 + $0x510] sm:$0xff]
        %v2827 = vld [vmem:[#allocation8 + $0x518] sm:$0xf]
        %v2828 = vld [vmem:[#allocation8 + $0x51c] sm:$0xff]
        %v2829 = vld [vmem:[#allocation8 + $0x524] sm:$0xf]
        %v2830 = vld [vmem:[#allocation8 + $0x528] sm:$0xff]
        %v2831 = vld [vmem:[#allocation8 + $0x530] sm:$0xf]
        %v2832 = vld [vmem:[#allocation8 + $0x534] sm:$0xff]
        %v2833 = vld [vmem:[#allocation8 + $0x53c] sm:$0xf]
        %v2834 = vld [vmem:[#allocation8 + $0x540] sm:$0xff]
        %v2835 = vld [vmem:[#allocation8 + $0x548] sm:$0xf]
        %v2836 = vld [vmem:[#allocation8 + $0x54c] sm:$0xff]
        %v2837 = vld [vmem:[#allocation8 + $0x554] sm:$0xf]
        %v2838 = vld [vmem:[#allocation8 + $0x558] sm:$0xff]
        %v2839 = vld [vmem:[#allocation8 + $0x560] sm:$0xf]
        %v2840 = vld [vmem:[#allocation8 + $0x564] sm:$0xff]
        %v2841 = vld [vmem:[#allocation8 + $0x56c] sm:$0xf]
        %v2842 = vld [vmem:[#allocation8 + $0x570] sm:$0xff]
        %v2843 = vld [vmem:[#allocation8 + $0x578] sm:$0xf]
        %v2844 = vld [vmem:[#allocation8 + $0x57c] sm:$0xff]
        %v2845 = vld [vmem:[#allocation8 + $0x584] sm:$0xf]
        %v2846 = vld [vmem:[#allocation8 + $0x588] sm:$0xff]
        %v2847 = vld [vmem:[#allocation8 + $0x590] sm:$0xf]
        %v2848 = vld [vmem:[#allocation8 + $0x594] sm:$0xff]
        %v2849 = vld [vmem:[#allocation8 + $0x59c] sm:$0xf]
        %v2850 = vld [vmem:[#allocation8 + $0x5a0] sm:$0xff]
        %v2851 = vld [vmem:[#allocation8 + $0x5a8] sm:$0xf]
        %v2852 = vld [vmem:[#allocation8 + $0x5ac] sm:$0xff]
        %v2853 = vld [vmem:[#allocation8 + $0x5b4] sm:$0xf]
        %v2854 = vld [vmem:[#allocation8 + $0x5b8] sm:$0xff]
        %v2855 = vld [vmem:[#allocation8 + $0x5c0] sm:$0xf]
        %v2856 = vld [vmem:[#allocation8 + $0x5c4] sm:$0xff]
        %v2857 = vld [vmem:[#allocation8 + $0x5cc] sm:$0xf]
        %v2858 = vld [vmem:[#allocation8 + $0x5d0] sm:$0xff]
        %v2859 = vld [vmem:[#allocation8 + $0x5d8] sm:$0xf]
        %v2860 = vld [vmem:[#allocation8 + $0x5dc] sm:$0xff]
        %v2861 = vld [vmem:[#allocation8 + $0x5e4] sm:$0xf]
        %v2862 = vld [vmem:[#allocation8 + $0x5e8] sm:$0xff]
        %v2863 = vld [vmem:[#allocation8 + $0x5f0] sm:$0xf]
        %v2864 = vld [vmem:[#allocation8 + $0x5f4] sm:$0xff]
        %v2865 = vld [vmem:[#allocation8 + $0x5fc] sm:$0xf]
        %v2866 = vld [vmem:[#allocation8 + $0x600] sm:$0xff]
        %v2867 = vld [vmem:[#allocation8 + $0x608] sm:$0xf]
        %v2868 = vld [vmem:[#allocation8 + $0x60c] sm:$0xff]
        %v2869 = vld [vmem:[#allocation8 + $0x614] sm:$0xf]
        %v2870 = vld [vmem:[#allocation8 + $0x618] sm:$0xff]
        %v2871 = vld [vmem:[#allocation8 + $0x620] sm:$0xf]
        %v2872 = vld [vmem:[#allocation8 + $0x624] sm:$0xff]
        %v2873 = vld [vmem:[#allocation8 + $0x62c] sm:$0xf]
        %v2874 = vld [vmem:[#allocation8 + $0x630] sm:$0xff]
        %v2875 = vld [vmem:[#allocation8 + $0x638] sm:$0xf]
        %v2876 = vld [vmem:[#allocation8 + $0x63c] sm:$0xff]
        %v2877 = vld [vmem:[#allocation8 + $0x644] sm:$0xf]
        %v2878 = vld [vmem:[#allocation8 + $0x648] sm:$0xff]
        %v2879 = vld [vmem:[#allocation8 + $0x650] sm:$0xf]
        %v2880 = vld [vmem:[#allocation8 + $0x654] sm:$0xff]
        %v2881 = vld [vmem:[#allocation8 + $0x65c] sm:$0xf]
        %v2882 = vld [vmem:[#allocation8 + $0x660] sm:$0xff]
        %v2883 = vld [vmem:[#allocation8 + $0x668] sm:$0xf]
        %v2884 = vld [vmem:[#allocation8 + $0x66c] sm:$0xff]
        %v2885 = vld [vmem:[#allocation8 + $0x674] sm:$0xf]
        %v2886 = vld [vmem:[#allocation8 + $0x678] sm:$0xff]
        %v2887 = vld [vmem:[#allocation8 + $0x680] sm:$0xf]
        %v2888 = vld [vmem:[#allocation8 + $0x684] sm:$0xff]
        %v2889 = vld [vmem:[#allocation8 + $0x68c] sm:$0xf]
        %v2890 = vld [vmem:[#allocation8 + $0x690] sm:$0xff]
        %v2891 = vld [vmem:[#allocation8 + $0x698] sm:$0xf]
        %v2892 = vld [vmem:[#allocation8 + $0x69c] sm:$0xff]
        %v2893 = vld [vmem:[#allocation8 + $0x6a4] sm:$0xf]
        %v2894 = vld [vmem:[#allocation8 + $0x6a8] sm:$0xff]
        %v2895 = vld [vmem:[#allocation8 + $0x6b0] sm:$0xf]
        %v2896 = vld [vmem:[#allocation8 + $0x6b4] sm:$0xff]
        %v2897 = vld [vmem:[#allocation8 + $0x6bc] sm:$0xf]
        %v2898 = vld [vmem:[#allocation8 + $0x6c0] sm:$0xff]
        %v2899 = vld [vmem:[#allocation8 + $0x6c8] sm:$0xf]
        %v2900 = vld [vmem:[#allocation8 + $0x6cc] sm:$0xff]
        %v2901 = vld [vmem:[#allocation8 + $0x6d4] sm:$0xf]
        %v2902 = vld [vmem:[#allocation8 + $0x6d8] sm:$0xff]
        %v2903 = vld [vmem:[#allocation8 + $0x6e0] sm:$0xf]
        %v2904 = vld [vmem:[#allocation8 + $0x6e4] sm:$0xff]
        %v2905 = vld [vmem:[#allocation8 + $0x6ec] sm:$0xf]
        %v2906 = vld [vmem:[#allocation8 + $0x6f0] sm:$0xff]
        %v2907 = vld [vmem:[#allocation8 + $0x6f8] sm:$0xf]
        %v2908 = vld [vmem:[#allocation8 + $0x6fc] sm:$0xff]
        %v2909 = vld [vmem:[#allocation8 + $0x704] sm:$0xf]
        %v2910 = vld [vmem:[#allocation8 + $0x708] sm:$0xff]
        %v2911 = vld [vmem:[#allocation8 + $0x710] sm:$0xf]
        %v2912 = vld [vmem:[#allocation8 + $0x714] sm:$0xff]
        %v2913 = vld [vmem:[#allocation8 + $0x71c] sm:$0xf]
        %v2914 = vld [vmem:[#allocation8 + $0x720] sm:$0xff]
        %v2915 = vld [vmem:[#allocation8 + $0x728] sm:$0xf]
        %v2916 = vld [vmem:[#allocation8 + $0x72c] sm:$0xff]
        %v2917 = vld [vmem:[#allocation8 + $0x734] sm:$0xf]
        %v2918 = vld [vmem:[#allocation8 + $0x738] sm:$0xff]
        %v2919 = vld [vmem:[#allocation8 + $0x740] sm:$0xf]
        %v2920 = vld [vmem:[#allocation8 + $0x744] sm:$0xff]
        %v2921 = vld [vmem:[#allocation8 + $0x74c] sm:$0xf]
        %v2922 = vld [vmem:[#allocation8 + $0x750] sm:$0xff]
        %v2923 = vld [vmem:[#allocation8 + $0x758] sm:$0xf]
        %v2924 = vld [vmem:[#allocation8 + $0x75c] sm:$0xff]
        %v2925 = vld [vmem:[#allocation8 + $0x764] sm:$0xf]
        %v2926 = vld [vmem:[#allocation8 + $0x768] sm:$0xff]
        %v2927 = vld [vmem:[#allocation8 + $0x770] sm:$0xf]
        %v2928 = vld [vmem:[#allocation8 + $0x774] sm:$0xff]
        %v2929 = vld [vmem:[#allocation8 + $0x77c] sm:$0xf]
        %v2930 = vld [vmem:[#allocation8 + $0x780] sm:$0xff]
        %v2931 = vld [vmem:[#allocation8 + $0x788] sm:$0xf]
        %v2932 = vld [vmem:[#allocation8 + $0x78c] sm:$0xff]
        %v2933 = vld [vmem:[#allocation8 + $0x794] sm:$0xf]
        %v2934 = vld [vmem:[#allocation8 + $0x798] sm:$0xff]
        %v2935 = vld [vmem:[#allocation8 + $0x7a0] sm:$0xf]
        %v2936 = vld [vmem:[#allocation8 + $0x7a4] sm:$0xff]
        %v2937 = vld [vmem:[#allocation8 + $0x7ac] sm:$0xf]
        %v2938 = vld [vmem:[#allocation8 + $0x7b0] sm:$0xff]
        %v2939 = vld [vmem:[#allocation8 + $0x7b8] sm:$0xf]
        %v2940 = vld [vmem:[#allocation8 + $0x7bc] sm:$0xff]
        %v2941 = vld [vmem:[#allocation8 + $0x7c4] sm:$0xf]
        %v2942 = vld [vmem:[#allocation8 + $0x7c8] sm:$0xff]
        %v2943 = vld [vmem:[#allocation8 + $0x7d0] sm:$0xf]
        %v2944 = vld [vmem:[#allocation8 + $0x7d4] sm:$0xff]
        %v2945 = vld [vmem:[#allocation8 + $0x7dc] sm:$0xf]
        %v2946 = vld [vmem:[#allocation8 + $0x7e0] sm:$0xff]
        %v2947 = vld [vmem:[#allocation8 + $0x7e8] sm:$0xf]
        %v2948 = vld [vmem:[#allocation8 + $0x7ec] sm:$0xff]
        %v2949 = vld [vmem:[#allocation8 + $0x7f4] sm:$0xf]
        %v2950 = vld [vmem:[#allocation8 + $0x7f8] sm:$0xff]
        %v2951 = vld [vmem:[#allocation8 + $0x800] sm:$0xf]
        %v2952 = vld [vmem:[#allocation8 + $0x804] sm:$0xff]
        %v2953 = vld [vmem:[#allocation8 + $0x80c] sm:$0xf]
        %v2954 = vld [vmem:[#allocation8 + $0x810] sm:$0xff]
        %v2955 = vld [vmem:[#allocation8 + $0x818] sm:$0xf]
        %v2956 = vld [vmem:[#allocation8 + $0x81c] sm:$0xff]
        %v2957 = vld [vmem:[#allocation8 + $0x824] sm:$0xf]
        %v2958 = vld [vmem:[#allocation8 + $0x828] sm:$0xff]
        %v2959 = vld [vmem:[#allocation8 + $0x830] sm:$0xf]
        %v2960 = vld [vmem:[#allocation8 + $0x834] sm:$0xff]
        %v2961 = vld [vmem:[#allocation8 + $0x83c] sm:$0xf]
        %v2962 = vld [vmem:[#allocation8 + $0x840] sm:$0xff]
        %v2963 = vld [vmem:[#allocation8 + $0x848] sm:$0xf]
        %v2964 = vld [vmem:[#allocation8 + $0x84c] sm:$0xff]
        %v2965 = vld [vmem:[#allocation8 + $0x854] sm:$0xf]
        %v2966 = vld [vmem:[#allocation8 + $0x858] sm:$0xff]
        %v2967 = vld [vmem:[#allocation8 + $0x860] sm:$0xf]
        %v2968 = vld [vmem:[#allocation8 + $0x864] sm:$0xff]
        %v2969 = vld [vmem:[#allocation8 + $0x86c] sm:$0xf]
        %v2970 = vld [vmem:[#allocation8 + $0x870] sm:$0xff]
        %v2971 = vld [vmem:[#allocation8 + $0x878] sm:$0xf]
        %v2972 = vld [vmem:[#allocation8 + $0x87c] sm:$0xff]
        %v2973 = vld [vmem:[#allocation8 + $0x884] sm:$0xf]
        %v2974 = vld [vmem:[#allocation8 + $0x888] sm:$0xff]
        %v2975 = vld [vmem:[#allocation8 + $0x890] sm:$0xf]
        %v2976 = vld [vmem:[#allocation8 + $0x894] sm:$0xff]
        %v2977 = vld [vmem:[#allocation8 + $0x89c] sm:$0xf]
        %v2978 = vld [vmem:[#allocation8 + $0x8a0] sm:$0xff]
        %v2979 = vld [vmem:[#allocation8 + $0x8a8] sm:$0xf]
        %v2980 = vld [vmem:[#allocation8 + $0x8ac] sm:$0xff]
        %v2981 = vld [vmem:[#allocation8 + $0x8b4] sm:$0xf]
        %v2982 = vld [vmem:[#allocation8 + $0x8b8] sm:$0xff]
        %v2983 = vld [vmem:[#allocation8 + $0x8c0] sm:$0xf]
        %v2984 = vld [vmem:[#allocation8 + $0x8c4] sm:$0xff]
        %v2985 = vld [vmem:[#allocation8 + $0x8cc] sm:$0xf]
        %v2986 = vld [vmem:[#allocation8 + $0x8d0] sm:$0xff]
        %v2987 = vld [vmem:[#allocation8 + $0x8d8] sm:$0xf]
        %v2988 = vld [vmem:[#allocation8 + $0x8dc] sm:$0xff]
        %v2989 = vld [vmem:[#allocation8 + $0x8e4] sm:$0xf]
        %v2990 = vld [vmem:[#allocation8 + $0x8e8] sm:$0xff]
        %v2991 = vld [vmem:[#allocation8 + $0x8f0] sm:$0xf]
        %v2992 = vld [vmem:[#allocation8 + $0x8f4] sm:$0xff]
        %v2993 = vld [vmem:[#allocation8 + $0x8fc] sm:$0xf]
        %v2994 = vld [vmem:[#allocation10] sm:$0x7]
        %v2996 = vlaneseq
        %v2997 = vshrl.u32 %v2996, 7
        %v2998 = vsub.s32 0, %v2997
        %v2999 = vrot.slane %v2994, %v2998
        %v3000 = vlaneseq
        %v3001 = vshrl.u32 %v3000, 7
        %v3002 = vsub.s32 1, %v3001
        %v3003 = vrot.slane %v2994, %v3002
        %v3004 = vlaneseq
        %v3005 = vshrl.u32 %v3004, 7
        %v3006 = vsub.s32 2, %v3005
        %v3007 = vrot.slane %v2994, %v3006
        %v3395 = vunpack.c.l.b16 %v2610
        %v3396 = vunpack.c.h.b16 %v2610
        %v3397 = vunpack.c.l.b16 %v2611
        %v3398 = vunpack.c.l.b16 %v2612
        %v3399 = vunpack.c.h.b16 %v2612
        %v3400 = vunpack.c.l.b16 %v2613
        %v3401 = vunpack.c.l.b16 %v2614
        %v3402 = vunpack.c.h.b16 %v2614
        %v3403 = vunpack.c.l.b16 %v2615
        %v3404 = vunpack.c.l.b16 %v2616
        %v3405 = vunpack.c.h.b16 %v2616
        %v3406 = vunpack.c.l.b16 %v2617
        %v3407 = vunpack.c.l.b16 %v2618
        %v3408 = vunpack.c.h.b16 %v2618
        %v3409 = vunpack.c.l.b16 %v2619
        %v3410 = vunpack.c.l.b16 %v2620
        %v3411 = vunpack.c.h.b16 %v2620
        %v3412 = vunpack.c.l.b16 %v2621
        %v3413 = vunpack.c.l.b16 %v2622
        %v3414 = vunpack.c.h.b16 %v2622
        %v3415 = vunpack.c.l.b16 %v2623
        %v3416 = vunpack.c.l.b16 %v2624
        %v3417 = vunpack.c.h.b16 %v2624
        %v3418 = vunpack.c.l.b16 %v2625
        %v3419 = vunpack.c.l.b16 %v2626
        %v3420 = vunpack.c.h.b16 %v2626
        %v3421 = vunpack.c.l.b16 %v2627
        %v3422 = vunpack.c.l.b16 %v2628
        %v3423 = vunpack.c.h.b16 %v2628
        %v3424 = vunpack.c.l.b16 %v2629
        %v3425 = vunpack.c.l.b16 %v2630
        %v3426 = vunpack.c.h.b16 %v2630
        %v3427 = vunpack.c.l.b16 %v2631
        %v3428 = vunpack.c.l.b16 %v2632
        %v3429 = vunpack.c.h.b16 %v2632
        %v3430 = vunpack.c.l.b16 %v2633
        %v3431 = vunpack.c.l.b16 %v2634
        %v3432 = vunpack.c.h.b16 %v2634
        %v3433 = vunpack.c.l.b16 %v2635
        %v3434 = vunpack.c.l.b16 %v2636
        %v3435 = vunpack.c.h.b16 %v2636
        %v3436 = vunpack.c.l.b16 %v2637
        %v3437 = vunpack.c.l.b16 %v2638
        %v3438 = vunpack.c.h.b16 %v2638
        %v3439 = vunpack.c.l.b16 %v2639
        %v3440 = vunpack.c.l.b16 %v2640
        %v3441 = vunpack.c.h.b16 %v2640
        %v3442 = vunpack.c.l.b16 %v2641
        %v3443 = vunpack.c.l.b16 %v2642
        %v3444 = vunpack.c.h.b16 %v2642
        %v3445 = vunpack.c.l.b16 %v2643
        %v3446 = vunpack.c.l.b16 %v2644
        %v3447 = vunpack.c.h.b16 %v2644
        %v3448 = vunpack.c.l.b16 %v2645
        %v3449 = vunpack.c.l.b16 %v2646
        %v3450 = vunpack.c.h.b16 %v2646
        %v3451 = vunpack.c.l.b16 %v2647
        %v3452 = vunpack.c.l.b16 %v2648
        %v3453 = vunpack.c.h.b16 %v2648
        %v3454 = vunpack.c.l.b16 %v2649
        %v3455 = vunpack.c.l.b16 %v2650
        %v3456 = vunpack.c.h.b16 %v2650
        %v3457 = vunpack.c.l.b16 %v2651
        %v3458 = vunpack.c.l.b16 %v2652
        %v3459 = vunpack.c.h.b16 %v2652
        %v3460 = vunpack.c.l.b16 %v2653
        %v3461 = vunpack.c.l.b16 %v2654
        %v3462 = vunpack.c.h.b16 %v2654
        %v3463 = vunpack.c.l.b16 %v2655
        %v3464 = vunpack.c.l.b16 %v2656
        %v3465 = vunpack.c.h.b16 %v2656
        %v3466 = vunpack.c.l.b16 %v2657
        %v3467 = vunpack.c.l.b16 %v2658
        %v3468 = vunpack.c.h.b16 %v2658
        %v3469 = vunpack.c.l.b16 %v2659
        %v3470 = vunpack.c.l.b16 %v2660
        %v3471 = vunpack.c.h.b16 %v2660
        %v3472 = vunpack.c.l.b16 %v2661
        %v3473 = vunpack.c.l.b16 %v2662
        %v3474 = vunpack.c.h.b16 %v2662
        %v3475 = vunpack.c.l.b16 %v2663
        %v3476 = vunpack.c.l.b16 %v2664
        %v3477 = vunpack.c.h.b16 %v2664
        %v3478 = vunpack.c.l.b16 %v2665
        %v3479 = vunpack.c.l.b16 %v2666
        %v3480 = vunpack.c.h.b16 %v2666
        %v3481 = vunpack.c.l.b16 %v2667
        %v3482 = vunpack.c.l.b16 %v2668
        %v3483 = vunpack.c.h.b16 %v2668
        %v3484 = vunpack.c.l.b16 %v2669
        %v3485 = vunpack.c.l.b16 %v2670
        %v3486 = vunpack.c.h.b16 %v2670
        %v3487 = vunpack.c.l.b16 %v2671
        %v3488 = vunpack.c.l.b16 %v2672
        %v3489 = vunpack.c.h.b16 %v2672
        %v3490 = vunpack.c.l.b16 %v2673
        %v3491 = vunpack.c.l.b16 %v2674
        %v3492 = vunpack.c.h.b16 %v2674
        %v3493 = vunpack.c.l.b16 %v2675
        %v3494 = vunpack.c.l.b16 %v2676
        %v3495 = vunpack.c.h.b16 %v2676
        %v3496 = vunpack.c.l.b16 %v2677
        %v3497 = vunpack.c.l.b16 %v2678
        %v3498 = vunpack.c.h.b16 %v2678
        %v3499 = vunpack.c.l.b16 %v2679
        %v3500 = vunpack.c.l.b16 %v2680
        %v3501 = vunpack.c.h.b16 %v2680
        %v3502 = vunpack.c.l.b16 %v2681
        %v3503 = vunpack.c.l.b16 %v2682
        %v3504 = vunpack.c.h.b16 %v2682
        %v3505 = vunpack.c.l.b16 %v2683
        %v3506 = vunpack.c.l.b16 %v2684
        %v3507 = vunpack.c.h.b16 %v2684
        %v3508 = vunpack.c.l.b16 %v2685
        %v3509 = vunpack.c.l.b16 %v2686
        %v3510 = vunpack.c.h.b16 %v2686
        %v3511 = vunpack.c.l.b16 %v2687
        %v3512 = vunpack.c.l.b16 %v2688
        %v3513 = vunpack.c.h.b16 %v2688
        %v3514 = vunpack.c.l.b16 %v2689
        %v3515 = vunpack.c.l.b16 %v2690
        %v3516 = vunpack.c.h.b16 %v2690
        %v3517 = vunpack.c.l.b16 %v2691
        %v3518 = vunpack.c.l.b16 %v2692
        %v3519 = vunpack.c.h.b16 %v2692
        %v3520 = vunpack.c.l.b16 %v2693
        %v3521 = vunpack.c.l.b16 %v2694
        %v3522 = vunpack.c.h.b16 %v2694
        %v3523 = vunpack.c.l.b16 %v2695
        %v3524 = vunpack.c.l.b16 %v2696
        %v3525 = vunpack.c.h.b16 %v2696
        %v3526 = vunpack.c.l.b16 %v2697
        %v3527 = vunpack.c.l.b16 %v2698
        %v3528 = vunpack.c.h.b16 %v2698
        %v3529 = vunpack.c.l.b16 %v2699
        %v3530 = vunpack.c.l.b16 %v2700
        %v3531 = vunpack.c.h.b16 %v2700
        %v3532 = vunpack.c.l.b16 %v2701
        %v3533 = vunpack.c.l.b16 %v2702
        %v3534 = vunpack.c.h.b16 %v2702
        %v3535 = vunpack.c.l.b16 %v2703
        %v3536 = vunpack.c.l.b16 %v2704
        %v3537 = vunpack.c.h.b16 %v2704
        %v3538 = vunpack.c.l.b16 %v2705
        %v3539 = vunpack.c.l.b16 %v2706
        %v3540 = vunpack.c.h.b16 %v2706
        %v3541 = vunpack.c.l.b16 %v2707
        %v3542 = vunpack.c.l.b16 %v2708
        %v3543 = vunpack.c.h.b16 %v2708
        %v3544 = vunpack.c.l.b16 %v2709
        %v3545 = vunpack.c.l.b16 %v2710
        %v3546 = vunpack.c.h.b16 %v2710
        %v3547 = vunpack.c.l.b16 %v2711
        %v3548 = vunpack.c.l.b16 %v2712
        %v3549 = vunpack.c.h.b16 %v2712
        %v3550 = vunpack.c.l.b16 %v2713
        %v3551 = vunpack.c.l.b16 %v2714
        %v3552 = vunpack.c.h.b16 %v2714
        %v3553 = vunpack.c.l.b16 %v2715
        %v3554 = vunpack.c.l.b16 %v2716
        %v3555 = vunpack.c.h.b16 %v2716
        %v3556 = vunpack.c.l.b16 %v2717
        %v3557 = vunpack.c.l.b16 %v2718
        %v3558 = vunpack.c.h.b16 %v2718
        %v3559 = vunpack.c.l.b16 %v2719
        %v3560 = vunpack.c.l.b16 %v2720
        %v3561 = vunpack.c.h.b16 %v2720
        %v3562 = vunpack.c.l.b16 %v2721
        %v3563 = vunpack.c.l.b16 %v2722
        %v3564 = vunpack.c.h.b16 %v2722
        %v3565 = vunpack.c.l.b16 %v2723
        %v3566 = vunpack.c.l.b16 %v2724
        %v3567 = vunpack.c.h.b16 %v2724
        %v3568 = vunpack.c.l.b16 %v2725
        %v3569 = vunpack.c.l.b16 %v2726
        %v3570 = vunpack.c.h.b16 %v2726
        %v3571 = vunpack.c.l.b16 %v2727
        %v3572 = vunpack.c.l.b16 %v2728
        %v3573 = vunpack.c.h.b16 %v2728
        %v3574 = vunpack.c.l.b16 %v2729
        %v3575 = vunpack.c.l.b16 %v2730
        %v3576 = vunpack.c.h.b16 %v2730
        %v3577 = vunpack.c.l.b16 %v2731
        %v3578 = vunpack.c.l.b16 %v2732
        %v3579 = vunpack.c.h.b16 %v2732
        %v3580 = vunpack.c.l.b16 %v2733
        %v3581 = vunpack.c.l.b16 %v2734
        %v3582 = vunpack.c.h.b16 %v2734
        %v3583 = vunpack.c.l.b16 %v2735
        %v3584 = vunpack.c.l.b16 %v2736
        %v3585 = vunpack.c.h.b16 %v2736
        %v3586 = vunpack.c.l.b16 %v2737
        %v3587 = vunpack.c.l.b16 %v2738
        %v3588 = vunpack.c.h.b16 %v2738
        %v3589 = vunpack.c.l.b16 %v2739
        %v3590 = vunpack.c.l.b16 %v2740
        %v3591 = vunpack.c.h.b16 %v2740
        %v3592 = vunpack.c.l.b16 %v2741
        %v3593 = vunpack.c.l.b16 %v2742
        %v3594 = vunpack.c.h.b16 %v2742
        %v3595 = vunpack.c.l.b16 %v2743
        %v3596 = vunpack.c.l.b16 %v2744
        %v3597 = vunpack.c.h.b16 %v2744
        %v3598 = vunpack.c.l.b16 %v2745
        %v3599 = vunpack.c.l.b16 %v2746
        %v3600 = vunpack.c.h.b16 %v2746
        %v3601 = vunpack.c.l.b16 %v2747
        %v3602 = vunpack.c.l.b16 %v2748
        %v3603 = vunpack.c.h.b16 %v2748
        %v3604 = vunpack.c.l.b16 %v2749
        %v3605 = vunpack.c.l.b16 %v2750
        %v3606 = vunpack.c.h.b16 %v2750
        %v3607 = vunpack.c.l.b16 %v2751
        %v3608 = vunpack.c.l.b16 %v2752
        %v3609 = vunpack.c.h.b16 %v2752
        %v3610 = vunpack.c.l.b16 %v2753
        %v3611 = vunpack.c.l.b16 %v2754
        %v3612 = vunpack.c.h.b16 %v2754
        %v3613 = vunpack.c.l.b16 %v2755
        %v3614 = vunpack.c.l.b16 %v2756
        %v3615 = vunpack.c.h.b16 %v2756
        %v3616 = vunpack.c.l.b16 %v2757
        %v3617 = vunpack.c.l.b16 %v2758
        %v3618 = vunpack.c.h.b16 %v2758
        %v3619 = vunpack.c.l.b16 %v2759
        %v3620 = vunpack.c.l.b16 %v2760
        %v3621 = vunpack.c.h.b16 %v2760
        %v3622 = vunpack.c.l.b16 %v2761
        %v3623 = vunpack.c.l.b16 %v2762
        %v3624 = vunpack.c.h.b16 %v2762
        %v3625 = vunpack.c.l.b16 %v2763
        %v3626 = vunpack.c.l.b16 %v2764
        %v3627 = vunpack.c.h.b16 %v2764
        %v3628 = vunpack.c.l.b16 %v2765
        %v3629 = vunpack.c.l.b16 %v2766
        %v3630 = vunpack.c.h.b16 %v2766
        %v3631 = vunpack.c.l.b16 %v2767
        %v3632 = vunpack.c.l.b16 %v2768
        %v3633 = vunpack.c.h.b16 %v2768
        %v3634 = vunpack.c.l.b16 %v2769
        %v3635 = vunpack.c.l.b16 %v2770
        %v3636 = vunpack.c.h.b16 %v2770
        %v3637 = vunpack.c.l.b16 %v2771
        %v3638 = vunpack.c.l.b16 %v2772
        %v3639 = vunpack.c.h.b16 %v2772
        %v3640 = vunpack.c.l.b16 %v2773
        %v3641 = vunpack.c.l.b16 %v2774
        %v3642 = vunpack.c.h.b16 %v2774
        %v3643 = vunpack.c.l.b16 %v2775
        %v3644 = vunpack.c.l.b16 %v2776
        %v3645 = vunpack.c.h.b16 %v2776
        %v3646 = vunpack.c.l.b16 %v2777
        %v3647 = vunpack.c.l.b16 %v2778
        %v3648 = vunpack.c.h.b16 %v2778
        %v3649 = vunpack.c.l.b16 %v2779
        %v3650 = vunpack.c.l.b16 %v2780
        %v3651 = vunpack.c.h.b16 %v2780
        %v3652 = vunpack.c.l.b16 %v2781
        %v3653 = vunpack.c.l.b16 %v2782
        %v3654 = vunpack.c.h.b16 %v2782
        %v3655 = vunpack.c.l.b16 %v2783
        %v3656 = vunpack.c.l.b16 %v2784
        %v3657 = vunpack.c.h.b16 %v2784
        %v3658 = vunpack.c.l.b16 %v2785
        %v3659 = vunpack.c.l.b16 %v2786
        %v3660 = vunpack.c.h.b16 %v2786
        %v3661 = vunpack.c.l.b16 %v2787
        %v3662 = vunpack.c.l.b16 %v2788
        %v3663 = vunpack.c.h.b16 %v2788
        %v3664 = vunpack.c.l.b16 %v2789
        %v3665 = vunpack.c.l.b16 %v2790
        %v3666 = vunpack.c.h.b16 %v2790
        %v3667 = vunpack.c.l.b16 %v2791
        %v3668 = vunpack.c.l.b16 %v2792
        %v3669 = vunpack.c.h.b16 %v2792
        %v3670 = vunpack.c.l.b16 %v2793
        %v3671 = vunpack.c.l.b16 %v2794
        %v3672 = vunpack.c.h.b16 %v2794
        %v3673 = vunpack.c.l.b16 %v2795
        %v3674 = vunpack.c.l.b16 %v2796
        %v3675 = vunpack.c.h.b16 %v2796
        %v3676 = vunpack.c.l.b16 %v2797
        %v3677 = vunpack.c.l.b16 %v2798
        %v3678 = vunpack.c.h.b16 %v2798
        %v3679 = vunpack.c.l.b16 %v2799
        %v3680 = vunpack.c.l.b16 %v2800
        %v3681 = vunpack.c.h.b16 %v2800
        %v3682 = vunpack.c.l.b16 %v2801
        %v3683 = vunpack.c.l.b16 %v2802
        %v3684 = vunpack.c.h.b16 %v2802
        %v3685 = vunpack.c.l.b16 %v2803
        %v3686 = vunpack.c.l.b16 %v2804
        %v3687 = vunpack.c.h.b16 %v2804
        %v3688 = vunpack.c.l.b16 %v2805
        %v3689 = vunpack.c.l.b16 %v2806
        %v3690 = vunpack.c.h.b16 %v2806
        %v3691 = vunpack.c.l.b16 %v2807
        %v3692 = vunpack.c.l.b16 %v2808
        %v3693 = vunpack.c.h.b16 %v2808
        %v3694 = vunpack.c.l.b16 %v2809
        %v3695 = vunpack.c.l.b16 %v2810
        %v3696 = vunpack.c.h.b16 %v2810
        %v3697 = vunpack.c.l.b16 %v2811
        %v3698 = vunpack.c.l.b16 %v2812
        %v3699 = vunpack.c.h.b16 %v2812
        %v3700 = vunpack.c.l.b16 %v2813
        %v3701 = vunpack.c.l.b16 %v2814
        %v3702 = vunpack.c.h.b16 %v2814
        %v3703 = vunpack.c.l.b16 %v2815
        %v3704 = vunpack.c.l.b16 %v2816
        %v3705 = vunpack.c.h.b16 %v2816
        %v3706 = vunpack.c.l.b16 %v2817
        %v3707 = vunpack.c.l.b16 %v2818
        %v3708 = vunpack.c.h.b16 %v2818
        %v3709 = vunpack.c.l.b16 %v2819
        %v3710 = vunpack.c.l.b16 %v2820
        %v3711 = vunpack.c.h.b16 %v2820
        %v3712 = vunpack.c.l.b16 %v2821
        %v3713 = vunpack.c.l.b16 %v2822
        %v3714 = vunpack.c.h.b16 %v2822
        %v3715 = vunpack.c.l.b16 %v2823
        %v3716 = vunpack.c.l.b16 %v2824
        %v3717 = vunpack.c.h.b16 %v2824
        %v3718 = vunpack.c.l.b16 %v2825
        %v3719 = vunpack.c.l.b16 %v2826
        %v3720 = vunpack.c.h.b16 %v2826
        %v3721 = vunpack.c.l.b16 %v2827
        %v3722 = vunpack.c.l.b16 %v2828
        %v3723 = vunpack.c.h.b16 %v2828
        %v3724 = vunpack.c.l.b16 %v2829
        %v3725 = vunpack.c.l.b16 %v2830
        %v3726 = vunpack.c.h.b16 %v2830
        %v3727 = vunpack.c.l.b16 %v2831
        %v3728 = vunpack.c.l.b16 %v2832
        %v3729 = vunpack.c.h.b16 %v2832
        %v3730 = vunpack.c.l.b16 %v2833
        %v3731 = vunpack.c.l.b16 %v2834
        %v3732 = vunpack.c.h.b16 %v2834
        %v3733 = vunpack.c.l.b16 %v2835
        %v3734 = vunpack.c.l.b16 %v2836
        %v3735 = vunpack.c.h.b16 %v2836
        %v3736 = vunpack.c.l.b16 %v2837
        %v3737 = vunpack.c.l.b16 %v2838
        %v3738 = vunpack.c.h.b16 %v2838
        %v3739 = vunpack.c.l.b16 %v2839
        %v3740 = vunpack.c.l.b16 %v2840
        %v3741 = vunpack.c.h.b16 %v2840
        %v3742 = vunpack.c.l.b16 %v2841
        %v3743 = vunpack.c.l.b16 %v2842
        %v3744 = vunpack.c.h.b16 %v2842
        %v3745 = vunpack.c.l.b16 %v2843
        %v3746 = vunpack.c.l.b16 %v2844
        %v3747 = vunpack.c.h.b16 %v2844
        %v3748 = vunpack.c.l.b16 %v2845
        %v3749 = vunpack.c.l.b16 %v2846
        %v3750 = vunpack.c.h.b16 %v2846
        %v3751 = vunpack.c.l.b16 %v2847
        %v3752 = vunpack.c.l.b16 %v2848
        %v3753 = vunpack.c.h.b16 %v2848
        %v3754 = vunpack.c.l.b16 %v2849
        %v3755 = vunpack.c.l.b16 %v2850
        %v3756 = vunpack.c.h.b16 %v2850
        %v3757 = vunpack.c.l.b16 %v2851
        %v3758 = vunpack.c.l.b16 %v2852
        %v3759 = vunpack.c.h.b16 %v2852
        %v3760 = vunpack.c.l.b16 %v2853
        %v3761 = vunpack.c.l.b16 %v2854
        %v3762 = vunpack.c.h.b16 %v2854
        %v3763 = vunpack.c.l.b16 %v2855
        %v3764 = vunpack.c.l.b16 %v2856
        %v3765 = vunpack.c.h.b16 %v2856
        %v3766 = vunpack.c.l.b16 %v2857
        %v3767 = vunpack.c.l.b16 %v2858
        %v3768 = vunpack.c.h.b16 %v2858
        %v3769 = vunpack.c.l.b16 %v2859
        %v3770 = vunpack.c.l.b16 %v2860
        %v3771 = vunpack.c.h.b16 %v2860
        %v3772 = vunpack.c.l.b16 %v2861
        %v3773 = vunpack.c.l.b16 %v2862
        %v3774 = vunpack.c.h.b16 %v2862
        %v3775 = vunpack.c.l.b16 %v2863
        %v3776 = vunpack.c.l.b16 %v2864
        %v3777 = vunpack.c.h.b16 %v2864
        %v3778 = vunpack.c.l.b16 %v2865
        %v3779 = vunpack.c.l.b16 %v2866
        %v3780 = vunpack.c.h.b16 %v2866
        %v3781 = vunpack.c.l.b16 %v2867
        %v3782 = vunpack.c.l.b16 %v2868
        %v3783 = vunpack.c.h.b16 %v2868
        %v3784 = vunpack.c.l.b16 %v2869
        %v3785 = vunpack.c.l.b16 %v2870
        %v3786 = vunpack.c.h.b16 %v2870
        %v3787 = vunpack.c.l.b16 %v2871
        %v3788 = vunpack.c.l.b16 %v2872
        %v3789 = vunpack.c.h.b16 %v2872
        %v3790 = vunpack.c.l.b16 %v2873
        %v3791 = vunpack.c.l.b16 %v2874
        %v3792 = vunpack.c.h.b16 %v2874
        %v3793 = vunpack.c.l.b16 %v2875
        %v3794 = vunpack.c.l.b16 %v2876
        %v3795 = vunpack.c.h.b16 %v2876
        %v3796 = vunpack.c.l.b16 %v2877
        %v3797 = vunpack.c.l.b16 %v2878
        %v3798 = vunpack.c.h.b16 %v2878
        %v3799 = vunpack.c.l.b16 %v2879
        %v3800 = vunpack.c.l.b16 %v2880
        %v3801 = vunpack.c.h.b16 %v2880
        %v3802 = vunpack.c.l.b16 %v2881
        %v3803 = vunpack.c.l.b16 %v2882
        %v3804 = vunpack.c.h.b16 %v2882
        %v3805 = vunpack.c.l.b16 %v2883
        %v3806 = vunpack.c.l.b16 %v2884
        %v3807 = vunpack.c.h.b16 %v2884
        %v3808 = vunpack.c.l.b16 %v2885
        %v3809 = vunpack.c.l.b16 %v2886
        %v3810 = vunpack.c.h.b16 %v2886
        %v3811 = vunpack.c.l.b16 %v2887
        %v3812 = vunpack.c.l.b16 %v2888
        %v3813 = vunpack.c.h.b16 %v2888
        %v3814 = vunpack.c.l.b16 %v2889
        %v3815 = vunpack.c.l.b16 %v2890
        %v3816 = vunpack.c.h.b16 %v2890
        %v3817 = vunpack.c.l.b16 %v2891
        %v3818 = vunpack.c.l.b16 %v2892
        %v3819 = vunpack.c.h.b16 %v2892
        %v3820 = vunpack.c.l.b16 %v2893
        %v3821 = vunpack.c.l.b16 %v2894
        %v3822 = vunpack.c.h.b16 %v2894
        %v3823 = vunpack.c.l.b16 %v2895
        %v3824 = vunpack.c.l.b16 %v2896
        %v3825 = vunpack.c.h.b16 %v2896
        %v3826 = vunpack.c.l.b16 %v2897
        %v3827 = vunpack.c.l.b16 %v2898
        %v3828 = vunpack.c.h.b16 %v2898
        %v3829 = vunpack.c.l.b16 %v2899
        %v3830 = vunpack.c.l.b16 %v2900
        %v3831 = vunpack.c.h.b16 %v2900
        %v3832 = vunpack.c.l.b16 %v2901
        %v3833 = vunpack.c.l.b16 %v2902
        %v3834 = vunpack.c.h.b16 %v2902
        %v3835 = vunpack.c.l.b16 %v2903
        %v3836 = vunpack.c.l.b16 %v2904
        %v3837 = vunpack.c.h.b16 %v2904
        %v3838 = vunpack.c.l.b16 %v2905
        %v3839 = vunpack.c.l.b16 %v2906
        %v3840 = vunpack.c.h.b16 %v2906
        %v3841 = vunpack.c.l.b16 %v2907
        %v3842 = vunpack.c.l.b16 %v2908
        %v3843 = vunpack.c.h.b16 %v2908
        %v3844 = vunpack.c.l.b16 %v2909
        %v3845 = vunpack.c.l.b16 %v2910
        %v3846 = vunpack.c.h.b16 %v2910
        %v3847 = vunpack.c.l.b16 %v2911
        %v3848 = vunpack.c.l.b16 %v2912
        %v3849 = vunpack.c.h.b16 %v2912
        %v3850 = vunpack.c.l.b16 %v2913
        %v3851 = vunpack.c.l.b16 %v2914
        %v3852 = vunpack.c.h.b16 %v2914
        %v3853 = vunpack.c.l.b16 %v2915
        %v3854 = vunpack.c.l.b16 %v2916
        %v3855 = vunpack.c.h.b16 %v2916
        %v3856 = vunpack.c.l.b16 %v2917
        %v3857 = vunpack.c.l.b16 %v2918
        %v3858 = vunpack.c.h.b16 %v2918
        %v3859 = vunpack.c.l.b16 %v2919
        %v3860 = vunpack.c.l.b16 %v2920
        %v3861 = vunpack.c.h.b16 %v2920
        %v3862 = vunpack.c.l.b16 %v2921
        %v3863 = vunpack.c.l.b16 %v2922
        %v3864 = vunpack.c.h.b16 %v2922
        %v3865 = vunpack.c.l.b16 %v2923
        %v3866 = vunpack.c.l.b16 %v2924
        %v3867 = vunpack.c.h.b16 %v2924
        %v3868 = vunpack.c.l.b16 %v2925
        %v3869 = vunpack.c.l.b16 %v2926
        %v3870 = vunpack.c.h.b16 %v2926
        %v3871 = vunpack.c.l.b16 %v2927
        %v3872 = vunpack.c.l.b16 %v2928
        %v3873 = vunpack.c.h.b16 %v2928
        %v3874 = vunpack.c.l.b16 %v2929
        %v3875 = vunpack.c.l.b16 %v2930
        %v3876 = vunpack.c.h.b16 %v2930
        %v3877 = vunpack.c.l.b16 %v2931
        %v3878 = vunpack.c.l.b16 %v2932
        %v3879 = vunpack.c.h.b16 %v2932
        %v3880 = vunpack.c.l.b16 %v2933
        %v3881 = vunpack.c.l.b16 %v2934
        %v3882 = vunpack.c.h.b16 %v2934
        %v3883 = vunpack.c.l.b16 %v2935
        %v3884 = vunpack.c.l.b16 %v2936
        %v3885 = vunpack.c.h.b16 %v2936
        %v3886 = vunpack.c.l.b16 %v2937
        %v3887 = vunpack.c.l.b16 %v2938
        %v3888 = vunpack.c.h.b16 %v2938
        %v3889 = vunpack.c.l.b16 %v2939
        %v3890 = vunpack.c.l.b16 %v2940
        %v3891 = vunpack.c.h.b16 %v2940
        %v3892 = vunpack.c.l.b16 %v2941
        %v3893 = vunpack.c.l.b16 %v2942
        %v3894 = vunpack.c.h.b16 %v2942
        %v3895 = vunpack.c.l.b16 %v2943
        %v3896 = vunpack.c.l.b16 %v2944
        %v3897 = vunpack.c.h.b16 %v2944
        %v3898 = vunpack.c.l.b16 %v2945
        %v3899 = vunpack.c.l.b16 %v2946
        %v3900 = vunpack.c.h.b16 %v2946
        %v3901 = vunpack.c.l.b16 %v2947
        %v3902 = vunpack.c.l.b16 %v2948
        %v3903 = vunpack.c.h.b16 %v2948
        %v3904 = vunpack.c.l.b16 %v2949
        %v3905 = vunpack.c.l.b16 %v2950
        %v3906 = vunpack.c.h.b16 %v2950
        %v3907 = vunpack.c.l.b16 %v2951
        %v3908 = vunpack.c.l.b16 %v2952
        %v3909 = vunpack.c.h.b16 %v2952
        %v3910 = vunpack.c.l.b16 %v2953
        %v3911 = vunpack.c.l.b16 %v2954
        %v3912 = vunpack.c.h.b16 %v2954
        %v3913 = vunpack.c.l.b16 %v2955
        %v3914 = vunpack.c.l.b16 %v2956
        %v3915 = vunpack.c.h.b16 %v2956
        %v3916 = vunpack.c.l.b16 %v2957
        %v3917 = vunpack.c.l.b16 %v2958
        %v3918 = vunpack.c.h.b16 %v2958
        %v3919 = vunpack.c.l.b16 %v2959
        %v3920 = vunpack.c.l.b16 %v2960
        %v3921 = vunpack.c.h.b16 %v2960
        %v3922 = vunpack.c.l.b16 %v2961
        %v3923 = vunpack.c.l.b16 %v2962
        %v3924 = vunpack.c.h.b16 %v2962
        %v3925 = vunpack.c.l.b16 %v2963
        %v3926 = vunpack.c.l.b16 %v2964
        %v3927 = vunpack.c.h.b16 %v2964
        %v3928 = vunpack.c.l.b16 %v2965
        %v3929 = vunpack.c.l.b16 %v2966
        %v3930 = vunpack.c.h.b16 %v2966
        %v3931 = vunpack.c.l.b16 %v2967
        %v3932 = vunpack.c.l.b16 %v2968
        %v3933 = vunpack.c.h.b16 %v2968
        %v3934 = vunpack.c.l.b16 %v2969
        %v3935 = vunpack.c.l.b16 %v2970
        %v3936 = vunpack.c.h.b16 %v2970
        %v3937 = vunpack.c.l.b16 %v2971
        %v3938 = vunpack.c.l.b16 %v2972
        %v3939 = vunpack.c.h.b16 %v2972
        %v3940 = vunpack.c.l.b16 %v2973
        %v3941 = vunpack.c.l.b16 %v2974
        %v3942 = vunpack.c.h.b16 %v2974
        %v3943 = vunpack.c.l.b16 %v2975
        %v3944 = vunpack.c.l.b16 %v2976
        %v3945 = vunpack.c.h.b16 %v2976
        %v3946 = vunpack.c.l.b16 %v2977
        %v3947 = vunpack.c.l.b16 %v2978
        %v3948 = vunpack.c.h.b16 %v2978
        %v3949 = vunpack.c.l.b16 %v2979
        %v3950 = vunpack.c.l.b16 %v2980
        %v3951 = vunpack.c.h.b16 %v2980
        %v3952 = vunpack.c.l.b16 %v2981
        %v3953 = vunpack.c.l.b16 %v2982
        %v3954 = vunpack.c.h.b16 %v2982
        %v3955 = vunpack.c.l.b16 %v2983
        %v3956 = vunpack.c.l.b16 %v2984
        %v3957 = vunpack.c.h.b16 %v2984
        %v3958 = vunpack.c.l.b16 %v2985
        %v3959 = vunpack.c.l.b16 %v2986
        %v3960 = vunpack.c.h.b16 %v2986
        %v3961 = vunpack.c.l.b16 %v2987
        %v3962 = vunpack.c.l.b16 %v2988
        %v3963 = vunpack.c.h.b16 %v2988
        %v3964 = vunpack.c.l.b16 %v2989
        %v3965 = vunpack.c.l.b16 %v2990
        %v3966 = vunpack.c.h.b16 %v2990
        %v3967 = vunpack.c.l.b16 %v2991
        %v3968 = vunpack.c.l.b16 %v2992
        %v3969 = vunpack.c.h.b16 %v2992
        %v3970 = vunpack.c.l.b16 %v2993
        %v3971 = vpack.c.b16 %v3398, %v3395
        %v3972 = vpack.c.b16 %v3399, %v3396
        %v3973 = vpack.c.b16 %v3400, %v3397
        %v3974 = vpack.c.b16 %v3404, %v3401
        %v3975 = vpack.c.b16 %v3405, %v3402
        %v3976 = vpack.c.b16 %v3406, %v3403
        %v3977 = vpack.c.b16 %v3410, %v3407
        %v3978 = vpack.c.b16 %v3411, %v3408
        %v3979 = vpack.c.b16 %v3412, %v3409
        %v3980 = vpack.c.b16 %v3416, %v3413
        %v3981 = vpack.c.b16 %v3417, %v3414
        %v3982 = vpack.c.b16 %v3418, %v3415
        %v3983 = vpack.c.b16 %v3422, %v3419
        %v3984 = vpack.c.b16 %v3423, %v3420
        %v3985 = vpack.c.b16 %v3424, %v3421
        %v3986 = vpack.c.b16 %v3428, %v3425
        %v3987 = vpack.c.b16 %v3429, %v3426
        %v3988 = vpack.c.b16 %v3430, %v3427
        %v3989 = vpack.c.b16 %v3434, %v3431
        %v3990 = vpack.c.b16 %v3435, %v3432
        %v3991 = vpack.c.b16 %v3436, %v3433
        %v3992 = vpack.c.b16 %v3440, %v3437
        %v3993 = vpack.c.b16 %v3441, %v3438
        %v3994 = vpack.c.b16 %v3442, %v3439
        %v3995 = vpack.c.b16 %v3446, %v3443
        %v3996 = vpack.c.b16 %v3447, %v3444
        %v3997 = vpack.c.b16 %v3448, %v3445
        %v3998 = vpack.c.b16 %v3452, %v3449
        %v3999 = vpack.c.b16 %v3453, %v3450
        %v4000 = vpack.c.b16 %v3454, %v3451
        %v4001 = vpack.c.b16 %v3458, %v3455
        %v4002 = vpack.c.b16 %v3459, %v3456
        %v4003 = vpack.c.b16 %v3460, %v3457
        %v4004 = vpack.c.b16 %v3464, %v3461
        %v4005 = vpack.c.b16 %v3465, %v3462
        %v4006 = vpack.c.b16 %v3466, %v3463
        %v4007 = vpack.c.b16 %v3470, %v3467
        %v4008 = vpack.c.b16 %v3471, %v3468
        %v4009 = vpack.c.b16 %v3472, %v3469
        %v4010 = vpack.c.b16 %v3476, %v3473
        %v4011 = vpack.c.b16 %v3477, %v3474
        %v4012 = vpack.c.b16 %v3478, %v3475
        %v4013 = vpack.c.b16 %v3482, %v3479
        %v4014 = vpack.c.b16 %v3483, %v3480
        %v4015 = vpack.c.b16 %v3484, %v3481
        %v4016 = vpack.c.b16 %v3488, %v3485
        %v4017 = vpack.c.b16 %v3489, %v3486
        %v4018 = vpack.c.b16 %v3490, %v3487
        %v4019 = vpack.c.b16 %v3494, %v3491
        %v4020 = vpack.c.b16 %v3495, %v3492
        %v4021 = vpack.c.b16 %v3496, %v3493
        %v4022 = vpack.c.b16 %v3500, %v3497
        %v4023 = vpack.c.b16 %v3501, %v3498
        %v4024 = vpack.c.b16 %v3502, %v3499
        %v4025 = vpack.c.b16 %v3506, %v3503
        %v4026 = vpack.c.b16 %v3507, %v3504
        %v4027 = vpack.c.b16 %v3508, %v3505
        %v4028 = vpack.c.b16 %v3512, %v3509
        %v4029 = vpack.c.b16 %v3513, %v3510
        %v4030 = vpack.c.b16 %v3514, %v3511
        %v4031 = vpack.c.b16 %v3518, %v3515
        %v4032 = vpack.c.b16 %v3519, %v3516
        %v4033 = vpack.c.b16 %v3520, %v3517
        %v4034 = vpack.c.b16 %v3524, %v3521
        %v4035 = vpack.c.b16 %v3525, %v3522
        %v4036 = vpack.c.b16 %v3526, %v3523
        %v4037 = vpack.c.b16 %v3530, %v3527
        %v4038 = vpack.c.b16 %v3531, %v3528
        %v4039 = vpack.c.b16 %v3532, %v3529
        %v4040 = vpack.c.b16 %v3536, %v3533
        %v4041 = vpack.c.b16 %v3537, %v3534
        %v4042 = vpack.c.b16 %v3538, %v3535
        %v4043 = vpack.c.b16 %v3542, %v3539
        %v4044 = vpack.c.b16 %v3543, %v3540
        %v4045 = vpack.c.b16 %v3544, %v3541
        %v4046 = vpack.c.b16 %v3548, %v3545
        %v4047 = vpack.c.b16 %v3549, %v3546
        %v4048 = vpack.c.b16 %v3550, %v3547
        %v4049 = vpack.c.b16 %v3554, %v3551
        %v4050 = vpack.c.b16 %v3555, %v3552
        %v4051 = vpack.c.b16 %v3556, %v3553
        %v4052 = vpack.c.b16 %v3560, %v3557
        %v4053 = vpack.c.b16 %v3561, %v3558
        %v4054 = vpack.c.b16 %v3562, %v3559
        %v4055 = vpack.c.b16 %v3566, %v3563
        %v4056 = vpack.c.b16 %v3567, %v3564
        %v4057 = vpack.c.b16 %v3568, %v3565
        %v4058 = vpack.c.b16 %v3572, %v3569
        %v4059 = vpack.c.b16 %v3573, %v3570
        %v4060 = vpack.c.b16 %v3574, %v3571
        %v4061 = vpack.c.b16 %v3578, %v3575
        %v4062 = vpack.c.b16 %v3579, %v3576
        %v4063 = vpack.c.b16 %v3580, %v3577
        %v4064 = vpack.c.b16 %v3584, %v3581
        %v4065 = vpack.c.b16 %v3585, %v3582
        %v4066 = vpack.c.b16 %v3586, %v3583
        %v4067 = vpack.c.b16 %v3590, %v3587
        %v4068 = vpack.c.b16 %v3591, %v3588
        %v4069 = vpack.c.b16 %v3592, %v3589
        %v4070 = vpack.c.b16 %v3596, %v3593
        %v4071 = vpack.c.b16 %v3597, %v3594
        %v4072 = vpack.c.b16 %v3598, %v3595
        %v4073 = vpack.c.b16 %v3602, %v3599
        %v4074 = vpack.c.b16 %v3603, %v3600
        %v4075 = vpack.c.b16 %v3604, %v3601
        %v4076 = vpack.c.b16 %v3608, %v3605
        %v4077 = vpack.c.b16 %v3609, %v3606
        %v4078 = vpack.c.b16 %v3610, %v3607
        %v4079 = vpack.c.b16 %v3614, %v3611
        %v4080 = vpack.c.b16 %v3615, %v3612
        %v4081 = vpack.c.b16 %v3616, %v3613
        %v4082 = vpack.c.b16 %v3620, %v3617
        %v4083 = vpack.c.b16 %v3621, %v3618
        %v4084 = vpack.c.b16 %v3622, %v3619
        %v4085 = vpack.c.b16 %v3626, %v3623
        %v4086 = vpack.c.b16 %v3627, %v3624
        %v4087 = vpack.c.b16 %v3628, %v3625
        %v4088 = vpack.c.b16 %v3632, %v3629
        %v4089 = vpack.c.b16 %v3633, %v3630
        %v4090 = vpack.c.b16 %v3634, %v3631
        %v4091 = vpack.c.b16 %v3638, %v3635
        %v4092 = vpack.c.b16 %v3639, %v3636
        %v4093 = vpack.c.b16 %v3640, %v3637
        %v4094 = vpack.c.b16 %v3644, %v3641
        %v4095 = vpack.c.b16 %v3645, %v3642
        %v4096 = vpack.c.b16 %v3646, %v3643
        %v4097 = vpack.c.b16 %v3650, %v3647
        %v4098 = vpack.c.b16 %v3651, %v3648
        %v4099 = vpack.c.b16 %v3652, %v3649
        %v4100 = vpack.c.b16 %v3656, %v3653
        %v4101 = vpack.c.b16 %v3657, %v3654
        %v4102 = vpack.c.b16 %v3658, %v3655
        %v4103 = vpack.c.b16 %v3662, %v3659
        %v4104 = vpack.c.b16 %v3663, %v3660
        %v4105 = vpack.c.b16 %v3664, %v3661
        %v4106 = vpack.c.b16 %v3668, %v3665
        %v4107 = vpack.c.b16 %v3669, %v3666
        %v4108 = vpack.c.b16 %v3670, %v3667
        %v4109 = vpack.c.b16 %v3674, %v3671
        %v4110 = vpack.c.b16 %v3675, %v3672
        %v4111 = vpack.c.b16 %v3676, %v3673
        %v4112 = vpack.c.b16 %v3680, %v3677
        %v4113 = vpack.c.b16 %v3681, %v3678
        %v4114 = vpack.c.b16 %v3682, %v3679
        %v4115 = vpack.c.b16 %v3686, %v3683
        %v4116 = vpack.c.b16 %v3687, %v3684
        %v4117 = vpack.c.b16 %v3688, %v3685
        %v4118 = vpack.c.b16 %v3692, %v3689
        %v4119 = vpack.c.b16 %v3693, %v3690
        %v4120 = vpack.c.b16 %v3694, %v3691
        %v4121 = vpack.c.b16 %v3698, %v3695
        %v4122 = vpack.c.b16 %v3699, %v3696
        %v4123 = vpack.c.b16 %v3700, %v3697
        %v4124 = vpack.c.b16 %v3704, %v3701
        %v4125 = vpack.c.b16 %v3705, %v3702
        %v4126 = vpack.c.b16 %v3706, %v3703
        %v4127 = vpack.c.b16 %v3710, %v3707
        %v4128 = vpack.c.b16 %v3711, %v3708
        %v4129 = vpack.c.b16 %v3712, %v3709
        %v4130 = vpack.c.b16 %v3716, %v3713
        %v4131 = vpack.c.b16 %v3717, %v3714
        %v4132 = vpack.c.b16 %v3718, %v3715
        %v4133 = vpack.c.b16 %v3722, %v3719
        %v4134 = vpack.c.b16 %v3723, %v3720
        %v4135 = vpack.c.b16 %v3724, %v3721
        %v4136 = vpack.c.b16 %v3728, %v3725
        %v4137 = vpack.c.b16 %v3729, %v3726
        %v4138 = vpack.c.b16 %v3730, %v3727
        %v4139 = vpack.c.b16 %v3734, %v3731
        %v4140 = vpack.c.b16 %v3735, %v3732
        %v4141 = vpack.c.b16 %v3736, %v3733
        %v4142 = vpack.c.b16 %v3740, %v3737
        %v4143 = vpack.c.b16 %v3741, %v3738
        %v4144 = vpack.c.b16 %v3742, %v3739
        %v4145 = vpack.c.b16 %v3746, %v3743
        %v4146 = vpack.c.b16 %v3747, %v3744
        %v4147 = vpack.c.b16 %v3748, %v3745
        %v4148 = vpack.c.b16 %v3752, %v3749
        %v4149 = vpack.c.b16 %v3753, %v3750
        %v4150 = vpack.c.b16 %v3754, %v3751
        %v4151 = vpack.c.b16 %v3758, %v3755
        %v4152 = vpack.c.b16 %v3759, %v3756
        %v4153 = vpack.c.b16 %v3760, %v3757
        %v4154 = vpack.c.b16 %v3764, %v3761
        %v4155 = vpack.c.b16 %v3765, %v3762
        %v4156 = vpack.c.b16 %v3766, %v3763
        %v4157 = vpack.c.b16 %v3770, %v3767
        %v4158 = vpack.c.b16 %v3771, %v3768
        %v4159 = vpack.c.b16 %v3772, %v3769
        %v4160 = vpack.c.b16 %v3776, %v3773
        %v4161 = vpack.c.b16 %v3777, %v3774
        %v4162 = vpack.c.b16 %v3778, %v3775
        %v4163 = vpack.c.b16 %v3782, %v3779
        %v4164 = vpack.c.b16 %v3783, %v3780
        %v4165 = vpack.c.b16 %v3784, %v3781
        %v4166 = vpack.c.b16 %v3788, %v3785
        %v4167 = vpack.c.b16 %v3789, %v3786
        %v4168 = vpack.c.b16 %v3790, %v3787
        %v4169 = vpack.c.b16 %v3794, %v3791
        %v4170 = vpack.c.b16 %v3795, %v3792
        %v4171 = vpack.c.b16 %v3796, %v3793
        %v4172 = vpack.c.b16 %v3800, %v3797
        %v4173 = vpack.c.b16 %v3801, %v3798
        %v4174 = vpack.c.b16 %v3802, %v3799
        %v4175 = vpack.c.b16 %v3806, %v3803
        %v4176 = vpack.c.b16 %v3807, %v3804
        %v4177 = vpack.c.b16 %v3808, %v3805
        %v4178 = vpack.c.b16 %v3812, %v3809
        %v4179 = vpack.c.b16 %v3813, %v3810
        %v4180 = vpack.c.b16 %v3814, %v3811
        %v4181 = vpack.c.b16 %v3818, %v3815
        %v4182 = vpack.c.b16 %v3819, %v3816
        %v4183 = vpack.c.b16 %v3820, %v3817
        %v4184 = vpack.c.b16 %v3824, %v3821
        %v4185 = vpack.c.b16 %v3825, %v3822
        %v4186 = vpack.c.b16 %v3826, %v3823
        %v4187 = vpack.c.b16 %v3830, %v3827
        %v4188 = vpack.c.b16 %v3831, %v3828
        %v4189 = vpack.c.b16 %v3832, %v3829
        %v4190 = vpack.c.b16 %v3836, %v3833
        %v4191 = vpack.c.b16 %v3837, %v3834
        %v4192 = vpack.c.b16 %v3838, %v3835
        %v4193 = vpack.c.b16 %v3842, %v3839
        %v4194 = vpack.c.b16 %v3843, %v3840
        %v4195 = vpack.c.b16 %v3844, %v3841
        %v4196 = vpack.c.b16 %v3848, %v3845
        %v4197 = vpack.c.b16 %v3849, %v3846
        %v4198 = vpack.c.b16 %v3850, %v3847
        %v4199 = vpack.c.b16 %v3854, %v3851
        %v4200 = vpack.c.b16 %v3855, %v3852
        %v4201 = vpack.c.b16 %v3856, %v3853
        %v4202 = vpack.c.b16 %v3860, %v3857
        %v4203 = vpack.c.b16 %v3861, %v3858
        %v4204 = vpack.c.b16 %v3862, %v3859
        %v4205 = vpack.c.b16 %v3866, %v3863
        %v4206 = vpack.c.b16 %v3867, %v3864
        %v4207 = vpack.c.b16 %v3868, %v3865
        %v4208 = vpack.c.b16 %v3872, %v3869
        %v4209 = vpack.c.b16 %v3873, %v3870
        %v4210 = vpack.c.b16 %v3874, %v3871
        %v4211 = vpack.c.b16 %v3878, %v3875
        %v4212 = vpack.c.b16 %v3879, %v3876
        %v4213 = vpack.c.b16 %v3880, %v3877
        %v4214 = vpack.c.b16 %v3884, %v3881
        %v4215 = vpack.c.b16 %v3885, %v3882
        %v4216 = vpack.c.b16 %v3886, %v3883
        %v4217 = vpack.c.b16 %v3890, %v3887
        %v4218 = vpack.c.b16 %v3891, %v3888
        %v4219 = vpack.c.b16 %v3892, %v3889
        %v4220 = vpack.c.b16 %v3896, %v3893
        %v4221 = vpack.c.b16 %v3897, %v3894
        %v4222 = vpack.c.b16 %v3898, %v3895
        %v4223 = vpack.c.b16 %v3902, %v3899
        %v4224 = vpack.c.b16 %v3903, %v3900
        %v4225 = vpack.c.b16 %v3904, %v3901
        %v4226 = vpack.c.b16 %v3908, %v3905
        %v4227 = vpack.c.b16 %v3909, %v3906
        %v4228 = vpack.c.b16 %v3910, %v3907
        %v4229 = vpack.c.b16 %v3914, %v3911
        %v4230 = vpack.c.b16 %v3915, %v3912
        %v4231 = vpack.c.b16 %v3916, %v3913
        %v4232 = vpack.c.b16 %v3920, %v3917
        %v4233 = vpack.c.b16 %v3921, %v3918
        %v4234 = vpack.c.b16 %v3922, %v3919
        %v4235 = vpack.c.b16 %v3926, %v3923
        %v4236 = vpack.c.b16 %v3927, %v3924
        %v4237 = vpack.c.b16 %v3928, %v3925
        %v4238 = vpack.c.b16 %v3932, %v3929
        %v4239 = vpack.c.b16 %v3933, %v3930
        %v4240 = vpack.c.b16 %v3934, %v3931
        %v4241 = vpack.c.b16 %v3938, %v3935
        %v4242 = vpack.c.b16 %v3939, %v3936
        %v4243 = vpack.c.b16 %v3940, %v3937
        %v4244 = vpack.c.b16 %v3944, %v3941
        %v4245 = vpack.c.b16 %v3945, %v3942
        %v4246 = vpack.c.b16 %v3946, %v3943
        %v4247 = vpack.c.b16 %v3950, %v3947
        %v4248 = vpack.c.b16 %v3951, %v3948
        %v4249 = vpack.c.b16 %v3952, %v3949
        %v4250 = vpack.c.b16 %v3956, %v3953
        %v4251 = vpack.c.b16 %v3957, %v3954
        %v4252 = vpack.c.b16 %v3958, %v3955
        %v4253 = vpack.c.b16 %v3962, %v3959
        %v4254 = vpack.c.b16 %v3963, %v3960
        %v4255 = vpack.c.b16 %v3964, %v3961
        %v4256 = vpack.c.b16 %v3968, %v3965
        %v4257 = vpack.c.b16 %v3969, %v3966
        %v4258 = vpack.c.b16 %v3970, %v3967
        %4547 = vmatprep.subr.bf16.mxu0 %v3993
        %4548 = vmatpush1.bf16.msra.mxu0 %v3992
        %4549 = vmatprep.subr.bf16.mxu0 %v3990
        %4550 = vmatpush1.bf16.msra.mxu0 %v3989
        %4551 = vmatprep.subr.bf16.mxu0 %v3987
        %4552 = vmatpush1.bf16.msra.mxu0 %v3986
        %4553 = vmatprep.subr.bf16.mxu0 %v3984
        %4554 = vmatpush1.bf16.msra.mxu0 %v3983
        %4555 = vmatprep.subr.bf16.mxu0 %v3981
        %4556 = vmatpush1.bf16.msra.mxu0 %v3980
        %4557 = vmatprep.subr.bf16.mxu0 %v3978
        %4558 = vmatpush1.bf16.msra.mxu0 %v3977
        %4559 = vmatprep.subr.bf16.mxu0 %v3975
        %4560 = vmatpush1.bf16.msra.mxu0 %v3974
        %4561 = vmatprep.subr.bf16.mxu0 %v3972
        %4562 = vmatpush1.bf16.msra.mxu0 %v3971
        %4563 = vmatprep.subr.bf16.mxu0 %v4017
        %4564 = vmatpush2.bf16.msra.mxu0 %v4016
        %4565 = vmatprep.subr.bf16.mxu0 %v4014
        %4566 = vmatpush2.bf16.msra.mxu0 %v4013
        %4567 = vmatprep.subr.bf16.mxu0 %v4011
        %4568 = vmatpush2.bf16.msra.mxu0 %v4010
        %4569 = vmatprep.subr.bf16.mxu0 %v4008
        %4570 = vmatpush2.bf16.msra.mxu0 %v4007
        %4571 = vmatprep.subr.bf16.mxu0 %v4005
        %4572 = vmatpush2.bf16.msra.mxu0 %v4004
        %4573 = vmatprep.subr.bf16.mxu0 %v4002
        %4574 = vmatpush2.bf16.msra.mxu0 %v4001
        %4575 = vmatprep.subr.bf16.mxu0 %v3999
        %4576 = vmatpush2.bf16.msra.mxu0 %v3998
        %4577 = vmatprep.subr.bf16.mxu0 %v3996
        %4578 = vmatpush2.bf16.msra.mxu0 %v3995
        %4579 = vmatprep.mubr.bf16.mxu0 %v2599
        %4580 = vmatmul.mubr.bf16.gmra.mxu0 %v2598
        %v4581 = vpop.f32.mrf.mxu0
        %v4582 = vadd.f32 %v2999, %v4581
        %v4583 = vpop.f32.mrf.mxu0
        %v4584 = vadd.f32 %v3003, %v4583
        %v4585 = vpop.f32.mrf.mxu0
        %v4586 = vpop.f32.mrf.mxu0
        %4587 = vdwg.mxu0
        %4588 = vmatprep.subr.bf16.mxu0 %v4041
        %4589 = vmatpush1.bf16.msra.mxu0 %v4040
        %4590 = vmatprep.subr.bf16.mxu0 %v4038
        %4591 = vmatpush1.bf16.msra.mxu0 %v4037
        %4592 = vmatprep.subr.bf16.mxu0 %v4035
        %4593 = vmatpush1.bf16.msra.mxu0 %v4034
        %4594 = vmatprep.subr.bf16.mxu0 %v4032
        %4595 = vmatpush1.bf16.msra.mxu0 %v4031
        %4596 = vmatprep.subr.bf16.mxu0 %v4029
        %4597 = vmatpush1.bf16.msra.mxu0 %v4028
        %4598 = vmatprep.subr.bf16.mxu0 %v4026
        %4599 = vmatpush1.bf16.msra.mxu0 %v4025
        %4600 = vmatprep.subr.bf16.mxu0 %v4023
        %4601 = vmatpush1.bf16.msra.mxu0 %v4022
        %4602 = vmatprep.subr.bf16.mxu0 %v4020
        %4603 = vmatpush1.bf16.msra.mxu0 %v4019
        %4604 = vmatprep.subr.bf16.mxu0 %v4065
        %4605 = vmatpush2.bf16.msra.mxu0 %v4064
        %4606 = vmatprep.subr.bf16.mxu0 %v4062
        %4607 = vmatpush2.bf16.msra.mxu0 %v4061
        %4608 = vmatprep.subr.bf16.mxu0 %v4059
        %4609 = vmatpush2.bf16.msra.mxu0 %v4058
        %4610 = vmatprep.subr.bf16.mxu0 %v4056
        %4611 = vmatpush2.bf16.msra.mxu0 %v4055
        %4612 = vmatprep.subr.bf16.mxu0 %v4053
        %4613 = vmatpush2.bf16.msra.mxu0 %v4052
        %4614 = vmatprep.subr.bf16.mxu0 %v4050
        %4615 = vmatpush2.bf16.msra.mxu0 %v4049
        %4616 = vmatprep.subr.bf16.mxu0 %v4047
        %4617 = vmatpush2.bf16.msra.mxu0 %v4046
        %4618 = vmatprep.subr.bf16.mxu0 %v4044
        %4619 = vmatpush2.bf16.msra.mxu0 %v4043
        %4620 = vmatprep.mubr.bf16.mxu0 %v2601
        %4621 = vmatmul.mubr.bf16.gmra.mxu0 %v2600
        %v4622 = vpop.f32.mrf.mxu0
        %v4623 = vadd.f32 %v4582, %v4622
        %v4624 = vpop.f32.mrf.mxu0
        %v4625 = vadd.f32 %v4584, %v4624
        %v4626 = vpop.f32.mrf.mxu0
        %v4627 = vpop.f32.mrf.mxu0
        %4628 = vdwg.mxu0
        %4629 = vmatprep.subr.bf16.mxu0 %v4089
        %4630 = vmatpush1.bf16.msra.mxu0 %v4088
        %4631 = vmatprep.subr.bf16.mxu0 %v4086
        %4632 = vmatpush1.bf16.msra.mxu0 %v4085
        %4633 = vmatprep.subr.bf16.mxu0 %v4083
        %4634 = vmatpush1.bf16.msra.mxu0 %v4082
        %4635 = vmatprep.subr.bf16.mxu0 %v4080
        %4636 = vmatpush1.bf16.msra.mxu0 %v4079
        %4637 = vmatprep.subr.bf16.mxu0 %v4077
        %4638 = vmatpush1.bf16.msra.mxu0 %v4076
        %4639 = vmatprep.subr.bf16.mxu0 %v4074
        %4640 = vmatpush1.bf16.msra.mxu0 %v4073
        %4641 = vmatprep.subr.bf16.mxu0 %v4071
        %4642 = vmatpush1.bf16.msra.mxu0 %v4070
        %4643 = vmatprep.subr.bf16.mxu0 %v4068
        %4644 = vmatpush1.bf16.msra.mxu0 %v4067
        %4645 = vmatprep.subr.bf16.mxu0 %v4113
        %4646 = vmatpush2.bf16.msra.mxu0 %v4112
        %4647 = vmatprep.subr.bf16.mxu0 %v4110
        %4648 = vmatpush2.bf16.msra.mxu0 %v4109
        %4649 = vmatprep.subr.bf16.mxu0 %v4107
        %4650 = vmatpush2.bf16.msra.mxu0 %v4106
        %4651 = vmatprep.subr.bf16.mxu0 %v4104
        %4652 = vmatpush2.bf16.msra.mxu0 %v4103
        %4653 = vmatprep.subr.bf16.mxu0 %v4101
        %4654 = vmatpush2.bf16.msra.mxu0 %v4100
        %4655 = vmatprep.subr.bf16.mxu0 %v4098
        %4656 = vmatpush2.bf16.msra.mxu0 %v4097
        %4657 = vmatprep.subr.bf16.mxu0 %v4095
        %4658 = vmatpush2.bf16.msra.mxu0 %v4094
        %4659 = vmatprep.subr.bf16.mxu0 %v4092
        %4660 = vmatpush2.bf16.msra.mxu0 %v4091
        %4661 = vmatprep.mubr.bf16.mxu0 %v2603
        %4662 = vmatmul.mubr.bf16.gmra.mxu0 %v2602
        %v4663 = vpop.f32.mrf.mxu0
        %v4664 = vadd.f32 %v4623, %v4663
        %v4665 = vpop.f32.mrf.mxu0
        %v4666 = vadd.f32 %v4625, %v4665
        %v4667 = vpop.f32.mrf.mxu0
        %v4668 = vpop.f32.mrf.mxu0
        %4669 = vdwg.mxu0
        %4670 = vmatprep.subr.bf16.mxu0 %v4137
        %4671 = vmatpush1.bf16.msra.mxu0 %v4136
        %4672 = vmatprep.subr.bf16.mxu0 %v4134
        %4673 = vmatpush1.bf16.msra.mxu0 %v4133
        %4674 = vmatprep.subr.bf16.mxu0 %v4131
        %4675 = vmatpush1.bf16.msra.mxu0 %v4130
        %4676 = vmatprep.subr.bf16.mxu0 %v4128
        %4677 = vmatpush1.bf16.msra.mxu0 %v4127
        %4678 = vmatprep.subr.bf16.mxu0 %v4125
        %4679 = vmatpush1.bf16.msra.mxu0 %v4124
        %4680 = vmatprep.subr.bf16.mxu0 %v4122
        %4681 = vmatpush1.bf16.msra.mxu0 %v4121
        %4682 = vmatprep.subr.bf16.mxu0 %v4119
        %4683 = vmatpush1.bf16.msra.mxu0 %v4118
        %4684 = vmatprep.subr.bf16.mxu0 %v4116
        %4685 = vmatpush1.bf16.msra.mxu0 %v4115
        %4686 = vmatprep.subr.bf16.mxu0 %v4161
        %4687 = vmatpush2.bf16.msra.mxu0 %v4160
        %4688 = vmatprep.subr.bf16.mxu0 %v4158
        %4689 = vmatpush2.bf16.msra.mxu0 %v4157
        %4690 = vmatprep.subr.bf16.mxu0 %v4155
        %4691 = vmatpush2.bf16.msra.mxu0 %v4154
        %4692 = vmatprep.subr.bf16.mxu0 %v4152
        %4693 = vmatpush2.bf16.msra.mxu0 %v4151
        %4694 = vmatprep.subr.bf16.mxu0 %v4149
        %4695 = vmatpush2.bf16.msra.mxu0 %v4148
        %4696 = vmatprep.subr.bf16.mxu0 %v4146
        %4697 = vmatpush2.bf16.msra.mxu0 %v4145
        %4698 = vmatprep.subr.bf16.mxu0 %v4143
        %4699 = vmatpush2.bf16.msra.mxu0 %v4142
        %4700 = vmatprep.subr.bf16.mxu0 %v4140
        %4701 = vmatpush2.bf16.msra.mxu0 %v4139
        %4702 = vmatprep.mubr.bf16.mxu0 %v2605
        %4703 = vmatmul.mubr.bf16.gmra.mxu0 %v2604
        %v4704 = vpop.f32.mrf.mxu0
        %v4705 = vadd.f32 %v4664, %v4704
        %v4706 = vpop.f32.mrf.mxu0
        %v4707 = vadd.f32 %v4666, %v4706
        %v4708 = vpop.f32.mrf.mxu0
        %v4709 = vpop.f32.mrf.mxu0
        %4710 = vdwg.mxu0
        %4711 = vmatprep.subr.bf16.mxu0 %v4185
        %4712 = vmatpush1.bf16.msra.mxu0 %v4184
        %4713 = vmatprep.subr.bf16.mxu0 %v4182
        %4714 = vmatpush1.bf16.msra.mxu0 %v4181
        %4715 = vmatprep.subr.bf16.mxu0 %v4179
        %4716 = vmatpush1.bf16.msra.mxu0 %v4178
        %4717 = vmatprep.subr.bf16.mxu0 %v4176
        %4718 = vmatpush1.bf16.msra.mxu0 %v4175
        %4719 = vmatprep.subr.bf16.mxu0 %v4173
        %4720 = vmatpush1.bf16.msra.mxu0 %v4172
        %4721 = vmatprep.subr.bf16.mxu0 %v4170
        %4722 = vmatpush1.bf16.msra.mxu0 %v4169
        %4723 = vmatprep.subr.bf16.mxu0 %v4167
        %4724 = vmatpush1.bf16.msra.mxu0 %v4166
        %4725 = vmatprep.subr.bf16.mxu0 %v4164
        %4726 = vmatpush1.bf16.msra.mxu0 %v4163
        %4727 = vmatprep.subr.bf16.mxu0 %v4209
        %4728 = vmatpush2.bf16.msra.mxu0 %v4208
        %4729 = vmatprep.subr.bf16.mxu0 %v4206
        %4730 = vmatpush2.bf16.msra.mxu0 %v4205
        %4731 = vmatprep.subr.bf16.mxu0 %v4203
        %4732 = vmatpush2.bf16.msra.mxu0 %v4202
        %4733 = vmatprep.subr.bf16.mxu0 %v4200
        %4734 = vmatpush2.bf16.msra.mxu0 %v4199
        %4735 = vmatprep.subr.bf16.mxu0 %v4197
        %4736 = vmatpush2.bf16.msra.mxu0 %v4196
        %4737 = vmatprep.subr.bf16.mxu0 %v4194
        %4738 = vmatpush2.bf16.msra.mxu0 %v4193
        %4739 = vmatprep.subr.bf16.mxu0 %v4191
        %4740 = vmatpush2.bf16.msra.mxu0 %v4190
        %4741 = vmatprep.subr.bf16.mxu0 %v4188
        %4742 = vmatpush2.bf16.msra.mxu0 %v4187
        %4743 = vmatprep.mubr.bf16.mxu0 %v2607
        %4744 = vmatmul.mubr.bf16.gmra.mxu0 %v2606
        %v4745 = vpop.f32.mrf.mxu0
        %v4746 = vadd.f32 %v4705, %v4745
        %v4747 = vpop.f32.mrf.mxu0
        %v4748 = vadd.f32 %v4707, %v4747
        %v4749 = vpop.f32.mrf.mxu0
        %v4750 = vpop.f32.mrf.mxu0
        %4751 = vdwg.mxu0
        %4752 = vmatprep.subr.bf16.mxu0 %v4233
        %4753 = vmatpush1.bf16.msra.mxu0 %v4232
        %4754 = vmatprep.subr.bf16.mxu0 %v4230
        %4755 = vmatpush1.bf16.msra.mxu0 %v4229
        %4756 = vmatprep.subr.bf16.mxu0 %v4227
        %4757 = vmatpush1.bf16.msra.mxu0 %v4226
        %4758 = vmatprep.subr.bf16.mxu0 %v4224
        %4759 = vmatpush1.bf16.msra.mxu0 %v4223
        %4760 = vmatprep.subr.bf16.mxu0 %v4221
        %4761 = vmatpush1.bf16.msra.mxu0 %v4220
        %4762 = vmatprep.subr.bf16.mxu0 %v4218
        %4763 = vmatpush1.bf16.msra.mxu0 %v4217
        %4764 = vmatprep.subr.bf16.mxu0 %v4215
        %4765 = vmatpush1.bf16.msra.mxu0 %v4214
        %4766 = vmatprep.subr.bf16.mxu0 %v4212
        %4767 = vmatpush1.bf16.msra.mxu0 %v4211
        %4768 = vmatprep.subr.bf16.mxu0 %v4257
        %4769 = vmatpush2.bf16.msra.mxu0 %v4256
        %4770 = vmatprep.subr.bf16.mxu0 %v4254
        %4771 = vmatpush2.bf16.msra.mxu0 %v4253
        %4772 = vmatprep.subr.bf16.mxu0 %v4251
        %4773 = vmatpush2.bf16.msra.mxu0 %v4250
        %4774 = vmatprep.subr.bf16.mxu0 %v4248
        %4775 = vmatpush2.bf16.msra.mxu0 %v4247
        %4776 = vmatprep.subr.bf16.mxu0 %v4245
        %4777 = vmatpush2.bf16.msra.mxu0 %v4244
        %4778 = vmatprep.subr.bf16.mxu0 %v4242
        %4779 = vmatpush2.bf16.msra.mxu0 %v4241
        %4780 = vmatprep.subr.bf16.mxu0 %v4239
        %4781 = vmatpush2.bf16.msra.mxu0 %v4238
        %4782 = vmatprep.subr.bf16.mxu0 %v4236
        %4783 = vmatpush2.bf16.msra.mxu0 %v4235
        %4784 = vmatprep.mubr.bf16.mxu0 %v2609
        %4785 = vmatmul.mubr.bf16.gmra.mxu0 %v2608
        %v4786 = vpop.f32.mrf.mxu0
        %v4787 = vadd.f32 %v4746, %v4786
        %v4788 = vpop.f32.mrf.mxu0
        %v4789 = vadd.f32 %v4748, %v4788
        %v4790 = vpop.f32.mrf.mxu0
        %v4791 = vpop.f32.mrf.mxu0
        %4792 = vdwg.mxu0
        %4793 = vmatprep.subr.bf16.mxu0 0
        %4794 = vmatpush1.bf16.msra.mxu0 %v3994
        %4795 = vmatprep.subr.bf16.mxu0 0
        %4796 = vmatpush1.bf16.msra.mxu0 %v3991
        %4797 = vmatprep.subr.bf16.mxu0 0
        %4798 = vmatpush1.bf16.msra.mxu0 %v3988
        %4799 = vmatprep.subr.bf16.mxu0 0
        %4800 = vmatpush1.bf16.msra.mxu0 %v3985
        %4801 = vmatprep.subr.bf16.mxu0 0
        %4802 = vmatpush1.bf16.msra.mxu0 %v3982
        %4803 = vmatprep.subr.bf16.mxu0 0
        %4804 = vmatpush1.bf16.msra.mxu0 %v3979
        %4805 = vmatprep.subr.bf16.mxu0 0
        %4806 = vmatpush1.bf16.msra.mxu0 %v3976
        %4807 = vmatprep.subr.bf16.mxu0 0
        %4808 = vmatpush1.bf16.msra.mxu0 %v3973
        %4809 = vmatprep.subr.bf16.mxu0 0
        %4810 = vmatpush2.bf16.msra.mxu0 %v4018
        %4811 = vmatprep.subr.bf16.mxu0 0
        %4812 = vmatpush2.bf16.msra.mxu0 %v4015
        %4813 = vmatprep.subr.bf16.mxu0 0
        %4814 = vmatpush2.bf16.msra.mxu0 %v4012
        %4815 = vmatprep.subr.bf16.mxu0 0
        %4816 = vmatpush2.bf16.msra.mxu0 %v4009
        %4817 = vmatprep.subr.bf16.mxu0 0
        %4818 = vmatpush2.bf16.msra.mxu0 %v4006
        %4819 = vmatprep.subr.bf16.mxu0 0
        %4820 = vmatpush2.bf16.msra.mxu0 %v4003
        %4821 = vmatprep.subr.bf16.mxu0 0
        %4822 = vmatpush2.bf16.msra.mxu0 %v4000
        %4823 = vmatprep.subr.bf16.mxu0 0
        %4824 = vmatpush2.bf16.msra.mxu0 %v3997
        %4825 = vmatprep.mubr.bf16.mxu0 %v2599
        %4826 = vmatmul.mubr.bf16.gmra.mxu0 %v2598
        %v4827 = vpop.f32.mrf.mxu0
        %v4828 = vadd.f32 %v3007, %v4827
        %v4829 = vpop.f32.mrf.mxu0
        %v4830 = vpop.f32.mrf.mxu0
        %v4831 = vpop.f32.mrf.mxu0
        %4832 = vdwg.mxu0
        %4833 = vmatprep.subr.bf16.mxu0 0
        %4834 = vmatpush1.bf16.msra.mxu0 %v4042
        %4835 = vmatprep.subr.bf16.mxu0 0
        %4836 = vmatpush1.bf16.msra.mxu0 %v4039
        %4837 = vmatprep.subr.bf16.mxu0 0
        %4838 = vmatpush1.bf16.msra.mxu0 %v4036
        %4839 = vmatprep.subr.bf16.mxu0 0
        %4840 = vmatpush1.bf16.msra.mxu0 %v4033
        %4841 = vmatprep.subr.bf16.mxu0 0
        %4842 = vmatpush1.bf16.msra.mxu0 %v4030
        %4843 = vmatprep.subr.bf16.mxu0 0
        %4844 = vmatpush1.bf16.msra.mxu0 %v4027
        %4845 = vmatprep.subr.bf16.mxu0 0
        %4846 = vmatpush1.bf16.msra.mxu0 %v4024
        %4847 = vmatprep.subr.bf16.mxu0 0
        %4848 = vmatpush1.bf16.msra.mxu0 %v4021
        %4849 = vmatprep.subr.bf16.mxu0 0
        %4850 = vmatpush2.bf16.msra.mxu0 %v4066
        %4851 = vmatprep.subr.bf16.mxu0 0
        %4852 = vmatpush2.bf16.msra.mxu0 %v4063
        %4853 = vmatprep.subr.bf16.mxu0 0
        %4854 = vmatpush2.bf16.msra.mxu0 %v4060
        %4855 = vmatprep.subr.bf16.mxu0 0
        %4856 = vmatpush2.bf16.msra.mxu0 %v4057
        %4857 = vmatprep.subr.bf16.mxu0 0
        %4858 = vmatpush2.bf16.msra.mxu0 %v4054
        %4859 = vmatprep.subr.bf16.mxu0 0
        %4860 = vmatpush2.bf16.msra.mxu0 %v4051
        %4861 = vmatprep.subr.bf16.mxu0 0
        %4862 = vmatpush2.bf16.msra.mxu0 %v4048
        %4863 = vmatprep.subr.bf16.mxu0 0
        %4864 = vmatpush2.bf16.msra.mxu0 %v4045
        %4865 = vmatprep.mubr.bf16.mxu0 %v2601
        %4866 = vmatmul.mubr.bf16.gmra.mxu0 %v2600
        %v4867 = vpop.f32.mrf.mxu0
        %v4868 = vadd.f32 %v4828, %v4867
        %v4869 = vpop.f32.mrf.mxu0
        %v4870 = vpop.f32.mrf.mxu0
        %v4871 = vpop.f32.mrf.mxu0
        %4872 = vdwg.mxu0
        %4873 = vmatprep.subr.bf16.mxu0 0
        %4874 = vmatpush1.bf16.msra.mxu0 %v4090
        %4875 = vmatprep.subr.bf16.mxu0 0
        %4876 = vmatpush1.bf16.msra.mxu0 %v4087
        %4877 = vmatprep.subr.bf16.mxu0 0
        %4878 = vmatpush1.bf16.msra.mxu0 %v4084
        %4879 = vmatprep.subr.bf16.mxu0 0
        %4880 = vmatpush1.bf16.msra.mxu0 %v4081
        %4881 = vmatprep.subr.bf16.mxu0 0
        %4882 = vmatpush1.bf16.msra.mxu0 %v4078
        %4883 = vmatprep.subr.bf16.mxu0 0
        %4884 = vmatpush1.bf16.msra.mxu0 %v4075
        %4885 = vmatprep.subr.bf16.mxu0 0
        %4886 = vmatpush1.bf16.msra.mxu0 %v4072
        %4887 = vmatprep.subr.bf16.mxu0 0
        %4888 = vmatpush1.bf16.msra.mxu0 %v4069
        %4889 = vmatprep.subr.bf16.mxu0 0
        %4890 = vmatpush2.bf16.msra.mxu0 %v4114
        %4891 = vmatprep.subr.bf16.mxu0 0
        %4892 = vmatpush2.bf16.msra.mxu0 %v4111
        %4893 = vmatprep.subr.bf16.mxu0 0
        %4894 = vmatpush2.bf16.msra.mxu0 %v4108
        %4895 = vmatprep.subr.bf16.mxu0 0
        %4896 = vmatpush2.bf16.msra.mxu0 %v4105
        %4897 = vmatprep.subr.bf16.mxu0 0
        %4898 = vmatpush2.bf16.msra.mxu0 %v4102
        %4899 = vmatprep.subr.bf16.mxu0 0
        %4900 = vmatpush2.bf16.msra.mxu0 %v4099
        %4901 = vmatprep.subr.bf16.mxu0 0
        %4902 = vmatpush2.bf16.msra.mxu0 %v4096
        %4903 = vmatprep.subr.bf16.mxu0 0
        %4904 = vmatpush2.bf16.msra.mxu0 %v4093
        %4905 = vmatprep.mubr.bf16.mxu0 %v2603
        %4906 = vmatmul.mubr.bf16.gmra.mxu0 %v2602
        %v4907 = vpop.f32.mrf.mxu0
        %v4908 = vadd.f32 %v4868, %v4907
        %v4909 = vpop.f32.mrf.mxu0
        %v4910 = vpop.f32.mrf.mxu0
        %v4911 = vpop.f32.mrf.mxu0
        %4912 = vdwg.mxu0
        %4913 = vmatprep.subr.bf16.mxu0 0
        %4914 = vmatpush1.bf16.msra.mxu0 %v4138
        %4915 = vmatprep.subr.bf16.mxu0 0
        %4916 = vmatpush1.bf16.msra.mxu0 %v4135
        %4917 = vmatprep.subr.bf16.mxu0 0
        %4918 = vmatpush1.bf16.msra.mxu0 %v4132
        %4919 = vmatprep.subr.bf16.mxu0 0
        %4920 = vmatpush1.bf16.msra.mxu0 %v4129
        %4921 = vmatprep.subr.bf16.mxu0 0
        %4922 = vmatpush1.bf16.msra.mxu0 %v4126
        %4923 = vmatprep.subr.bf16.mxu0 0
        %4924 = vmatpush1.bf16.msra.mxu0 %v4123
        %4925 = vmatprep.subr.bf16.mxu0 0
        %4926 = vmatpush1.bf16.msra.mxu0 %v4120
        %4927 = vmatprep.subr.bf16.mxu0 0
        %4928 = vmatpush1.bf16.msra.mxu0 %v4117
        %4929 = vmatprep.subr.bf16.mxu0 0
        %4930 = vmatpush2.bf16.msra.mxu0 %v4162
        %4931 = vmatprep.subr.bf16.mxu0 0
        %4932 = vmatpush2.bf16.msra.mxu0 %v4159
        %4933 = vmatprep.subr.bf16.mxu0 0
        %4934 = vmatpush2.bf16.msra.mxu0 %v4156
        %4935 = vmatprep.subr.bf16.mxu0 0
        %4936 = vmatpush2.bf16.msra.mxu0 %v4153
        %4937 = vmatprep.subr.bf16.mxu0 0
        %4938 = vmatpush2.bf16.msra.mxu0 %v4150
        %4939 = vmatprep.subr.bf16.mxu0 0
        %4940 = vmatpush2.bf16.msra.mxu0 %v4147
        %4941 = vmatprep.subr.bf16.mxu0 0
        %4942 = vmatpush2.bf16.msra.mxu0 %v4144
        %4943 = vmatprep.subr.bf16.mxu0 0
        %4944 = vmatpush2.bf16.msra.mxu0 %v4141
        %4945 = vmatprep.mubr.bf16.mxu0 %v2605
        %4946 = vmatmul.mubr.bf16.gmra.mxu0 %v2604
        %v4947 = vpop.f32.mrf.mxu0
        %v4948 = vadd.f32 %v4908, %v4947
        %v4949 = vpop.f32.mrf.mxu0
        %v4950 = vpop.f32.mrf.mxu0
        %v4951 = vpop.f32.mrf.mxu0
        %4952 = vdwg.mxu0
        %4953 = vmatprep.subr.bf16.mxu0 0
        %4954 = vmatpush1.bf16.msra.mxu0 %v4186
        %4955 = vmatprep.subr.bf16.mxu0 0
        %4956 = vmatpush1.bf16.msra.mxu0 %v4183
        %4957 = vmatprep.subr.bf16.mxu0 0
        %4958 = vmatpush1.bf16.msra.mxu0 %v4180
        %4959 = vmatprep.subr.bf16.mxu0 0
        %4960 = vmatpush1.bf16.msra.mxu0 %v4177
        %4961 = vmatprep.subr.bf16.mxu0 0
        %4962 = vmatpush1.bf16.msra.mxu0 %v4174
        %4963 = vmatprep.subr.bf16.mxu0 0
        %4964 = vmatpush1.bf16.msra.mxu0 %v4171
        %4965 = vmatprep.subr.bf16.mxu0 0
        %4966 = vmatpush1.bf16.msra.mxu0 %v4168
        %4967 = vmatprep.subr.bf16.mxu0 0
        %4968 = vmatpush1.bf16.msra.mxu0 %v4165
        %4969 = vmatprep.subr.bf16.mxu0 0
        %4970 = vmatpush2.bf16.msra.mxu0 %v4210
        %4971 = vmatprep.subr.bf16.mxu0 0
        %4972 = vmatpush2.bf16.msra.mxu0 %v4207
        %4973 = vmatprep.subr.bf16.mxu0 0
        %4974 = vmatpush2.bf16.msra.mxu0 %v4204
        %4975 = vmatprep.subr.bf16.mxu0 0
        %4976 = vmatpush2.bf16.msra.mxu0 %v4201
        %4977 = vmatprep.subr.bf16.mxu0 0
        %4978 = vmatpush2.bf16.msra.mxu0 %v4198
        %4979 = vmatprep.subr.bf16.mxu0 0
        %4980 = vmatpush2.bf16.msra.mxu0 %v4195
        %4981 = vmatprep.subr.bf16.mxu0 0
        %4982 = vmatpush2.bf16.msra.mxu0 %v4192
        %4983 = vmatprep.subr.bf16.mxu0 0
        %4984 = vmatpush2.bf16.msra.mxu0 %v4189
        %4985 = vmatprep.mubr.bf16.mxu0 %v2607
        %4986 = vmatmul.mubr.bf16.gmra.mxu0 %v2606
        %v4987 = vpop.f32.mrf.mxu0
        %v4988 = vadd.f32 %v4948, %v4987
        %v4989 = vpop.f32.mrf.mxu0
        %v4990 = vpop.f32.mrf.mxu0
        %v4991 = vpop.f32.mrf.mxu0
        %4992 = vdwg.mxu0
        %4993 = vmatprep.subr.bf16.mxu0 0
        %4994 = vmatpush1.bf16.msra.mxu0 %v4234
        %4995 = vmatprep.subr.bf16.mxu0 0
        %4996 = vmatpush1.bf16.msra.mxu0 %v4231
        %4997 = vmatprep.subr.bf16.mxu0 0
        %4998 = vmatpush1.bf16.msra.mxu0 %v4228
        %4999 = vmatprep.subr.bf16.mxu0 0
        %5000 = vmatpush1.bf16.msra.mxu0 %v4225
        %5001 = vmatprep.subr.bf16.mxu0 0
        %5002 = vmatpush1.bf16.msra.mxu0 %v4222
        %5003 = vmatprep.subr.bf16.mxu0 0
        %5004 = vmatpush1.bf16.msra.mxu0 %v4219
        %5005 = vmatprep.subr.bf16.mxu0 0
        %5006 = vmatpush1.bf16.msra.mxu0 %v4216
        %5007 = vmatprep.subr.bf16.mxu0 0
        %5008 = vmatpush1.bf16.msra.mxu0 %v4213
        %5009 = vmatprep.subr.bf16.mxu0 0
        %5010 = vmatpush2.bf16.msra.mxu0 %v4258
        %5011 = vmatprep.subr.bf16.mxu0 0
        %5012 = vmatpush2.bf16.msra.mxu0 %v4255
        %5013 = vmatprep.subr.bf16.mxu0 0
        %5014 = vmatpush2.bf16.msra.mxu0 %v4252
        %5015 = vmatprep.subr.bf16.mxu0 0
        %5016 = vmatpush2.bf16.msra.mxu0 %v4249
        %5017 = vmatprep.subr.bf16.mxu0 0
        %5018 = vmatpush2.bf16.msra.mxu0 %v4246
        %5019 = vmatprep.subr.bf16.mxu0 0
        %5020 = vmatpush2.bf16.msra.mxu0 %v4243
        %5021 = vmatprep.subr.bf16.mxu0 0
        %5022 = vmatpush2.bf16.msra.mxu0 %v4240
        %5023 = vmatprep.subr.bf16.mxu0 0
        %5024 = vmatpush2.bf16.msra.mxu0 %v4237
        %5025 = vmatprep.mubr.bf16.mxu0 %v2609
        %5026 = vmatmul.mubr.bf16.gmra.mxu0 %v2608
        %v5027 = vpop.f32.mrf.mxu0
        %v5028 = vadd.f32 %v4988, %v5027
        %v5029 = vpop.f32.mrf.mxu0
        %v5030 = vpop.f32.mrf.mxu0
        %v5031 = vpop.f32.mrf.mxu0
        %5032 = vdwg.mxu0
        %5033 = vst [vmem:[%s294] sm:$0xff] %v4787
        %5034 = vst [vmem:[%s294 + $0x8] sm:$0xff] %v4789
        %5035 = vst [vmem:[%s294 + $0x10] sm:$0xff] %v5028
        %s5036 = sand.u32 %s142, 1
        %s5037 = scalar_lea.sflag [#allocation4], %s5036
        %s5038 = sand.u32 %s142, 1
        %s5039 = smul.addr %s5038, 24
        %s5040 = scalar_lea.vmem [#allocation11], %s5039
        // Predicated region
        $region61: #{feed_forward.1} parent=39 // pred_check
          %p5041 = pneg %p152
        $region62: #{feed_forward.1} parent=39 // pred_check_branch
          %5043 = sbr.rel (%p5041) target = $region64
        $region63: #{feed_forward.1} parent=39 // pred_region
          %s5045 = ssub.s32 384, 384
          %5046 = vsyncadd %s5037, %s5045
          %s5047 = smul.addr %s24, 3
          %s5048 = smul.addr %s5047, 128
          %s5049 = scalar_lea.hbm %s5, %s5048
          %s5051 = sshll.u32 %s5040, 4
          %s5052 = int_to_ptr.vmem [resolvable:$true] %s5051
          %5054 = dma.vmem_to_hbm [thread:$0]  %s5052, 384, %s5049, %s5037
        $region64: #{feed_forward.1} parent=39 // pred_fallthru
          _
      $region40: #{feed_forward.1} parent=5 // pred_fallthru
        _
      %p5055 = scmp.le.s32.totalorder 2, %s19
      // Predicated region
      $region65: #{feed_forward.1} parent=5 // pred_check
        %p5056 = pneg %p5055
      $region66: #{feed_forward.1} parent=5 // pred_check_branch
        %5058 = sbr.rel (%p5056) target = $region68
      $region67: #{feed_forward.1} parent=5 // pred_region
        %s5059 = ssub.s32 %s19, 2
        // Predicated region
        $region69: #{feed_forward.1} parent=67 // pred_check
          %p5060 = pneg %p158
        $region70: #{feed_forward.1} parent=67 // pred_check_branch
          %5062 = sbr.rel (%p5060) target = $region72
        $region71: #{feed_forward.1} parent=67 // pred_region
          %s5063 = sand.u32 %s143, 1
          %s5064 = scalar_lea.sflag [#allocation4], %s5063
          %s5065 = sand.u32 %s143, 1
          %s5066 = smul.addr %s5065, 24
          %s5067 = scalar_lea.vmem [#allocation11], %s5066
          %5068 = dma.done %s5064, 384
        $region72: #{feed_forward.1} parent=67 // pred_fallthru
          _
      $region68: #{feed_forward.1} parent=5 // pred_fallthru
        _
    $region6: #{feed_forward.1} parent=1 // loop_footer
      %s23 = sadd.s32 1, %s19
    $region7: #{feed_forward.1} parent=1 // loop_footer_branch
      %18 = sbr.rel target = $region3
    $region8: #{feed_forward.1} parent=1 // loop_exit
      _
    %5069 = vsyncpa [#allocation3], 1
    %s5070 = scalar_lea.sflag [#allocation3], 1
    %5071 = vsyncpa %s5070, 1
    %5072 = vsyncpa [#allocation6], 1
    %5073 = vsyncpa [#allocation9], 1
    %5074 = vsyncpa [#allocation4], 1
    %s5075 = scalar_lea.sflag [#allocation4], 1
    %5076 = vsyncpa %s5075, 1

</llo_original>
